<compile_context>
chip_gen: v5e
topology: v5e:2x2
jax: 0.10.0
libtpu: 0.0.40
codegen_flags: <defaults>
</compile_context>

<pallas_src>
import functools

import jax
import jax.numpy as jnp
from jax.experimental import pallas as pl
from jax.experimental.pallas import tpu as pltpu


# ---------------------------------------------------------------------------
# Pallas kernel (one target-node tile per grid step)
# ---------------------------------------------------------------------------
def gatv2_layer_kernel(x_all_ref, x_t_ref, adj_ref, wl_ref, bl_ref,
                       wrs_ref, brs_ref, satt_ref, rep_ref, bias_ref,
                       out_ref, *, heads, out_ch):
    """Dense GATv2 layer, one tile of target nodes per invocation.

    x_all_ref : [N, F]       all node features (source side)
    x_t_ref   : [T, F]       this tile's node features (target side)
    adj_ref   : [T, N]       adjacency mask, adj[tgt, src] in {0, 1}
    wl_ref    : [F, HC]      lin_l weight (source projection), transposed
    bl_ref    : [1, HC]      lin_l bias
    wrs_ref   : [F, 2*HC]    fused [lin_r | skip] weights, transposed
    brs_ref   : [1, 2*HC]    fused [lin_r bias | 0]
    satt_ref  : [HC, H]      block-diagonal attention selector: S[h*C+c, h] = att[h, c]
    rep_ref   : [H, HC]      head->channel replication: R[h, h*C+c] = 1
    bias_ref  : [1, HC]      GATv2Conv output bias (concat=True)
    out_ref   : [T, HC]      output tile
    """
    n_src = x_all_ref.shape[0]
    n_tgt = x_t_ref.shape[0]
    hc = heads * out_ch

    x_all = x_all_ref[...]                       # [N, F]
    x_t = x_t_ref[...]                           # [T, F]
    adj = adj_ref[...]                           # [T, N] 0/1 float

    # ---- fused projections: 2 MXU matmuls instead of 3 ----
    xl = jnp.dot(x_all, wl_ref[...],
                 preferred_element_type=jnp.float32) + bl_ref[...]          # [N, HC]
    proj_t = jnp.dot(x_t, wrs_ref[...],
                     preferred_element_type=jnp.float32) + brs_ref[...]     # [T, 2*HC]
    xr_t = proj_t[:, :hc]                        # [T, HC] target-transformed
    skip_t = proj_t[:, hc:]                      # [T, HC] skip connection

    # ---- attention logits, all heads at once, lane-dense over HC = 128 ----
    mask_bias = jnp.where(adj > 0.0, 0.0, -1e30)                            # [T, N]
    g = xr_t[:, None, :] + xl[None, :, :]                                   # [T, N, HC]
    g = jnp.where(g >= 0.0, g, 0.2 * g)          # GATv2 leaky_relu (slope 0.2)
    # e[t, j, h] = sum_c g[t, j, h*C+c] * att[h, c]  -> one MXU reduce.
    e = jnp.dot(g.reshape(n_tgt * n_src, hc), satt_ref[...],
                preferred_element_type=jnp.float32)
    e = e.reshape(n_tgt, n_src, heads) + mask_bias[:, :, None]              # [T, N, H]

    # ---- masked softmax over source nodes (axis=1), all heads at once ----
    m = jnp.max(e, axis=1, keepdims=True)                                   # [T, 1, H]
    p = jnp.exp(e - m) * adj[:, :, None]         # zero out non-edges (adj is 0/1)
    denom = jnp.sum(p, axis=1, keepdims=True)                               # [T, 1, H]
    alpha = p * pl.reciprocal(denom, approx=True)                           # [T, N, H]

    # ---- aggregation: out[t, h*C+c] = sum_j alpha[t, j, h] * xl[j, h*C+c] ----
    alpha_exp = jnp.dot(alpha.reshape(n_tgt * n_src, heads), rep_ref[...],
                        preferred_element_type=jnp.float32)                 # [T*N, HC]
    alpha_exp = alpha_exp.reshape(n_tgt, n_src, hc)
    agg = jnp.sum(alpha_exp * xl[None, :, :], axis=1)                       # [T, HC]

    # ---- epilogue once on the assembled lane-dense [T, 128] block ----
    out = agg + bias_ref[...]
    out = jnp.where(out >= 0.0, out, 0.01 * out)  # GATLayer post leaky_relu (0.01)
    out = out + skip_t
    out_ref[...] = out                            # single unmasked 128-wide store


# ---------------------------------------------------------------------------
# Wrapper
# ---------------------------------------------------------------------------
def gat_layer_forward(x, adj, params, *, heads, out_ch, tgt_tile=None):
    n, f_in = x.shape
    hc = heads * out_ch
    if tgt_tile is None:
        tgt_tile = min(n, 128)
    assert n % tgt_tile == 0 and tgt_tile % 8 == 0, "tgt_tile must divide N, multiple of 8"
    # TODO(synk): for graphs whose source projections don't fit VMEM, add a second
    # ("arbitrary") grid axis streaming source tiles with a flash-style online softmax.

    # ---- one-time parameter prep (plain JAX glue) ----
    w_rs = jnp.concatenate([params["W_r"], params["W_skip"]], axis=1)            # [F, 2*HC]
    b_rs = jnp.concatenate(
        [params["b_r"], jnp.zeros((1, hc), params["b_r"].dtype)], axis=1)        # [1, 2*HC]
    eye_h = jnp.eye(heads, dtype=x.dtype)
    # block-diagonal attention selector: S[h*C+c, h'] = att[h, c] * delta(h, h')
    s_att = (params["att"][:, :, None] * eye_h[:, None, :]).reshape(hc, heads)   # [HC, H]
    # head -> channel replication matrix: R[h, h'*C+c] = delta(h, h')
    rep = jnp.repeat(eye_h, out_ch, axis=1)                                      # [H, HC]

    kernel = functools.partial(gatv2_layer_kernel, heads=heads, out_ch=out_ch)

    def full_spec(a):
        return pl.BlockSpec(a.shape, lambda i: (0,) * a.ndim)

    return pl.pallas_call(
        kernel,
        out_shape=jax.ShapeDtypeStruct((n, hc), jnp.float32),
        grid=(n // tgt_tile,),
        in_specs=[
            pl.BlockSpec((n, f_in), lambda i: (0, 0)),         # x: all source rows
            pl.BlockSpec((tgt_tile, f_in), lambda i: (i, 0)),  # x: this target tile
            pl.BlockSpec((tgt_tile, n), lambda i: (i, 0)),     # adjacency rows of tile
            full_spec(params["W_l"]),
            full_spec(params["b_l"]),
            full_spec(w_rs),
            full_spec(b_rs),
            full_spec(s_att),
            full_spec(rep),
            full_spec(params["bias"]),
        ],
        out_specs=pl.BlockSpec((tgt_tile, hc), lambda i: (i, 0)),
        compiler_params=pltpu.CompilerParams(
            dimension_semantics=("parallel",)),
    )(x, x, adj, params["W_l"], params["b_l"], w_rs, b_rs, s_att, rep,
      params["bias"])


# ---------------------------------------------------------------------------
# Pure-JAX reference (exact math, outside Pallas) for verification
# ---------------------------------------------------------------------------
def gat_layer_reference(x, adj, params, *, heads, out_ch):
    n = x.shape[0]
    xl = (x @ params["W_l"] + params["b_l"]).reshape(n, heads, out_ch)
    xr = (x @ params["W_r"] + params["b_r"]).reshape(n, heads, out_ch)
    g = xr[:, None, :, :] + xl[None, :, :, :]          # [tgt, src, H, C]
    g = jnp.where(g >= 0.0, g, 0.2 * g)
    e = jnp.einsum("ijhc,hc->ijh", g, params["att"])   # [tgt, src, H]
    mask = (adj > 0.0)[:, :, None]
    e = jnp.where(mask, e, -1e30)
    e = e - e.max(axis=1, keepdims=True)
    p = jnp.exp(e) * mask
    alpha = p / p.sum(axis=1, keepdims=True)
    out = jnp.einsum("ijh,jhc->ihc", alpha, xl).reshape(n, heads * out_ch)
    out = out + params["bias"]
    out = jnp.where(out >= 0.0, out, 0.01 * out)
    out = out + x @ params["W_skip"]
    return out


# ---------------------------------------------------------------------------
# Main
# ---------------------------------------------------------------------------
if __name__ == "__main__":
    N = 32          # nodes
    F_IN = 32       # in_channels
    OUT = 16        # out_channels (per head)
    HEADS = 8       # heads; concat=True -> output dim = HEADS*OUT = 128
    TGT_TILE = 16   # target-node tile -> grid of 2 "parallel" steps

    key = jax.random.PRNGKey(0)
    kx, ks, kd, k1, k2, k3, k4, k5 = jax.random.split(key, 8)

    # Node features.
    x = jax.random.normal(kx, (N, F_IN), dtype=jnp.float32)

    # Deterministic edge_index: a ring plus random extra edges (src=row0, tgt=row1).
    ring_src = jnp.arange(N, dtype=jnp.int32)
    ring_dst = (ring_src + 1) % N
    rnd_src = jax.random.randint(ks, (N,), 0, N, dtype=jnp.int32)
    rnd_dst = jax.random.randint(kd, (N,), 0, N, dtype=jnp.int32)
    edge_index = jnp.stack([jnp.concatenate([ring_src, rnd_src]),
                            jnp.concatenate([ring_dst, rnd_dst])])   # [2, 64]
    edge_attr = None  # edge_dim=None -> edge_attr is ignored by the layer.

    # Dense adjacency mask [target, source] + self loops (add_self_loops=True).
    adj = jnp.zeros((N, N), dtype=jnp.float32)
    adj = adj.at[edge_index[1], edge_index[0]].set(1.0)
    adj = adj.at[jnp.arange(N), jnp.arange(N)].set(1.0)

    # Deterministic parameters (glorot-ish scaling).
    s_in = 1.0 / jnp.sqrt(jnp.float32(F_IN))
    s_att = 1.0 / jnp.sqrt(jnp.float32(OUT))
    params = {
        "W_l":    jax.random.normal(k1, (F_IN, HEADS * OUT), jnp.float32) * s_in,
        "b_l":    jnp.zeros((1, HEADS * OUT), jnp.float32),
        "W_r":    jax.random.normal(k2, (F_IN, HEADS * OUT), jnp.float32) * s_in,
        "b_r":    jnp.zeros((1, HEADS * OUT), jnp.float32),
        "att":    jax.random.normal(k3, (HEADS, OUT), jnp.float32) * s_att,
        "bias":   jax.random.normal(k4, (1, HEADS * OUT), jnp.float32) * 0.1,
        "W_skip": jax.random.normal(k5, (F_IN, HEADS * OUT), jnp.float32) * s_in,
    }

    out = gat_layer_forward(x, adj, params, heads=HEADS, out_ch=OUT, tgt_tile=TGT_TILE)
    out = jax.block_until_ready(out)

    ref = gat_layer_reference(x, adj, params, heads=HEADS, out_ch=OUT)
    assert out.shape == (N, HEADS * OUT)
    # approx reciprocal in the softmax denominator -> slightly looser tolerance
    assert jnp.allclose(out, ref, rtol=5e-3, atol=5e-3), "mismatch vs reference"

    # GATLayer.forward returns (x, edge_index, edge_attr); `out` is the node-feature part.
    print("KERNEL_OK")
</pallas_src>

<mosaic_0001>
module attributes {stable_mosaic.version = 11 : i64} {
  func.func @gatv2_layer_kernel(%arg0: i32, %arg1: memref<32x32xf32, #tpu.memory_space<vmem>>, %arg2: memref<16x32xf32, #tpu.memory_space<vmem>>, %arg3: memref<16x32xf32, #tpu.memory_space<vmem>>, %arg4: memref<32x128xf32, #tpu.memory_space<vmem>>, %arg5: memref<1x128xf32, #tpu.memory_space<vmem>>, %arg6: memref<32x256xf32, #tpu.memory_space<vmem>>, %arg7: memref<1x256xf32, #tpu.memory_space<vmem>>, %arg8: memref<128x8xf32, #tpu.memory_space<vmem>>, %arg9: memref<8x128xf32, #tpu.memory_space<vmem>>, %arg10: memref<1x128xf32, #tpu.memory_space<vmem>>, %arg11: memref<16x128xf32, #tpu.memory_space<vmem>>) attributes {dimension_semantics = [#tpu.dimension_semantics<parallel>], iteration_bounds = array<i64: 2>, scalar_prefetch = 0 : i64, scratch_operands = 0 : i64, tpu.core_type = #tpu.core_type<tc>, window_params = [{pipeline_mode = #tpu.pipeline_mode<synchronous>, transform_indices = @transform_0, window_bounds = array<i64: 32, 32>}, {transform_indices = @transform_1, window_bounds = array<i64: 16, 32>}, {transform_indices = @transform_2, window_bounds = array<i64: 16, 32>}, {pipeline_mode = #tpu.pipeline_mode<synchronous>, transform_indices = @transform_3, window_bounds = array<i64: 32, 128>}, {pipeline_mode = #tpu.pipeline_mode<synchronous>, transform_indices = @transform_4, window_bounds = array<i64: 1, 128>}, {pipeline_mode = #tpu.pipeline_mode<synchronous>, transform_indices = @transform_5, window_bounds = array<i64: 32, 256>}, {pipeline_mode = #tpu.pipeline_mode<synchronous>, transform_indices = @transform_6, window_bounds = array<i64: 1, 256>}, {pipeline_mode = #tpu.pipeline_mode<synchronous>, transform_indices = @transform_7, window_bounds = array<i64: 128, 8>}, {pipeline_mode = #tpu.pipeline_mode<synchronous>, transform_indices = @transform_8, window_bounds = array<i64: 8, 128>}, {pipeline_mode = #tpu.pipeline_mode<synchronous>, transform_indices = @transform_9, window_bounds = array<i64: 1, 128>}, {transform_indices = @transform_10, window_bounds = array<i64: 16, 128>}]} {
    %c0 = arith.constant 0 : index
    %c0_0 = arith.constant 0 : index
    %0 = vector.load %arg1[%c0, %c0_0] : memref<32x32xf32, #tpu.memory_space<vmem>>, vector<32x32xf32>
    %c0_1 = arith.constant 0 : index
    %c0_2 = arith.constant 0 : index
    %1 = vector.load %arg2[%c0_1, %c0_2] : memref<16x32xf32, #tpu.memory_space<vmem>>, vector<16x32xf32>
    %c0_3 = arith.constant 0 : index
    %c0_4 = arith.constant 0 : index
    %2 = vector.load %arg3[%c0_3, %c0_4] : memref<16x32xf32, #tpu.memory_space<vmem>>, vector<16x32xf32>
    %c0_5 = arith.constant 0 : index
    %c0_6 = arith.constant 0 : index
    %3 = vector.load %arg4[%c0_5, %c0_6] : memref<32x128xf32, #tpu.memory_space<vmem>>, vector<32x128xf32>
    %cst = arith.constant dense<0.000000e+00> : vector<32x128xf32>
    %4 = tpu.matmul %0, %3, %cst {dimension_numbers = #tpu.dot_dimension_numbers<[1], [0], [0], [1], [0, 0, 1, 1], [], []>} : vector<32x32xf32>, vector<32x128xf32>, vector<32x128xf32> -> vector<32x128xf32>
    %c0_7 = arith.constant 0 : index
    %c0_8 = arith.constant 0 : index
    %5 = vector.load %arg5[%c0_7, %c0_8] : memref<1x128xf32, #tpu.memory_space<vmem>>, vector<1x128xf32>
    %6 = vector.broadcast %5 : vector<1x128xf32> to vector<32x128xf32>
    %7 = arith.addf %4, %6 : vector<32x128xf32>
    %c0_9 = arith.constant 0 : index
    %c0_10 = arith.constant 0 : index
    %8 = vector.load %arg6[%c0_9, %c0_10] : memref<32x256xf32, #tpu.memory_space<vmem>>, vector<32x256xf32>
    %cst_11 = arith.constant dense<0.000000e+00> : vector<16x256xf32>
    %9 = tpu.matmul %1, %8, %cst_11 {dimension_numbers = #tpu.dot_dimension_numbers<[1], [0], [0], [1], [0, 0, 1, 1], [], []>} : vector<16x32xf32>, vector<32x256xf32>, vector<16x256xf32> -> vector<16x256xf32>
    %c0_12 = arith.constant 0 : index
    %c0_13 = arith.constant 0 : index
    %10 = vector.load %arg7[%c0_12, %c0_13] : memref<1x256xf32, #tpu.memory_space<vmem>>, vector<1x256xf32>
    %11 = vector.broadcast %10 : vector<1x256xf32> to vector<16x256xf32>
    %12 = arith.addf %9, %11 : vector<16x256xf32>
    %13 = vector.extract_strided_slice %12 {offsets = [0, 0], sizes = [16, 128], strides = [1, 1]} : vector<16x256xf32> to vector<16x128xf32>
    %14 = vector.extract_strided_slice %12 {offsets = [0, 128], sizes = [16, 128], strides = [1, 1]} : vector<16x256xf32> to vector<16x128xf32>
    %cst_14 = arith.constant 0.000000e+00 : f32
    %15 = vector.broadcast %cst_14 : f32 to vector<16x32xf32>
    %16 = arith.cmpf ogt, %2, %15 : vector<16x32xf32>
    %cst_15 = arith.constant 0.000000e+00 : f32
    %cst_16 = arith.constant -1.000000e+30 : f32
    %17 = vector.broadcast %cst_15 : f32 to vector<16x32xf32>
    %18 = vector.broadcast %cst_16 : f32 to vector<16x32xf32>
    %19 = arith.select %16, %17, %18 : vector<16x32xi1>, vector<16x32xf32>
    %20 = vector.shape_cast %13 : vector<16x128xf32> to vector<16x1x128xf32>
    %21 = vector.shape_cast %7 : vector<32x128xf32> to vector<1x32x128xf32>
    %22 = vector.broadcast %20 : vector<16x1x128xf32> to vector<16x32x128xf32>
    %23 = vector.broadcast %21 : vector<1x32x128xf32> to vector<16x32x128xf32>
    %24 = arith.addf %22, %23 : vector<16x32x128xf32>
    %cst_17 = arith.constant 0.000000e+00 : f32
    %25 = vector.broadcast %cst_17 : f32 to vector<16x32x128xf32>
    %26 = arith.cmpf oge, %24, %25 : vector<16x32x128xf32>
    %cst_18 = arith.constant 2.000000e-01 : f32
    %27 = vector.broadcast %cst_18 : f32 to vector<16x32x128xf32>
    %28 = arith.mulf %27, %24 : vector<16x32x128xf32>
    %29 = arith.select %26, %24, %28 : vector<16x32x128xi1>, vector<16x32x128xf32>
    %30 = vector.shape_cast %29 : vector<16x32x128xf32> to vector<512x128xf32>
    %c0_19 = arith.constant 0 : index
    %c0_20 = arith.constant 0 : index
    %31 = vector.load %arg8[%c0_19, %c0_20] : memref<128x8xf32, #tpu.memory_space<vmem>>, vector<128x8xf32>
    %cst_21 = arith.constant dense<0.000000e+00> : vector<512x8xf32>
    %32 = tpu.matmul %30, %31, %cst_21 {dimension_numbers = #tpu.dot_dimension_numbers<[1], [0], [0], [1], [0, 0, 1, 1], [], []>} : vector<512x128xf32>, vector<128x8xf32>, vector<512x8xf32> -> vector<512x8xf32>
    %33 = vector.shape_cast %32 : vector<512x8xf32> to vector<16x32x8xf32>
    %34 = vector.shape_cast %19 : vector<16x32xf32> to vector<16x32x1xf32>
    %35 = vector.broadcast %34 : vector<16x32x1xf32> to vector<16x32x8xf32>
    %36 = arith.addf %33, %35 : vector<16x32x8xf32>
    %cst_22 = arith.constant dense<0xFF800000> : vector<16x8xf32>
    %37 = vector.multi_reduction <maximumf>, %36, %cst_22 [1] : vector<16x32x8xf32> to vector<16x8xf32>
    %38 = vector.shape_cast %37 : vector<16x8xf32> to vector<16x1x8xf32>
    %39 = vector.broadcast %38 : vector<16x1x8xf32> to vector<16x32x8xf32>
    %40 = arith.subf %36, %39 : vector<16x32x8xf32>
    %41 = math.exp %40 : vector<16x32x8xf32>
    %42 = vector.shape_cast %2 : vector<16x32xf32> to vector<16x32x1xf32>
    %43 = vector.broadcast %42 : vector<16x32x1xf32> to vector<16x32x8xf32>
    %44 = arith.mulf %41, %43 : vector<16x32x8xf32>
    %cst_23 = arith.constant dense<0.000000e+00> : vector<16x8xf32>
    %45 = vector.multi_reduction <add>, %44, %cst_23 [1] : vector<16x32x8xf32> to vector<16x8xf32>
    %46 = vector.shape_cast %45 : vector<16x8xf32> to vector<16x1x8xf32>
    %47 = tpu.reciprocal %46 {approx = true} : vector<16x1x8xf32> -> vector<16x1x8xf32>
    %48 = vector.broadcast %47 : vector<16x1x8xf32> to vector<16x32x8xf32>
    %49 = arith.mulf %44, %48 : vector<16x32x8xf32>
    %50 = vector.shape_cast %49 : vector<16x32x8xf32> to vector<512x8xf32>
    %c0_24 = arith.constant 0 : index
    %c0_25 = arith.constant 0 : index
    %51 = vector.load %arg9[%c0_24, %c0_25] : memref<8x128xf32, #tpu.memory_space<vmem>>, vector<8x128xf32>
    %cst_26 = arith.constant dense<0.000000e+00> : vector<512x128xf32>
    %52 = tpu.matmul %50, %51, %cst_26 {dimension_numbers = #tpu.dot_dimension_numbers<[1], [0], [0], [1], [0, 0, 1, 1], [], []>} : vector<512x8xf32>, vector<8x128xf32>, vector<512x128xf32> -> vector<512x128xf32>
    %53 = vector.shape_cast %52 : vector<512x128xf32> to vector<16x32x128xf32>
    %54 = vector.shape_cast %7 : vector<32x128xf32> to vector<1x32x128xf32>
    %55 = vector.broadcast %54 : vector<1x32x128xf32> to vector<16x32x128xf32>
    %56 = arith.mulf %53, %55 : vector<16x32x128xf32>
    %cst_27 = arith.constant dense<0.000000e+00> : vector<16x128xf32>
    %57 = vector.multi_reduction <add>, %56, %cst_27 [1] : vector<16x32x128xf32> to vector<16x128xf32>
    %c0_28 = arith.constant 0 : index
    %c0_29 = arith.constant 0 : index
    %58 = vector.load %arg10[%c0_28, %c0_29] : memref<1x128xf32, #tpu.memory_space<vmem>>, vector<1x128xf32>
    %59 = vector.broadcast %58 : vector<1x128xf32> to vector<16x128xf32>
    %60 = arith.addf %57, %59 : vector<16x128xf32>
    %cst_30 = arith.constant 0.000000e+00 : f32
    %61 = vector.broadcast %cst_30 : f32 to vector<16x128xf32>
    %62 = arith.cmpf oge, %60, %61 : vector<16x128xf32>
    %cst_31 = arith.constant 0.00999999977 : f32
    %63 = vector.broadcast %cst_31 : f32 to vector<16x128xf32>
    %64 = arith.mulf %63, %60 : vector<16x128xf32>
    %65 = arith.select %62, %60, %64 : vector<16x128xi1>, vector<16x128xf32>
    %66 = arith.addf %65, %14 : vector<16x128xf32>
    %c0_32 = arith.constant 0 : index
    %c0_33 = arith.constant 0 : index
    %67 = vector.load %arg11[%c0_32, %c0_33] : memref<16x128xf32, #tpu.memory_space<vmem>>, vector<16x128xf32>
    tpu.vector_store %arg11[%c0_32, %c0_33], %66 {strides = array<i32>} : memref<16x128xf32, #tpu.memory_space<vmem>>, vector<16x128xf32>,
    return
  }
  func.func @transform_0(%arg0: i32) -> (i32, i32) {
    %c0_i32 = arith.constant 0 : i32
    %c0_i32_0 = arith.constant 0 : i32
    %c0_i32_1 = arith.constant 0 : i32
    return %c0_i32, %c0_i32_0 : i32, i32
  }
  func.func @transform_1(%arg0: i32) -> (i32, i32) {
    %c0_i32 = arith.constant 0 : i32
    %c0_i32_0 = arith.constant 0 : i32
    return %arg0, %c0_i32 : i32, i32
  }
  func.func @transform_2(%arg0: i32) -> (i32, i32) {
    %c0_i32 = arith.constant 0 : i32
    %c0_i32_0 = arith.constant 0 : i32
    return %arg0, %c0_i32 : i32, i32
  }
  func.func @transform_3(%arg0: i32) -> (i32, i32) {
    %c0_i32 = arith.constant 0 : i32
    %c0_i32_0 = arith.constant 0 : i32
    %c0_i32_1 = arith.constant 0 : i32
    return %c0_i32, %c0_i32_0 : i32, i32
  }
  func.func @transform_4(%arg0: i32) -> (i32, i32) {
    %c0_i32 = arith.constant 0 : i32
    %c0_i32_0 = arith.constant 0 : i32
    %c0_i32_1 = arith.constant 0 : i32
    return %c0_i32, %c0_i32_0 : i32, i32
  }
  func.func @transform_5(%arg0: i32) -> (i32, i32) {
    %c0_i32 = arith.constant 0 : i32
    %c0_i32_0 = arith.constant 0 : i32
    %c0_i32_1 = arith.constant 0 : i32
    return %c0_i32, %c0_i32_0 : i32, i32
  }
  func.func @transform_6(%arg0: i32) -> (i32, i32) {
    %c0_i32 = arith.constant 0 : i32
    %c0_i32_0 = arith.constant 0 : i32
    %c0_i32_1 = arith.constant 0 : i32
    return %c0_i32, %c0_i32_0 : i32, i32
  }
  func.func @transform_7(%arg0: i32) -> (i32, i32) {
    %c0_i32 = arith.constant 0 : i32
    %c0_i32_0 = arith.constant 0 : i32
    %c0_i32_1 = arith.constant 0 : i32
    return %c0_i32, %c0_i32_0 : i32, i32
  }
  func.func @transform_8(%arg0: i32) -> (i32, i32) {
    %c0_i32 = arith.constant 0 : i32
    %c0_i32_0 = arith.constant 0 : i32
    %c0_i32_1 = arith.constant 0 : i32
    return %c0_i32, %c0_i32_0 : i32, i32
  }
  func.func @transform_9(%arg0: i32) -> (i32, i32) {
    %c0_i32 = arith.constant 0 : i32
    %c0_i32_0 = arith.constant 0 : i32
    %c0_i32_1 = arith.constant 0 : i32
    return %c0_i32, %c0_i32_0 : i32, i32
  }
  func.func @transform_10(%arg0: i32) -> (i32, i32) {
    %c0_i32 = arith.constant 0 : i32
    %c0_i32_0 = arith.constant 0 : i32
    return %arg0, %c0_i32 : i32, i32
  }
}

</mosaic_0001>

<llo_original>
// kernel: tpu_custom_call.1
$region0: #{tpu_custom_call.1}
  #allocation0 [shape = 'u32[]', space=smem, size = 0x4, offset = 0x4, fixed_abs, tag = 'smem constant byte address 0x4 - core index']
  #allocation1 [shape = 'u32[72,128]{1,0:T(1,128)}', space=vmem, size = 0x9000, scoped, tag = 'internal scratch']
  %s0 = inlined_call_operand.vmem [shape: f32[32,32], index: 0, kind: input, shape index: {}]
  %s1 = inlined_call_operand.vmem [shape: f32[32,32], index: 1, kind: input, shape index: {}]
  %s2 = inlined_call_operand.hbm [shape: f32[32,32], index: 2, kind: input, shape index: {}]
  %s3 = inlined_call_operand.hbm [shape: f32[32,128], index: 3, kind: input, shape index: {}]
  %s4 = inlined_call_operand.vmem [shape: f32[1,128], index: 4, kind: input, shape index: {}]
  %s5 = inlined_call_operand.vmem [shape: f32[32,256], index: 5, kind: input, shape index: {}]
  %s6 = inlined_call_operand.vmem [shape: f32[1,256], index: 6, kind: input, shape index: {}]
  %s7 = inlined_call_operand.vmem [shape: f32[128,8], index: 7, kind: input, shape index: {}]
  %s8 = inlined_call_operand.vmem [shape: f32[8,128], index: 8, kind: input, shape index: {}]
  %s9 = inlined_call_operand.vmem [shape: f32[1,128], index: 9, kind: input, shape index: {}]
  %s10 = inlined_call_operand.hbm [shape: f32[32,128], index: 10, kind: output, shape index: {}]
  %s11 = sld [smem:[#allocation0]]
  $region81: #{tpu_custom_call.1} parent=0
    _
  %s13 = ssub.s32 1, %s11
  %s14 = scalar_select 0, %s13, %s11
  $region1: #{tpu_custom_call.1} parent=0
    #allocation2 [shape = 'u8[16384]{0}', space=vmem, size = 0x4000, scoped, tag = 'input window, operand 2']
    #allocation3 [shape = 's32[2]{0}', space=sflag, size = 0x8, scoped, tag = 'scoped memory for tpu_custom_call.1']
    #allocation4 [shape = 's32[2]{0}', space=sflag, size = 0x8, scoped, tag = 'scoped memory for tpu_custom_call.1']
    #allocation5 [shape = 'u8[16384]{0}', space=vmem, size = 0x4000, scoped, tag = 'input window, operand 3, single buffered']
    #allocation6 [shape = 's32[1]{0}', space=sflag, size = 0x4, scoped, tag = 'scoped memory for tpu_custom_call.1']
    #allocation7 [shape = 'u8[16384]{0}', space=vmem, size = 0x4000, scoped, tag = 'output window, operand 0']
    %15 = vsyncpa [#allocation3], 0
    %s16 = scalar_lea.sflag [#allocation3], 1
    %17 = vsyncpa %s16, 0
    %18 = vsyncpa [#allocation6], 0
    %19 = vsyncpa [#allocation4], 0
    %s20 = scalar_lea.sflag [#allocation4], 1
    %21 = vsyncpa %s20, 0
    loop: start=0, step=1, limit=4
    $region2: #{tpu_custom_call.1} parent=1 // loop_pre_header
      _
    $region3: #{tpu_custom_call.1} parent=1 // loop_header
      %s23 = sphi 0, %s27
      %p24 = scmp.ge.s32.totalorder %s23, 4
      %s31 = sphi 0, %s31
      %s33 = sphi 0, %s31
      %s34 = sphi 0, %s33
      %s48 = sphi 0, %s34
      %s54 = sphi 0, %s56
      %s57 = sphi 0, %s54
      %s58 = sphi 0, %s57
      %s74 = sphi 0, %s58
      %s80 = sphi 0, %s82
      %s83 = sphi 0, %s80
      %s84 = sphi 0, %s83
      %s100 = sphi 0, %s84
      %s104 = sphi 0, %s104
      %s106 = sphi 0, %s104
      %s107 = sphi 0, %s106
      %s121 = sphi 0, %s107
      %s125 = sphi 0, %s125
      %s127 = sphi 0, %s125
      %s128 = sphi 0, %s127
      %s142 = sphi 0, %s128
      %s146 = sphi 0, %s146
      %s148 = sphi 0, %s146
      %s149 = sphi 0, %s148
      %s163 = sphi 0, %s149
      %s167 = sphi 0, %s167
      %s169 = sphi 0, %s167
      %s170 = sphi 0, %s169
      %s184 = sphi 0, %s170
      %s188 = sphi 0, %s188
      %s190 = sphi 0, %s188
      %s191 = sphi 0, %s190
      %s205 = sphi 0, %s191
      %s209 = sphi 0, %s209
      %s211 = sphi 0, %s209
      %s212 = sphi 0, %s211
      %s226 = sphi 0, %s212
      %s230 = sphi 0, %s230
      %s232 = sphi 0, %s230
      %s233 = sphi 0, %s232
      %s247 = sphi 0, %s233
      %s253 = sphi 0, %s255
      %s256 = sphi 0, %s253
      %s257 = sphi 0, %s256
      %s273 = sphi 0, %s257
    $region4: #{tpu_custom_call.1} parent=1 // loop_header_branch
      %26 = sbr.rel (%p24) target = $region8
    $region5: #{tpu_custom_call.1} parent=1 // loop_body
      %s28 = ssub.s32 %s23, 1
      %s29 = ssub.s32 %s23, 2
      %s30 = sadd.s32 %s23, 1
      %s32 = sadd.s32 %s31, 1
      %p35 = scmp.eq.s32.totalorder %s23, 1
      %p36 = scmp.ne.s32.totalorder %s31, %s33
      %p37 = scmp.eq.s32.totalorder %s23, 0
      %p38 = por %p36, %p37
      %p39 = scmp.ne.s32.totalorder %s31, %s33
      %p40 = scmp.eq.s32.totalorder %s28, 1
      %p41 = por %p39, %p40
      %p42 = scmp.ne.s32.totalorder %s33, %s34
      %p43 = scmp.eq.s32.totalorder %s28, 0
      %p44 = por %p42, %p43
      %p45 = scmp.ne.s32.totalorder %s33, %s34
      %p46 = scmp.eq.s32.totalorder %s29, 1
      %p47 = por %p45, %p46
      %p49 = scmp.ne.s32.totalorder %s34, %s48
      %p50 = scmp.eq.s32.totalorder %s29, 0
      %p51 = por %p49, %p50
      %s52 = ssub.s32 %s23, %s30
      %p53 = scmp.eq.s32.totalorder %s52, 0
      %s55 = sadd.s32 %s54, 1
      %s56 = scalar_select %p53, %s54, %s55
      %p59 = pneg %p53
      %p60 = scmp.eq.s32.totalorder %s23, 1
      %p61 = por %p59, %p60
      %p62 = scmp.ne.s32.totalorder %s54, %s57
      %p63 = scmp.eq.s32.totalorder %s23, 0
      %p64 = por %p62, %p63
      %p65 = scmp.ne.s32.totalorder %s54, %s57
      %p66 = scmp.eq.s32.totalorder %s28, 1
      %p67 = por %p65, %p66
      %p68 = scmp.ne.s32.totalorder %s57, %s58
      %p69 = scmp.eq.s32.totalorder %s28, 0
      %p70 = por %p68, %p69
      %p71 = scmp.ne.s32.totalorder %s57, %s58
      %p72 = scmp.eq.s32.totalorder %s29, 1
      %p73 = por %p71, %p72
      %p75 = scmp.ne.s32.totalorder %s58, %s74
      %p76 = scmp.eq.s32.totalorder %s29, 0
      %p77 = por %p75, %p76
      %s78 = ssub.s32 %s23, %s30
      %p79 = scmp.eq.s32.totalorder %s78, 0
      %s81 = sadd.s32 %s80, 1
      %s82 = scalar_select %p79, %s80, %s81
      %p85 = pneg %p79
      %p86 = scmp.eq.s32.totalorder %s23, 1
      %p87 = por %p85, %p86
      %p88 = scmp.ne.s32.totalorder %s80, %s83
      %p89 = scmp.eq.s32.totalorder %s23, 0
      %p90 = por %p88, %p89
      %p91 = scmp.ne.s32.totalorder %s80, %s83
      %p92 = scmp.eq.s32.totalorder %s28, 1
      %p93 = por %p91, %p92
      %p94 = scmp.ne.s32.totalorder %s83, %s84
      %p95 = scmp.eq.s32.totalorder %s28, 0
      %p96 = por %p94, %p95
      %p97 = scmp.ne.s32.totalorder %s83, %s84
      %p98 = scmp.eq.s32.totalorder %s29, 1
      %p99 = por %p97, %p98
      %p101 = scmp.ne.s32.totalorder %s84, %s100
      %p102 = scmp.eq.s32.totalorder %s29, 0
      %p103 = por %p101, %p102
      %s105 = sadd.s32 %s104, 1
      %p108 = scmp.eq.s32.totalorder %s23, 1
      %p109 = scmp.ne.s32.totalorder %s104, %s106
      %p110 = scmp.eq.s32.totalorder %s23, 0
      %p111 = por %p109, %p110
      %p112 = scmp.ne.s32.totalorder %s104, %s106
      %p113 = scmp.eq.s32.totalorder %s28, 1
      %p114 = por %p112, %p113
      %p115 = scmp.ne.s32.totalorder %s106, %s107
      %p116 = scmp.eq.s32.totalorder %s28, 0
      %p117 = por %p115, %p116
      %p118 = scmp.ne.s32.totalorder %s106, %s107
      %p119 = scmp.eq.s32.totalorder %s29, 1
      %p120 = por %p118, %p119
      %p122 = scmp.ne.s32.totalorder %s107, %s121
      %p123 = scmp.eq.s32.totalorder %s29, 0
      %p124 = por %p122, %p123
      %s126 = sadd.s32 %s125, 1
      %p129 = scmp.eq.s32.totalorder %s23, 1
      %p130 = scmp.ne.s32.totalorder %s125, %s127
      %p131 = scmp.eq.s32.totalorder %s23, 0
      %p132 = por %p130, %p131
      %p133 = scmp.ne.s32.totalorder %s125, %s127
      %p134 = scmp.eq.s32.totalorder %s28, 1
      %p135 = por %p133, %p134
      %p136 = scmp.ne.s32.totalorder %s127, %s128
      %p137 = scmp.eq.s32.totalorder %s28, 0
      %p138 = por %p136, %p137
      %p139 = scmp.ne.s32.totalorder %s127, %s128
      %p140 = scmp.eq.s32.totalorder %s29, 1
      %p141 = por %p139, %p140
      %p143 = scmp.ne.s32.totalorder %s128, %s142
      %p144 = scmp.eq.s32.totalorder %s29, 0
      %p145 = por %p143, %p144
      %s147 = sadd.s32 %s146, 1
      %p150 = scmp.eq.s32.totalorder %s23, 1
      %p151 = scmp.ne.s32.totalorder %s146, %s148
      %p152 = scmp.eq.s32.totalorder %s23, 0
      %p153 = por %p151, %p152
      %p154 = scmp.ne.s32.totalorder %s146, %s148
      %p155 = scmp.eq.s32.totalorder %s28, 1
      %p156 = por %p154, %p155
      %p157 = scmp.ne.s32.totalorder %s148, %s149
      %p158 = scmp.eq.s32.totalorder %s28, 0
      %p159 = por %p157, %p158
      %p160 = scmp.ne.s32.totalorder %s148, %s149
      %p161 = scmp.eq.s32.totalorder %s29, 1
      %p162 = por %p160, %p161
      %p164 = scmp.ne.s32.totalorder %s149, %s163
      %p165 = scmp.eq.s32.totalorder %s29, 0
      %p166 = por %p164, %p165
      %s168 = sadd.s32 %s167, 1
      %p171 = scmp.eq.s32.totalorder %s23, 1
      %p172 = scmp.ne.s32.totalorder %s167, %s169
      %p173 = scmp.eq.s32.totalorder %s23, 0
      %p174 = por %p172, %p173
      %p175 = scmp.ne.s32.totalorder %s167, %s169
      %p176 = scmp.eq.s32.totalorder %s28, 1
      %p177 = por %p175, %p176
      %p178 = scmp.ne.s32.totalorder %s169, %s170
      %p179 = scmp.eq.s32.totalorder %s28, 0
      %p180 = por %p178, %p179
      %p181 = scmp.ne.s32.totalorder %s169, %s170
      %p182 = scmp.eq.s32.totalorder %s29, 1
      %p183 = por %p181, %p182
      %p185 = scmp.ne.s32.totalorder %s170, %s184
      %p186 = scmp.eq.s32.totalorder %s29, 0
      %p187 = por %p185, %p186
      %s189 = sadd.s32 %s188, 1
      %p192 = scmp.eq.s32.totalorder %s23, 1
      %p193 = scmp.ne.s32.totalorder %s188, %s190
      %p194 = scmp.eq.s32.totalorder %s23, 0
      %p195 = por %p193, %p194
      %p196 = scmp.ne.s32.totalorder %s188, %s190
      %p197 = scmp.eq.s32.totalorder %s28, 1
      %p198 = por %p196, %p197
      %p199 = scmp.ne.s32.totalorder %s190, %s191
      %p200 = scmp.eq.s32.totalorder %s28, 0
      %p201 = por %p199, %p200
      %p202 = scmp.ne.s32.totalorder %s190, %s191
      %p203 = scmp.eq.s32.totalorder %s29, 1
      %p204 = por %p202, %p203
      %p206 = scmp.ne.s32.totalorder %s191, %s205
      %p207 = scmp.eq.s32.totalorder %s29, 0
      %p208 = por %p206, %p207
      %s210 = sadd.s32 %s209, 1
      %p213 = scmp.eq.s32.totalorder %s23, 1
      %p214 = scmp.ne.s32.totalorder %s209, %s211
      %p215 = scmp.eq.s32.totalorder %s23, 0
      %p216 = por %p214, %p215
      %p217 = scmp.ne.s32.totalorder %s209, %s211
      %p218 = scmp.eq.s32.totalorder %s28, 1
      %p219 = por %p217, %p218
      %p220 = scmp.ne.s32.totalorder %s211, %s212
      %p221 = scmp.eq.s32.totalorder %s28, 0
      %p222 = por %p220, %p221
      %p223 = scmp.ne.s32.totalorder %s211, %s212
      %p224 = scmp.eq.s32.totalorder %s29, 1
      %p225 = por %p223, %p224
      %p227 = scmp.ne.s32.totalorder %s212, %s226
      %p228 = scmp.eq.s32.totalorder %s29, 0
      %p229 = por %p227, %p228
      %s231 = sadd.s32 %s230, 1
      %p234 = scmp.eq.s32.totalorder %s23, 1
      %p235 = scmp.ne.s32.totalorder %s230, %s232
      %p236 = scmp.eq.s32.totalorder %s23, 0
      %p237 = por %p235, %p236
      %p238 = scmp.ne.s32.totalorder %s230, %s232
      %p239 = scmp.eq.s32.totalorder %s28, 1
      %p240 = por %p238, %p239
      %p241 = scmp.ne.s32.totalorder %s232, %s233
      %p242 = scmp.eq.s32.totalorder %s28, 0
      %p243 = por %p241, %p242
      %p244 = scmp.ne.s32.totalorder %s232, %s233
      %p245 = scmp.eq.s32.totalorder %s29, 1
      %p246 = por %p244, %p245
      %p248 = scmp.ne.s32.totalorder %s233, %s247
      %p249 = scmp.eq.s32.totalorder %s29, 0
      %p250 = por %p248, %p249
      %s251 = ssub.s32 %s23, %s30
      %p252 = scmp.eq.s32.totalorder %s251, 0
      %s254 = sadd.s32 %s253, 1
      %s255 = scalar_select %p252, %s253, %s254
      %p258 = pneg %p252
      %p259 = scmp.eq.s32.totalorder %s23, 1
      %p260 = por %p258, %p259
      %p261 = scmp.ne.s32.totalorder %s253, %s256
      %p262 = scmp.eq.s32.totalorder %s23, 0
      %p263 = por %p261, %p262
      %p264 = scmp.ne.s32.totalorder %s253, %s256
      %p265 = scmp.eq.s32.totalorder %s28, 1
      %p266 = por %p264, %p265
      %p267 = scmp.ne.s32.totalorder %s256, %s257
      %p268 = scmp.eq.s32.totalorder %s28, 0
      %p269 = por %p267, %p268
      %p270 = scmp.ne.s32.totalorder %s256, %s257
      %p271 = scmp.eq.s32.totalorder %s29, 1
      %p272 = por %p270, %p271
      %p274 = scmp.ne.s32.totalorder %s257, %s273
      %p275 = scmp.eq.s32.totalorder %s29, 0
      %p276 = por %p274, %p275
      %p277 = scmp.le.s32.totalorder 1, %s23
      %p278 = scmp.lt.s32.totalorder %s23, 3
      %p279 = pnand %p277, %p278
      %p280 = pneg %p279
      // Predicated region
      $region9: #{tpu_custom_call.1} parent=5 // pred_check
        _
      $region10: #{tpu_custom_call.1} parent=5 // pred_check_branch
        %282 = sbr.rel (%p279) target = $region12
      $region11: #{tpu_custom_call.1} parent=5 // pred_region
        %s283 = ssub.s32 %s23, 1
        // Predicated region
        $region13: #{tpu_custom_call.1} parent=11 // pred_check
          %p284 = pneg %p44
        $region14: #{tpu_custom_call.1} parent=11 // pred_check_branch
          %286 = sbr.rel (%p284) target = $region16
        $region15: #{tpu_custom_call.1} parent=11 // pred_region
          _
        $region16: #{tpu_custom_call.1} parent=11 // pred_fallthru
          _
        // Predicated region
        $region17: #{tpu_custom_call.1} parent=11 // pred_check
          %p287 = pneg %p117
        $region18: #{tpu_custom_call.1} parent=11 // pred_check_branch
          %289 = sbr.rel (%p287) target = $region20
        $region19: #{tpu_custom_call.1} parent=11 // pred_region
          %291 = vsyncadd [#allocation6], 0
          %s292 = sshll.u32 %s3, 4
          %s293 = int_to_ptr.hbm [resolvable:$true] %s292
          %s294 = sshll.u32 [#allocation5], 4
          %s295 = int_to_ptr.vmem [resolvable:$true] %s294
          %300 = dma.hbm_to_vmem [thread:$0]  %s293, 512, %s295, [#allocation6], 128, 128, 8
        $region20: #{tpu_custom_call.1} parent=11 // pred_fallthru
          _
        // Predicated region
        $region21: #{tpu_custom_call.1} parent=11 // pred_check
          %p301 = pneg %p138
        $region22: #{tpu_custom_call.1} parent=11 // pred_check_branch
          %303 = sbr.rel (%p301) target = $region24
        $region23: #{tpu_custom_call.1} parent=11 // pred_region
          _
        $region24: #{tpu_custom_call.1} parent=11 // pred_fallthru
          _
        // Predicated region
        $region25: #{tpu_custom_call.1} parent=11 // pred_check
          %p304 = pneg %p159
        $region26: #{tpu_custom_call.1} parent=11 // pred_check_branch
          %306 = sbr.rel (%p304) target = $region28
        $region27: #{tpu_custom_call.1} parent=11 // pred_region
          _
        $region28: #{tpu_custom_call.1} parent=11 // pred_fallthru
          _
        // Predicated region
        $region29: #{tpu_custom_call.1} parent=11 // pred_check
          %p307 = pneg %p180
        $region30: #{tpu_custom_call.1} parent=11 // pred_check_branch
          %309 = sbr.rel (%p307) target = $region32
        $region31: #{tpu_custom_call.1} parent=11 // pred_region
          _
        $region32: #{tpu_custom_call.1} parent=11 // pred_fallthru
          _
        // Predicated region
        $region33: #{tpu_custom_call.1} parent=11 // pred_check
          %p310 = pneg %p201
        $region34: #{tpu_custom_call.1} parent=11 // pred_check_branch
          %312 = sbr.rel (%p310) target = $region36
        $region35: #{tpu_custom_call.1} parent=11 // pred_region
          _
        $region36: #{tpu_custom_call.1} parent=11 // pred_fallthru
          _
        // Predicated region
        $region37: #{tpu_custom_call.1} parent=11 // pred_check
          %p313 = pneg %p222
        $region38: #{tpu_custom_call.1} parent=11 // pred_check_branch
          %315 = sbr.rel (%p313) target = $region40
        $region39: #{tpu_custom_call.1} parent=11 // pred_region
          _
        $region40: #{tpu_custom_call.1} parent=11 // pred_fallthru
          _
        // Predicated region
        $region41: #{tpu_custom_call.1} parent=11 // pred_check
          %p316 = pneg %p243
        $region42: #{tpu_custom_call.1} parent=11 // pred_check_branch
          %318 = sbr.rel (%p316) target = $region44
        $region43: #{tpu_custom_call.1} parent=11 // pred_region
          _
        $region44: #{tpu_custom_call.1} parent=11 // pred_fallthru
          _
      $region12: #{tpu_custom_call.1} parent=5 // pred_fallthru
        _
      %p319 = scmp.lt.s32.totalorder %s23, 2
      // Predicated region
      $region45: #{tpu_custom_call.1} parent=5 // pred_check
        %p320 = pneg %p319
      $region46: #{tpu_custom_call.1} parent=5 // pred_check_branch
        %322 = sbr.rel (%p320) target = $region48
      $region47: #{tpu_custom_call.1} parent=5 // pred_region
        // Predicated region
        $region49: #{tpu_custom_call.1} parent=47 // pred_check
          %p323 = pneg %p64
        $region50: #{tpu_custom_call.1} parent=47 // pred_check_branch
          %325 = sbr.rel (%p323) target = $region52
        $region51: #{tpu_custom_call.1} parent=47 // pred_region
          %s326 = smul.u32 2, %s23
          %p327 = scmp.lt.s32.totalorder %s326, 3
          %s328 = scalar_select %p327, %s326, 3
          %s329 = smul.addr %s328, 8
          %s330 = scalar_lea.vmem %s1, %s329
          %s331 = smul.u32 2, %s23
        $region52: #{tpu_custom_call.1} parent=47 // pred_fallthru
          _
        // Predicated region
        $region53: #{tpu_custom_call.1} parent=47 // pred_check
          %p332 = pneg %p90
        $region54: #{tpu_custom_call.1} parent=47 // pred_check_branch
          %334 = sbr.rel (%p332) target = $region56
        $region55: #{tpu_custom_call.1} parent=47 // pred_region
          %s335 = sand.u32 %s80, 1
          %s336 = scalar_lea.sflag [#allocation3], %s335
          %s337 = sand.u32 %s80, 1
          %s338 = smul.addr %s337, 16
          %s339 = scalar_lea.vmem [#allocation2], %s338
          %s340 = smul.u32 2, %s23
          %342 = vsyncadd %s336, 0
          %s343 = smul.addr %s340, 8
          %s344 = scalar_lea.hbm %s2, %s343
          %s345 = sshll.u32 %s344, 4
          %s346 = int_to_ptr.hbm [resolvable:$true] %s345
          %s347 = sshll.u32 %s339, 4
          %s348 = int_to_ptr.vmem [resolvable:$true] %s347
          %353 = dma.hbm_to_vmem [thread:$0]  %s346, 256, %s348, %s336, 128, 128, 8
        $region56: #{tpu_custom_call.1} parent=47 // pred_fallthru
          _
      $region48: #{tpu_custom_call.1} parent=5 // pred_fallthru
        _
      %p354 = scmp.le.s32.totalorder 1, %s23
      %p355 = scmp.lt.s32.totalorder %s23, 3
      %p356 = pnand %p354, %p355
      %p357 = pneg %p356
      // Predicated region
      $region57: #{tpu_custom_call.1} parent=5 // pred_check
        _
      $region58: #{tpu_custom_call.1} parent=5 // pred_check_branch
        %359 = sbr.rel (%p356) target = $region60
      $region59: #{tpu_custom_call.1} parent=5 // pred_region
        %s360 = ssub.s32 %s23, 1
        %s361 = sand.u32 %s83, 1
        %s362 = scalar_lea.sflag [#allocation3], %s361
        %s363 = sand.u32 %s83, 1
        %s364 = smul.addr %s363, 16
        %s365 = scalar_lea.vmem [#allocation2], %s364
        // Predicated region
        $region61: #{tpu_custom_call.1} parent=59 // pred_check
          %p366 = pneg %p96
        $region62: #{tpu_custom_call.1} parent=59 // pred_check_branch
          %368 = sbr.rel (%p366) target = $region64
        $region63: #{tpu_custom_call.1} parent=59 // pred_region
          %370 = dma.done %s362, 256
        $region64: #{tpu_custom_call.1} parent=59 // pred_fallthru
          _
        // Predicated region
        $region65: #{tpu_custom_call.1} parent=59 // pred_check
          %p371 = pneg %p117
        $region66: #{tpu_custom_call.1} parent=59 // pred_check_branch
          %373 = sbr.rel (%p371) target = $region68
        $region67: #{tpu_custom_call.1} parent=59 // pred_region
          %375 = dma.done [#allocation6], 512
        $region68: #{tpu_custom_call.1} parent=59 // pred_fallthru
          _
        %p376 = pneg %p44
        %p377 = pneg %p41
        %s378 = smul.u32 2, %s28
        %p379 = scmp.lt.s32.totalorder %s378, 3
        %s380 = scalar_select %p379, %s378, 3
        %s381 = smul.addr %s380, 8
        %s382 = scalar_lea.vmem %s1, %s381
        %p383 = pneg %p70
        %p384 = pneg %p67
        %s385 = sand.u32 %s83, 1
        %s386 = scalar_lea.sflag [#allocation3], %s385
        %s387 = sand.u32 %s83, 1
        %s388 = smul.addr %s387, 16
        %s389 = scalar_lea.vmem [#allocation2], %s388
        %p390 = pneg %p96
        %p391 = pneg %p93
        %p392 = pneg %p117
        %p393 = pneg %p114
        %p394 = pneg %p138
        %p395 = pneg %p135
        %p396 = pneg %p159
        %p397 = pneg %p156
        %p398 = pneg %p180
        %p399 = pneg %p177
        %p400 = pneg %p201
        %p401 = pneg %p198
        %p402 = pneg %p222
        %p403 = pneg %p219
        %p404 = pneg %p243
        %p405 = pneg %p240
        %p406 = pneg %p269
        %p407 = pneg %p266
        %s408 = sand.u32 %s256, 1
        %s409 = scalar_lea.sflag [#allocation4], %s408
        %s410 = sand.u32 %s256, 1
        %s411 = smul.addr %s410, 16
        %s412 = scalar_lea.vmem [#allocation7], %s411
        %s413 = smul.u32 2, %s28
        %p414 = scmp.lt.s32.totalorder %s413, 3
        %s415 = scalar_select %p414, %s413, 3
        %s416 = smul.addr %s415, 8
        %s417 = scalar_lea.vmem %s1, %s416
        %s418 = smul.u32 2, %s28
        %s419 = smul.u32 2, %s28
        %s420 = smul.u32 2, %s28
        %v421 = vld [vmem:[%s0] sm:$0xff]
        %v422 = vld [vmem:[%s0 + $0x8] sm:$0xff]
        %v423 = vld [vmem:[%s0 + $0x10] sm:$0xff]
        %v424 = vld [vmem:[%s0 + $0x18] sm:$0xff]
        %v425 = vld [vmem:[%s417] sm:$0xff]
        %v426 = vld [vmem:[%s417 + $0x8] sm:$0xff]
        %v427 = vld [vmem:[%s365] sm:$0xff]
        %v428 = vld [vmem:[%s365 + $0x8] sm:$0xff]
        %v429 = vld [vmem:[#allocation5] sm:$0xff]
        %v430 = vld [vmem:[#allocation5 + $0x8] sm:$0xff]
        %v431 = vld [vmem:[#allocation5 + $0x10] sm:$0xff]
        %v432 = vld [vmem:[#allocation5 + $0x18] sm:$0xff]
        %v433 = vld [vmem:[%s4] sm:$0x1]
        %v435 = vperm.slane %v433, 0
        %vm437 = vcmask 261120
        %v439 = vsel %vm437, %v421, 0
        %v442 = vsel %vm437, %v422, 0
        %v445 = vsel %vm437, %v423, 0
        %v448 = vsel %vm437, %v424, 0
        %450 = vmatpush.msra.mxu0 0.0
        %451 = vmatpush.msra.mxu0 0.0
        %452 = vmatpush.msra.mxu0 0.0
        %453 = vmatpush.msra.mxu0 0.0
        %454 = vmatpush.msra.mxu0 0.0
        %455 = vmatpush.msra.mxu0 0.0
        %456 = vmatpush.msra.mxu0 0.0
        %457 = vmatpush.msra.mxu0 0.0
        %458 = vmatpush.msra.mxu0 0.0
        %459 = vmatpush.msra.mxu0 0.0
        %460 = vmatpush.msra.mxu0 0.0
        %461 = vmatpush.msra.mxu0 0.0
        %462 = vmatpush.msra.mxu0 %v432
        %463 = vmatpush.msra.mxu0 %v431
        %464 = vmatpush.msra.mxu0 %v430
        %465 = vmatpush.msra.mxu0 %v429
        %466 = vmatmul.f32.gmra.mxu0 %v439
        %v467 = vpop.f32.mrf.mxu0
        %v468 = vadd.f32 %v435, %v467
        %469 = vmatmul.f32.gmra.mxu0 %v442
        %v470 = vpop.f32.mrf.mxu0
        %v471 = vadd.f32 %v435, %v470
        %472 = vmatmul.f32.gmra.mxu0 %v445
        %v473 = vpop.f32.mrf.mxu0
        %v474 = vadd.f32 %v435, %v473
        %475 = vmatmul.f32.gmra.mxu0 %v448
        %v476 = vpop.f32.mrf.mxu0
        %v477 = vadd.f32 %v435, %v476
        %478 = vdwg.mxu0
        %v479 = vld [vmem:[%s5] sm:$0xff]
        %v480 = vld [vmem:[%s5 + $0x8] sm:$0xff]
        %v481 = vld [vmem:[%s5 + $0x10] sm:$0xff]
        %v482 = vld [vmem:[%s5 + $0x18] sm:$0xff]
        %v483 = vld [vmem:[%s5 + $0x20] sm:$0xff]
        %v484 = vld [vmem:[%s5 + $0x28] sm:$0xff]
        %v485 = vld [vmem:[%s5 + $0x30] sm:$0xff]
        %v486 = vld [vmem:[%s5 + $0x38] sm:$0xff]
        %v487 = vld [vmem:[%s6] sm:$0x3]
        %v489 = vperm.slane %v487, 0
        %v490 = vperm.slane %v487, 1
        %v494 = vsel %vm437, %v425, 0
        %v497 = vsel %vm437, %v426, 0
        %499 = vmatpush.msra.mxu0 0.0
        %500 = vmatpush.msra.mxu0 0.0
        %501 = vmatpush.msra.mxu0 0.0
        %502 = vmatpush.msra.mxu0 0.0
        %503 = vmatpush.msra.mxu0 0.0
        %504 = vmatpush.msra.mxu0 0.0
        %505 = vmatpush.msra.mxu0 0.0
        %506 = vmatpush.msra.mxu0 0.0
        %507 = vmatpush.msra.mxu0 0.0
        %508 = vmatpush.msra.mxu0 0.0
        %509 = vmatpush.msra.mxu0 0.0
        %510 = vmatpush.msra.mxu0 0.0
        %511 = vmatpush.msra.mxu0 %v485
        %512 = vmatpush.msra.mxu0 %v483
        %513 = vmatpush.msra.mxu0 %v481
        %514 = vmatpush.msra.mxu0 %v479
        %515 = vmatmul.f32.gmra.mxu0 %v494
        %v516 = vpop.f32.mrf.mxu0
        %v517 = vadd.f32 %v489, %v516
        %518 = vmatmul.f32.gmra.mxu0 %v497
        %v519 = vpop.f32.mrf.mxu0
        %v520 = vadd.f32 %v489, %v519
        %521 = vdwg.mxu0
        %522 = vmatpush.msra.mxu0 0.0
        %523 = vmatpush.msra.mxu0 0.0
        %524 = vmatpush.msra.mxu0 0.0
        %525 = vmatpush.msra.mxu0 0.0
        %526 = vmatpush.msra.mxu0 0.0
        %527 = vmatpush.msra.mxu0 0.0
        %528 = vmatpush.msra.mxu0 0.0
        %529 = vmatpush.msra.mxu0 0.0
        %530 = vmatpush.msra.mxu0 0.0
        %531 = vmatpush.msra.mxu0 0.0
        %532 = vmatpush.msra.mxu0 0.0
        %533 = vmatpush.msra.mxu0 0.0
        %534 = vmatpush.msra.mxu0 %v486
        %535 = vmatpush.msra.mxu0 %v484
        %536 = vmatpush.msra.mxu0 %v482
        %537 = vmatpush.msra.mxu0 %v480
        %538 = vmatmul.f32.gmra.mxu0 %v494
        %v539 = vpop.f32.mrf.mxu0
        %v540 = vadd.f32 %v490, %v539
        %541 = vmatmul.f32.gmra.mxu0 %v497
        %v542 = vpop.f32.mrf.mxu0
        %v543 = vadd.f32 %v490, %v542
        %544 = vdwg.mxu0
        %vm545 = vcmp.gt.f32.partialorder %v427, 0.0
        %vm546 = vcmp.gt.f32.partialorder %v428, 0.0
        %v547 = vsel %vm545, 0.0, -1e+30
        %v548 = vsel %vm546, 0.0, -1e+30
        %v551 = vrot.slane %v517, 1
        %v552 = vrot.slane %v517, 2
        %v553 = vrot.slane %v517, 3
        %v554 = vrot.slane %v517, 4
        %v555 = vrot.slane %v517, 5
        %v556 = vrot.slane %v517, 6
        %v557 = vrot.slane %v517, 7
        %v558 = vrot.slane %v520, 1
        %v559 = vrot.slane %v520, 2
        %v560 = vrot.slane %v520, 3
        %v561 = vrot.slane %v520, 4
        %v562 = vrot.slane %v520, 5
        %v563 = vrot.slane %v520, 6
        %v564 = vrot.slane %v520, 7
        %v565 = vperm.slane %v517, 0
        %v566 = vperm.slane %v551, 0
        %v567 = vperm.slane %v552, 0
        %v568 = vperm.slane %v553, 0
        %v569 = vperm.slane %v554, 0
        %v570 = vperm.slane %v555, 0
        %v571 = vperm.slane %v556, 0
        %v572 = vperm.slane %v557, 0
        %v573 = vperm.slane %v520, 0
        %v574 = vperm.slane %v558, 0
        %v575 = vperm.slane %v559, 0
        %v576 = vperm.slane %v560, 0
        %v577 = vperm.slane %v561, 0
        %v578 = vperm.slane %v562, 0
        %v579 = vperm.slane %v563, 0
        %v580 = vperm.slane %v564, 0
        %v597 = vadd.f32 %v565, %v468
        %v598 = vadd.f32 %v565, %v471
        %v599 = vadd.f32 %v565, %v474
        %v600 = vadd.f32 %v565, %v477
        %v601 = vadd.f32 %v566, %v468
        %v602 = vadd.f32 %v566, %v471
        %v603 = vadd.f32 %v566, %v474
        %v604 = vadd.f32 %v566, %v477
        %v605 = vadd.f32 %v567, %v468
        %v606 = vadd.f32 %v567, %v471
        %v607 = vadd.f32 %v567, %v474
        %v608 = vadd.f32 %v567, %v477
        %v609 = vadd.f32 %v568, %v468
        %v610 = vadd.f32 %v568, %v471
        %v611 = vadd.f32 %v568, %v474
        %v612 = vadd.f32 %v568, %v477
        %v613 = vadd.f32 %v569, %v468
        %v614 = vadd.f32 %v569, %v471
        %v615 = vadd.f32 %v569, %v474
        %v616 = vadd.f32 %v569, %v477
        %v617 = vadd.f32 %v570, %v468
        %v618 = vadd.f32 %v570, %v471
        %v619 = vadd.f32 %v570, %v474
        %v620 = vadd.f32 %v570, %v477
        %v621 = vadd.f32 %v571, %v468
        %v622 = vadd.f32 %v571, %v471
        %v623 = vadd.f32 %v571, %v474
        %v624 = vadd.f32 %v571, %v477
        %v625 = vadd.f32 %v572, %v468
        %v626 = vadd.f32 %v572, %v471
        %v627 = vadd.f32 %v572, %v474
        %v628 = vadd.f32 %v572, %v477
        %v629 = vadd.f32 %v573, %v468
        %v630 = vadd.f32 %v573, %v471
        %v631 = vadd.f32 %v573, %v474
        %v632 = vadd.f32 %v573, %v477
        %v633 = vadd.f32 %v574, %v468
        %v634 = vadd.f32 %v574, %v471
        %v635 = vadd.f32 %v574, %v474
        %v636 = vadd.f32 %v574, %v477
        %v637 = vadd.f32 %v575, %v468
        %v638 = vadd.f32 %v575, %v471
        %v639 = vadd.f32 %v575, %v474
        %v640 = vadd.f32 %v575, %v477
        %v641 = vadd.f32 %v576, %v468
        %v642 = vadd.f32 %v576, %v471
        %v643 = vadd.f32 %v576, %v474
        %v644 = vadd.f32 %v576, %v477
        %v645 = vadd.f32 %v577, %v468
        %v646 = vadd.f32 %v577, %v471
        %v647 = vadd.f32 %v577, %v474
        %v648 = vadd.f32 %v577, %v477
        %v649 = vadd.f32 %v578, %v468
        %v650 = vadd.f32 %v578, %v471
        %v651 = vadd.f32 %v578, %v474
        %v652 = vadd.f32 %v578, %v477
        %v653 = vadd.f32 %v579, %v468
        %v654 = vadd.f32 %v579, %v471
        %v655 = vadd.f32 %v579, %v474
        %v656 = vadd.f32 %v579, %v477
        %v657 = vadd.f32 %v580, %v468
        %v658 = vadd.f32 %v580, %v471
        %v659 = vadd.f32 %v580, %v474
        %v660 = vadd.f32 %v580, %v477
        %vm661 = vcmp.ge.f32.partialorder %v597, 0.0
        %vm662 = vcmp.ge.f32.partialorder %v598, 0.0
        %vm663 = vcmp.ge.f32.partialorder %v599, 0.0
        %vm664 = vcmp.ge.f32.partialorder %v600, 0.0
        %vm665 = vcmp.ge.f32.partialorder %v601, 0.0
        %vm666 = vcmp.ge.f32.partialorder %v602, 0.0
        %vm667 = vcmp.ge.f32.partialorder %v603, 0.0
        %vm668 = vcmp.ge.f32.partialorder %v604, 0.0
        %vm669 = vcmp.ge.f32.partialorder %v605, 0.0
        %vm670 = vcmp.ge.f32.partialorder %v606, 0.0
        %vm671 = vcmp.ge.f32.partialorder %v607, 0.0
        %vm672 = vcmp.ge.f32.partialorder %v608, 0.0
        %vm673 = vcmp.ge.f32.partialorder %v609, 0.0
        %vm674 = vcmp.ge.f32.partialorder %v610, 0.0
        %vm675 = vcmp.ge.f32.partialorder %v611, 0.0
        %vm676 = vcmp.ge.f32.partialorder %v612, 0.0
        %vm677 = vcmp.ge.f32.partialorder %v613, 0.0
        %vm678 = vcmp.ge.f32.partialorder %v614, 0.0
        %vm679 = vcmp.ge.f32.partialorder %v615, 0.0
        %vm680 = vcmp.ge.f32.partialorder %v616, 0.0
        %vm681 = vcmp.ge.f32.partialorder %v617, 0.0
        %vm682 = vcmp.ge.f32.partialorder %v618, 0.0
        %vm683 = vcmp.ge.f32.partialorder %v619, 0.0
        %vm684 = vcmp.ge.f32.partialorder %v620, 0.0
        %vm685 = vcmp.ge.f32.partialorder %v621, 0.0
        %vm686 = vcmp.ge.f32.partialorder %v622, 0.0
        %vm687 = vcmp.ge.f32.partialorder %v623, 0.0
        %vm688 = vcmp.ge.f32.partialorder %v624, 0.0
        %vm689 = vcmp.ge.f32.partialorder %v625, 0.0
        %vm690 = vcmp.ge.f32.partialorder %v626, 0.0
        %vm691 = vcmp.ge.f32.partialorder %v627, 0.0
        %vm692 = vcmp.ge.f32.partialorder %v628, 0.0
        %vm693 = vcmp.ge.f32.partialorder %v629, 0.0
        %vm694 = vcmp.ge.f32.partialorder %v630, 0.0
        %vm695 = vcmp.ge.f32.partialorder %v631, 0.0
        %vm696 = vcmp.ge.f32.partialorder %v632, 0.0
        %vm697 = vcmp.ge.f32.partialorder %v633, 0.0
        %vm698 = vcmp.ge.f32.partialorder %v634, 0.0
        %vm699 = vcmp.ge.f32.partialorder %v635, 0.0
        %vm700 = vcmp.ge.f32.partialorder %v636, 0.0
        %vm701 = vcmp.ge.f32.partialorder %v637, 0.0
        %vm702 = vcmp.ge.f32.partialorder %v638, 0.0
        %vm703 = vcmp.ge.f32.partialorder %v639, 0.0
        %vm704 = vcmp.ge.f32.partialorder %v640, 0.0
        %vm705 = vcmp.ge.f32.partialorder %v641, 0.0
        %vm706 = vcmp.ge.f32.partialorder %v642, 0.0
        %vm707 = vcmp.ge.f32.partialorder %v643, 0.0
        %vm708 = vcmp.ge.f32.partialorder %v644, 0.0
        %vm709 = vcmp.ge.f32.partialorder %v645, 0.0
        %vm710 = vcmp.ge.f32.partialorder %v646, 0.0
        %vm711 = vcmp.ge.f32.partialorder %v647, 0.0
        %vm712 = vcmp.ge.f32.partialorder %v648, 0.0
        %vm713 = vcmp.ge.f32.partialorder %v649, 0.0
        %vm714 = vcmp.ge.f32.partialorder %v650, 0.0
        %vm715 = vcmp.ge.f32.partialorder %v651, 0.0
        %vm716 = vcmp.ge.f32.partialorder %v652, 0.0
        %vm717 = vcmp.ge.f32.partialorder %v653, 0.0
        %vm718 = vcmp.ge.f32.partialorder %v654, 0.0
        %vm719 = vcmp.ge.f32.partialorder %v655, 0.0
        %vm720 = vcmp.ge.f32.partialorder %v656, 0.0
        %vm721 = vcmp.ge.f32.partialorder %v657, 0.0
        %vm722 = vcmp.ge.f32.partialorder %v658, 0.0
        %vm723 = vcmp.ge.f32.partialorder %v659, 0.0
        %vm724 = vcmp.ge.f32.partialorder %v660, 0.0
        %v725 = vmul.f32 %v597, 0.2
        %v726 = vmul.f32 %v598, 0.2
        %v727 = vmul.f32 %v599, 0.2
        %v728 = vmul.f32 %v600, 0.2
        %v729 = vmul.f32 %v601, 0.2
        %v730 = vmul.f32 %v602, 0.2
        %v731 = vmul.f32 %v603, 0.2
        %v732 = vmul.f32 %v604, 0.2
        %v733 = vmul.f32 %v605, 0.2
        %v734 = vmul.f32 %v606, 0.2
        %v735 = vmul.f32 %v607, 0.2
        %v736 = vmul.f32 %v608, 0.2
        %v737 = vmul.f32 %v609, 0.2
        %v738 = vmul.f32 %v610, 0.2
        %v739 = vmul.f32 %v611, 0.2
        %v740 = vmul.f32 %v612, 0.2
        %v741 = vmul.f32 %v613, 0.2
        %v742 = vmul.f32 %v614, 0.2
        %v743 = vmul.f32 %v615, 0.2
        %v744 = vmul.f32 %v616, 0.2
        %v745 = vmul.f32 %v617, 0.2
        %v746 = vmul.f32 %v618, 0.2
        %v747 = vmul.f32 %v619, 0.2
        %v748 = vmul.f32 %v620, 0.2
        %v749 = vmul.f32 %v621, 0.2
        %v750 = vmul.f32 %v622, 0.2
        %v751 = vmul.f32 %v623, 0.2
        %v752 = vmul.f32 %v624, 0.2
        %v753 = vmul.f32 %v625, 0.2
        %v754 = vmul.f32 %v626, 0.2
        %v755 = vmul.f32 %v627, 0.2
        %v756 = vmul.f32 %v628, 0.2
        %v757 = vmul.f32 %v629, 0.2
        %v758 = vmul.f32 %v630, 0.2
        %v759 = vmul.f32 %v631, 0.2
        %v760 = vmul.f32 %v632, 0.2
        %v761 = vmul.f32 %v633, 0.2
        %v762 = vmul.f32 %v634, 0.2
        %v763 = vmul.f32 %v635, 0.2
        %v764 = vmul.f32 %v636, 0.2
        %v765 = vmul.f32 %v637, 0.2
        %v766 = vmul.f32 %v638, 0.2
        %v767 = vmul.f32 %v639, 0.2
        %v768 = vmul.f32 %v640, 0.2
        %v769 = vmul.f32 %v641, 0.2
        %v770 = vmul.f32 %v642, 0.2
        %v771 = vmul.f32 %v643, 0.2
        %v772 = vmul.f32 %v644, 0.2
        %v773 = vmul.f32 %v645, 0.2
        %v774 = vmul.f32 %v646, 0.2
        %v775 = vmul.f32 %v647, 0.2
        %v776 = vmul.f32 %v648, 0.2
        %v777 = vmul.f32 %v649, 0.2
        %v778 = vmul.f32 %v650, 0.2
        %v779 = vmul.f32 %v651, 0.2
        %v780 = vmul.f32 %v652, 0.2
        %v781 = vmul.f32 %v653, 0.2
        %v782 = vmul.f32 %v654, 0.2
        %v783 = vmul.f32 %v655, 0.2
        %v784 = vmul.f32 %v656, 0.2
        %v785 = vmul.f32 %v657, 0.2
        %v786 = vmul.f32 %v658, 0.2
        %v787 = vmul.f32 %v659, 0.2
        %v788 = vmul.f32 %v660, 0.2
        %v789 = vsel %vm661, %v597, %v725
        %v790 = vsel %vm662, %v598, %v726
        %v791 = vsel %vm663, %v599, %v727
        %v792 = vsel %vm664, %v600, %v728
        %v793 = vsel %vm665, %v601, %v729
        %v794 = vsel %vm666, %v602, %v730
        %v795 = vsel %vm667, %v603, %v731
        %v796 = vsel %vm668, %v604, %v732
        %v797 = vsel %vm669, %v605, %v733
        %v798 = vsel %vm670, %v606, %v734
        %v799 = vsel %vm671, %v607, %v735
        %v800 = vsel %vm672, %v608, %v736
        %v801 = vsel %vm673, %v609, %v737
        %v802 = vsel %vm674, %v610, %v738
        %v803 = vsel %vm675, %v611, %v739
        %v804 = vsel %vm676, %v612, %v740
        %v805 = vsel %vm677, %v613, %v741
        %v806 = vsel %vm678, %v614, %v742
        %v807 = vsel %vm679, %v615, %v743
        %v808 = vsel %vm680, %v616, %v744
        %v809 = vsel %vm681, %v617, %v745
        %v810 = vsel %vm682, %v618, %v746
        %v811 = vsel %vm683, %v619, %v747
        %v812 = vsel %vm684, %v620, %v748
        %v813 = vsel %vm685, %v621, %v749
        %v814 = vsel %vm686, %v622, %v750
        %v815 = vsel %vm687, %v623, %v751
        %v816 = vsel %vm688, %v624, %v752
        %v817 = vsel %vm689, %v625, %v753
        %v818 = vsel %vm690, %v626, %v754
        %v819 = vsel %vm691, %v627, %v755
        %v820 = vsel %vm692, %v628, %v756
        %v821 = vsel %vm693, %v629, %v757
        %v822 = vsel %vm694, %v630, %v758
        %v823 = vsel %vm695, %v631, %v759
        %v824 = vsel %vm696, %v632, %v760
        %v825 = vsel %vm697, %v633, %v761
        %v826 = vsel %vm698, %v634, %v762
        %v827 = vsel %vm699, %v635, %v763
        %v828 = vsel %vm700, %v636, %v764
        %v829 = vsel %vm701, %v637, %v765
        %v830 = vsel %vm702, %v638, %v766
        %v831 = vsel %vm703, %v639, %v767
        %v832 = vsel %vm704, %v640, %v768
        %v833 = vsel %vm705, %v641, %v769
        %v834 = vsel %vm706, %v642, %v770
        %v835 = vsel %vm707, %v643, %v771
        %v836 = vsel %vm708, %v644, %v772
        %v837 = vsel %vm709, %v645, %v773
        %v838 = vsel %vm710, %v646, %v774
        %v839 = vsel %vm711, %v647, %v775
        %v840 = vsel %vm712, %v648, %v776
        %v841 = vsel %vm713, %v649, %v777
        %v842 = vsel %vm714, %v650, %v778
        %v843 = vsel %vm715, %v651, %v779
        %v844 = vsel %vm716, %v652, %v780
        %v845 = vsel %vm717, %v653, %v781
        %v846 = vsel %vm718, %v654, %v782
        %v847 = vsel %vm719, %v655, %v783
        %v848 = vsel %vm720, %v656, %v784
        %v849 = vsel %vm721, %v657, %v785
        %v850 = vsel %vm722, %v658, %v786
        %v851 = vsel %vm723, %v659, %v787
        %v852 = vsel %vm724, %v660, %v788
        %v853 = vld [vmem:[%s7] sm:$0xff]
        %v854 = vld [vmem:[%s7 + $0x8] sm:$0xff]
        %v855 = vld [vmem:[%s7 + $0x10] sm:$0xff]
        %v856 = vld [vmem:[%s7 + $0x18] sm:$0xff]
        %v857 = vld [vmem:[%s7 + $0x20] sm:$0xff]
        %v858 = vld [vmem:[%s7 + $0x28] sm:$0xff]
        %v859 = vld [vmem:[%s7 + $0x30] sm:$0xff]
        %v860 = vld [vmem:[%s7 + $0x38] sm:$0xff]
        %v861 = vld [vmem:[%s7 + $0x40] sm:$0xff]
        %v862 = vld [vmem:[%s7 + $0x48] sm:$0xff]
        %v863 = vld [vmem:[%s7 + $0x50] sm:$0xff]
        %v864 = vld [vmem:[%s7 + $0x58] sm:$0xff]
        %v865 = vld [vmem:[%s7 + $0x60] sm:$0xff]
        %v866 = vld [vmem:[%s7 + $0x68] sm:$0xff]
        %v867 = vld [vmem:[%s7 + $0x70] sm:$0xff]
        %v868 = vld [vmem:[%s7 + $0x78] sm:$0xff]
        %869 = vmatpush.msra.mxu0 %v868
        %870 = vmatpush.msra.mxu0 %v867
        %871 = vmatpush.msra.mxu0 %v866
        %872 = vmatpush.msra.mxu0 %v865
        %873 = vmatpush.msra.mxu0 %v864
        %874 = vmatpush.msra.mxu0 %v863
        %875 = vmatpush.msra.mxu0 %v862
        %876 = vmatpush.msra.mxu0 %v861
        %877 = vmatpush.msra.mxu0 %v860
        %878 = vmatpush.msra.mxu0 %v859
        %879 = vmatpush.msra.mxu0 %v858
        %880 = vmatpush.msra.mxu0 %v857
        %881 = vmatpush.msra.mxu0 %v856
        %882 = vmatpush.msra.mxu0 %v855
        %883 = vmatpush.msra.mxu0 %v854
        %884 = vmatpush.msra.mxu0 %v853
        %885 = vmatmul.f32.gmra.mxu0 %v789
        %v886 = vpop.f32.mrf.mxu0
        %v887 = vadd.f32 0.0, %v886
        %888 = vmatmul.f32.gmra.mxu0 %v790
        %v889 = vpop.f32.mrf.mxu0
        %v890 = vadd.f32 0.0, %v889
        %891 = vmatmul.f32.gmra.mxu0 %v791
        %v892 = vpop.f32.mrf.mxu0
        %v893 = vadd.f32 0.0, %v892
        %894 = vmatmul.f32.gmra.mxu0 %v792
        %v895 = vpop.f32.mrf.mxu0
        %v896 = vadd.f32 0.0, %v895
        %897 = vmatmul.f32.gmra.mxu0 %v793
        %v898 = vpop.f32.mrf.mxu0
        %v899 = vadd.f32 0.0, %v898
        %900 = vmatmul.f32.gmra.mxu0 %v794
        %v901 = vpop.f32.mrf.mxu0
        %v902 = vadd.f32 0.0, %v901
        %903 = vmatmul.f32.gmra.mxu0 %v795
        %v904 = vpop.f32.mrf.mxu0
        %v905 = vadd.f32 0.0, %v904
        %906 = vmatmul.f32.gmra.mxu0 %v796
        %v907 = vpop.f32.mrf.mxu0
        %v908 = vadd.f32 0.0, %v907
        %909 = vmatmul.f32.gmra.mxu0 %v797
        %v910 = vpop.f32.mrf.mxu0
        %v911 = vadd.f32 0.0, %v910
        %912 = vmatmul.f32.gmra.mxu0 %v798
        %v913 = vpop.f32.mrf.mxu0
        %v914 = vadd.f32 0.0, %v913
        %915 = vmatmul.f32.gmra.mxu0 %v799
        %v916 = vpop.f32.mrf.mxu0
        %v917 = vadd.f32 0.0, %v916
        %918 = vmatmul.f32.gmra.mxu0 %v800
        %v919 = vpop.f32.mrf.mxu0
        %v920 = vadd.f32 0.0, %v919
        %921 = vmatmul.f32.gmra.mxu0 %v801
        %v922 = vpop.f32.mrf.mxu0
        %v923 = vadd.f32 0.0, %v922
        %924 = vmatmul.f32.gmra.mxu0 %v802
        %v925 = vpop.f32.mrf.mxu0
        %v926 = vadd.f32 0.0, %v925
        %927 = vmatmul.f32.gmra.mxu0 %v803
        %v928 = vpop.f32.mrf.mxu0
        %v929 = vadd.f32 0.0, %v928
        %930 = vmatmul.f32.gmra.mxu0 %v804
        %v931 = vpop.f32.mrf.mxu0
        %v932 = vadd.f32 0.0, %v931
        %933 = vmatmul.f32.gmra.mxu0 %v805
        %v934 = vpop.f32.mrf.mxu0
        %v935 = vadd.f32 0.0, %v934
        %936 = vmatmul.f32.gmra.mxu0 %v806
        %v937 = vpop.f32.mrf.mxu0
        %v938 = vadd.f32 0.0, %v937
        %939 = vmatmul.f32.gmra.mxu0 %v807
        %v940 = vpop.f32.mrf.mxu0
        %v941 = vadd.f32 0.0, %v940
        %942 = vmatmul.f32.gmra.mxu0 %v808
        %v943 = vpop.f32.mrf.mxu0
        %v944 = vadd.f32 0.0, %v943
        %945 = vmatmul.f32.gmra.mxu0 %v809
        %v946 = vpop.f32.mrf.mxu0
        %v947 = vadd.f32 0.0, %v946
        %948 = vmatmul.f32.gmra.mxu0 %v810
        %v949 = vpop.f32.mrf.mxu0
        %v950 = vadd.f32 0.0, %v949
        %951 = vmatmul.f32.gmra.mxu0 %v811
        %v952 = vpop.f32.mrf.mxu0
        %v953 = vadd.f32 0.0, %v952
        %954 = vmatmul.f32.gmra.mxu0 %v812
        %v955 = vpop.f32.mrf.mxu0
        %v956 = vadd.f32 0.0, %v955
        %957 = vmatmul.f32.gmra.mxu0 %v813
        %v958 = vpop.f32.mrf.mxu0
        %v959 = vadd.f32 0.0, %v958
        %960 = vmatmul.f32.gmra.mxu0 %v814
        %v961 = vpop.f32.mrf.mxu0
        %v962 = vadd.f32 0.0, %v961
        %963 = vmatmul.f32.gmra.mxu0 %v815
        %v964 = vpop.f32.mrf.mxu0
        %v965 = vadd.f32 0.0, %v964
        %966 = vmatmul.f32.gmra.mxu0 %v816
        %v967 = vpop.f32.mrf.mxu0
        %v968 = vadd.f32 0.0, %v967
        %969 = vmatmul.f32.gmra.mxu0 %v817
        %v970 = vpop.f32.mrf.mxu0
        %v971 = vadd.f32 0.0, %v970
        %972 = vmatmul.f32.gmra.mxu0 %v818
        %v973 = vpop.f32.mrf.mxu0
        %v974 = vadd.f32 0.0, %v973
        %975 = vmatmul.f32.gmra.mxu0 %v819
        %v976 = vpop.f32.mrf.mxu0
        %v977 = vadd.f32 0.0, %v976
        %978 = vmatmul.f32.gmra.mxu0 %v820
        %v979 = vpop.f32.mrf.mxu0
        %v980 = vadd.f32 0.0, %v979
        %981 = vmatmul.f32.gmra.mxu0 %v821
        %v982 = vpop.f32.mrf.mxu0
        %v983 = vadd.f32 0.0, %v982
        %984 = vmatmul.f32.gmra.mxu0 %v822
        %v985 = vpop.f32.mrf.mxu0
        %v986 = vadd.f32 0.0, %v985
        %987 = vmatmul.f32.gmra.mxu0 %v823
        %v988 = vpop.f32.mrf.mxu0
        %v989 = vadd.f32 0.0, %v988
        %990 = vmatmul.f32.gmra.mxu0 %v824
        %v991 = vpop.f32.mrf.mxu0
        %v992 = vadd.f32 0.0, %v991
        %993 = vmatmul.f32.gmra.mxu0 %v825
        %v994 = vpop.f32.mrf.mxu0
        %v995 = vadd.f32 0.0, %v994
        %996 = vmatmul.f32.gmra.mxu0 %v826
        %v997 = vpop.f32.mrf.mxu0
        %v998 = vadd.f32 0.0, %v997
        %999 = vmatmul.f32.gmra.mxu0 %v827
        %v1000 = vpop.f32.mrf.mxu0
        %v1001 = vadd.f32 0.0, %v1000
        %1002 = vmatmul.f32.gmra.mxu0 %v828
        %v1003 = vpop.f32.mrf.mxu0
        %v1004 = vadd.f32 0.0, %v1003
        %1005 = vmatmul.f32.gmra.mxu0 %v829
        %v1006 = vpop.f32.mrf.mxu0
        %v1007 = vadd.f32 0.0, %v1006
        %1008 = vmatmul.f32.gmra.mxu0 %v830
        %v1009 = vpop.f32.mrf.mxu0
        %v1010 = vadd.f32 0.0, %v1009
        %1011 = vmatmul.f32.gmra.mxu0 %v831
        %v1012 = vpop.f32.mrf.mxu0
        %v1013 = vadd.f32 0.0, %v1012
        %1014 = vmatmul.f32.gmra.mxu0 %v832
        %v1015 = vpop.f32.mrf.mxu0
        %v1016 = vadd.f32 0.0, %v1015
        %1017 = vmatmul.f32.gmra.mxu0 %v833
        %v1018 = vpop.f32.mrf.mxu0
        %v1019 = vadd.f32 0.0, %v1018
        %1020 = vmatmul.f32.gmra.mxu0 %v834
        %v1021 = vpop.f32.mrf.mxu0
        %v1022 = vadd.f32 0.0, %v1021
        %1023 = vmatmul.f32.gmra.mxu0 %v835
        %v1024 = vpop.f32.mrf.mxu0
        %v1025 = vadd.f32 0.0, %v1024
        %1026 = vmatmul.f32.gmra.mxu0 %v836
        %v1027 = vpop.f32.mrf.mxu0
        %v1028 = vadd.f32 0.0, %v1027
        %1029 = vmatmul.f32.gmra.mxu0 %v837
        %v1030 = vpop.f32.mrf.mxu0
        %v1031 = vadd.f32 0.0, %v1030
        %1032 = vmatmul.f32.gmra.mxu0 %v838
        %v1033 = vpop.f32.mrf.mxu0
        %v1034 = vadd.f32 0.0, %v1033
        %1035 = vmatmul.f32.gmra.mxu0 %v839
        %v1036 = vpop.f32.mrf.mxu0
        %v1037 = vadd.f32 0.0, %v1036
        %1038 = vmatmul.f32.gmra.mxu0 %v840
        %v1039 = vpop.f32.mrf.mxu0
        %v1040 = vadd.f32 0.0, %v1039
        %1041 = vmatmul.f32.gmra.mxu0 %v841
        %v1042 = vpop.f32.mrf.mxu0
        %v1043 = vadd.f32 0.0, %v1042
        %1044 = vmatmul.f32.gmra.mxu0 %v842
        %v1045 = vpop.f32.mrf.mxu0
        %v1046 = vadd.f32 0.0, %v1045
        %1047 = vmatmul.f32.gmra.mxu0 %v843
        %v1048 = vpop.f32.mrf.mxu0
        %v1049 = vadd.f32 0.0, %v1048
        %1050 = vmatmul.f32.gmra.mxu0 %v844
        %v1051 = vpop.f32.mrf.mxu0
        %v1052 = vadd.f32 0.0, %v1051
        %1053 = vmatmul.f32.gmra.mxu0 %v845
        %v1054 = vpop.f32.mrf.mxu0
        %v1055 = vadd.f32 0.0, %v1054
        %1056 = vmatmul.f32.gmra.mxu0 %v846
        %v1057 = vpop.f32.mrf.mxu0
        %v1058 = vadd.f32 0.0, %v1057
        %1059 = vmatmul.f32.gmra.mxu0 %v847
        %v1060 = vpop.f32.mrf.mxu0
        %v1061 = vadd.f32 0.0, %v1060
        %1062 = vmatmul.f32.gmra.mxu0 %v848
        %v1063 = vpop.f32.mrf.mxu0
        %v1064 = vadd.f32 0.0, %v1063
        %1065 = vmatmul.f32.gmra.mxu0 %v849
        %v1066 = vpop.f32.mrf.mxu0
        %v1067 = vadd.f32 0.0, %v1066
        %1068 = vmatmul.f32.gmra.mxu0 %v850
        %v1069 = vpop.f32.mrf.mxu0
        %v1070 = vadd.f32 0.0, %v1069
        %1071 = vmatmul.f32.gmra.mxu0 %v851
        %v1072 = vpop.f32.mrf.mxu0
        %v1073 = vadd.f32 0.0, %v1072
        %1074 = vmatmul.f32.gmra.mxu0 %v852
        %v1075 = vpop.f32.mrf.mxu0
        %v1076 = vadd.f32 0.0, %v1075
        %1077 = vdwg.mxu0
        %v1078 = vperm.slane %v547, 0
        %v1079 = vlaneseq
        %v1080 = vshrl.u32 %v1079, 7
        %1082 = vset.pattern.permute.xlu0 %v1080
        %1083 = vperm.xlu0 %1082, %v1078
        %v1084 = vpop.permute.xlu0 %1083
        %v1085 = vlaneseq
        %v1086 = vshrl.u32 %v1085, 7
        %v1087 = vadd.s32 %v1086, 8
        %1088 = vset.pattern.permute.xlu0 %v1087
        %1089 = vperm.xlu0 %1088, %v1078
        %v1090 = vpop.permute.xlu0 %1089
        %v1091 = vlaneseq
        %v1092 = vshrl.u32 %v1091, 7
        %v1093 = vadd.s32 %v1092, 16
        %1094 = vset.pattern.permute.xlu0 %v1093
        %1095 = vperm.xlu0 %1094, %v1078
        %v1096 = vpop.permute.xlu0 %1095
        %v1097 = vlaneseq
        %v1098 = vshrl.u32 %v1097, 7
        %v1099 = vadd.s32 %v1098, 24
        %1100 = vset.pattern.permute.xlu0 %v1099
        %1101 = vperm.xlu0 %1100, %v1078
        %v1102 = vpop.permute.xlu0 %1101
        %v1103 = vperm.slane %v547, 1
        %v1104 = vlaneseq
        %v1105 = vshrl.u32 %v1104, 7
        %1107 = vset.pattern.permute.xlu0 %v1105
        %1108 = vperm.xlu0 %1107, %v1103
        %v1109 = vpop.permute.xlu0 %1108
        %v1110 = vlaneseq
        %v1111 = vshrl.u32 %v1110, 7
        %v1112 = vadd.s32 %v1111, 8
        %1113 = vset.pattern.permute.xlu0 %v1112
        %1114 = vperm.xlu0 %1113, %v1103
        %v1115 = vpop.permute.xlu0 %1114
        %v1116 = vlaneseq
        %v1117 = vshrl.u32 %v1116, 7
        %v1118 = vadd.s32 %v1117, 16
        %1119 = vset.pattern.permute.xlu0 %v1118
        %1120 = vperm.xlu0 %1119, %v1103
        %v1121 = vpop.permute.xlu0 %1120
        %v1122 = vlaneseq
        %v1123 = vshrl.u32 %v1122, 7
        %v1124 = vadd.s32 %v1123, 24
        %1125 = vset.pattern.permute.xlu0 %v1124
        %1126 = vperm.xlu0 %1125, %v1103
        %v1127 = vpop.permute.xlu0 %1126
        %v1128 = vperm.slane %v547, 2
        %v1129 = vlaneseq
        %v1130 = vshrl.u32 %v1129, 7
        %1132 = vset.pattern.permute.xlu0 %v1130
        %1133 = vperm.xlu0 %1132, %v1128
        %v1134 = vpop.permute.xlu0 %1133
        %v1135 = vlaneseq
        %v1136 = vshrl.u32 %v1135, 7
        %v1137 = vadd.s32 %v1136, 8
        %1138 = vset.pattern.permute.xlu0 %v1137
        %1139 = vperm.xlu0 %1138, %v1128
        %v1140 = vpop.permute.xlu0 %1139
        %v1141 = vlaneseq
        %v1142 = vshrl.u32 %v1141, 7
        %v1143 = vadd.s32 %v1142, 16
        %1144 = vset.pattern.permute.xlu0 %v1143
        %1145 = vperm.xlu0 %1144, %v1128
        %v1146 = vpop.permute.xlu0 %1145
        %v1147 = vlaneseq
        %v1148 = vshrl.u32 %v1147, 7
        %v1149 = vadd.s32 %v1148, 24
        %1150 = vset.pattern.permute.xlu0 %v1149
        %1151 = vperm.xlu0 %1150, %v1128
        %v1152 = vpop.permute.xlu0 %1151
        %v1153 = vperm.slane %v547, 3
        %v1154 = vlaneseq
        %v1155 = vshrl.u32 %v1154, 7
        %1157 = vset.pattern.permute.xlu0 %v1155
        %1158 = vperm.xlu0 %1157, %v1153
        %v1159 = vpop.permute.xlu0 %1158
        %v1160 = vlaneseq
        %v1161 = vshrl.u32 %v1160, 7
        %v1162 = vadd.s32 %v1161, 8
        %1163 = vset.pattern.permute.xlu0 %v1162
        %1164 = vperm.xlu0 %1163, %v1153
        %v1165 = vpop.permute.xlu0 %1164
        %v1166 = vlaneseq
        %v1167 = vshrl.u32 %v1166, 7
        %v1168 = vadd.s32 %v1167, 16
        %1169 = vset.pattern.permute.xlu0 %v1168
        %1170 = vperm.xlu0 %1169, %v1153
        %v1171 = vpop.permute.xlu0 %1170
        %v1172 = vlaneseq
        %v1173 = vshrl.u32 %v1172, 7
        %v1174 = vadd.s32 %v1173, 24
        %1175 = vset.pattern.permute.xlu0 %v1174
        %1176 = vperm.xlu0 %1175, %v1153
        %v1177 = vpop.permute.xlu0 %1176
        %v1178 = vperm.slane %v547, 4
        %v1179 = vlaneseq
        %v1180 = vshrl.u32 %v1179, 7
        %1182 = vset.pattern.permute.xlu0 %v1180
        %1183 = vperm.xlu0 %1182, %v1178
        %v1184 = vpop.permute.xlu0 %1183
        %v1185 = vlaneseq
        %v1186 = vshrl.u32 %v1185, 7
        %v1187 = vadd.s32 %v1186, 8
        %1188 = vset.pattern.permute.xlu0 %v1187
        %1189 = vperm.xlu0 %1188, %v1178
        %v1190 = vpop.permute.xlu0 %1189
        %v1191 = vlaneseq
        %v1192 = vshrl.u32 %v1191, 7
        %v1193 = vadd.s32 %v1192, 16
        %1194 = vset.pattern.permute.xlu0 %v1193
        %1195 = vperm.xlu0 %1194, %v1178
        %v1196 = vpop.permute.xlu0 %1195
        %v1197 = vlaneseq
        %v1198 = vshrl.u32 %v1197, 7
        %v1199 = vadd.s32 %v1198, 24
        %1200 = vset.pattern.permute.xlu0 %v1199
        %1201 = vperm.xlu0 %1200, %v1178
        %v1202 = vpop.permute.xlu0 %1201
        %v1203 = vperm.slane %v547, 5
        %v1204 = vlaneseq
        %v1205 = vshrl.u32 %v1204, 7
        %1207 = vset.pattern.permute.xlu0 %v1205
        %1208 = vperm.xlu0 %1207, %v1203
        %v1209 = vpop.permute.xlu0 %1208
        %v1210 = vlaneseq
        %v1211 = vshrl.u32 %v1210, 7
        %v1212 = vadd.s32 %v1211, 8
        %1213 = vset.pattern.permute.xlu0 %v1212
        %1214 = vperm.xlu0 %1213, %v1203
        %v1215 = vpop.permute.xlu0 %1214
        %v1216 = vlaneseq
        %v1217 = vshrl.u32 %v1216, 7
        %v1218 = vadd.s32 %v1217, 16
        %1219 = vset.pattern.permute.xlu0 %v1218
        %1220 = vperm.xlu0 %1219, %v1203
        %v1221 = vpop.permute.xlu0 %1220
        %v1222 = vlaneseq
        %v1223 = vshrl.u32 %v1222, 7
        %v1224 = vadd.s32 %v1223, 24
        %1225 = vset.pattern.permute.xlu0 %v1224
        %1226 = vperm.xlu0 %1225, %v1203
        %v1227 = vpop.permute.xlu0 %1226
        %v1228 = vperm.slane %v547, 6
        %v1229 = vlaneseq
        %v1230 = vshrl.u32 %v1229, 7
        %1232 = vset.pattern.permute.xlu0 %v1230
        %1233 = vperm.xlu0 %1232, %v1228
        %v1234 = vpop.permute.xlu0 %1233
        %v1235 = vlaneseq
        %v1236 = vshrl.u32 %v1235, 7
        %v1237 = vadd.s32 %v1236, 8
        %1238 = vset.pattern.permute.xlu0 %v1237
        %1239 = vperm.xlu0 %1238, %v1228
        %v1240 = vpop.permute.xlu0 %1239
        %v1241 = vlaneseq
        %v1242 = vshrl.u32 %v1241, 7
        %v1243 = vadd.s32 %v1242, 16
        %1244 = vset.pattern.permute.xlu0 %v1243
        %1245 = vperm.xlu0 %1244, %v1228
        %v1246 = vpop.permute.xlu0 %1245
        %v1247 = vlaneseq
        %v1248 = vshrl.u32 %v1247, 7
        %v1249 = vadd.s32 %v1248, 24
        %1250 = vset.pattern.permute.xlu0 %v1249
        %1251 = vperm.xlu0 %1250, %v1228
        %v1252 = vpop.permute.xlu0 %1251
        %v1253 = vperm.slane %v547, 7
        %v1254 = vlaneseq
        %v1255 = vshrl.u32 %v1254, 7
        %1257 = vset.pattern.permute.xlu0 %v1255
        %1258 = vperm.xlu0 %1257, %v1253
        %v1259 = vpop.permute.xlu0 %1258
        %v1260 = vlaneseq
        %v1261 = vshrl.u32 %v1260, 7
        %v1262 = vadd.s32 %v1261, 8
        %1263 = vset.pattern.permute.xlu0 %v1262
        %1264 = vperm.xlu0 %1263, %v1253
        %v1265 = vpop.permute.xlu0 %1264
        %v1266 = vlaneseq
        %v1267 = vshrl.u32 %v1266, 7
        %v1268 = vadd.s32 %v1267, 16
        %1269 = vset.pattern.permute.xlu0 %v1268
        %1270 = vperm.xlu0 %1269, %v1253
        %v1271 = vpop.permute.xlu0 %1270
        %v1272 = vlaneseq
        %v1273 = vshrl.u32 %v1272, 7
        %v1274 = vadd.s32 %v1273, 24
        %1275 = vset.pattern.permute.xlu0 %v1274
        %1276 = vperm.xlu0 %1275, %v1253
        %v1277 = vpop.permute.xlu0 %1276
        %v1278 = vperm.slane %v548, 0
        %v1279 = vlaneseq
        %v1280 = vshrl.u32 %v1279, 7
        %1282 = vset.pattern.permute.xlu0 %v1280
        %1283 = vperm.xlu0 %1282, %v1278
        %v1284 = vpop.permute.xlu0 %1283
        %v1285 = vlaneseq
        %v1286 = vshrl.u32 %v1285, 7
        %v1287 = vadd.s32 %v1286, 8
        %1288 = vset.pattern.permute.xlu0 %v1287
        %1289 = vperm.xlu0 %1288, %v1278
        %v1290 = vpop.permute.xlu0 %1289
        %v1291 = vlaneseq
        %v1292 = vshrl.u32 %v1291, 7
        %v1293 = vadd.s32 %v1292, 16
        %1294 = vset.pattern.permute.xlu0 %v1293
        %1295 = vperm.xlu0 %1294, %v1278
        %v1296 = vpop.permute.xlu0 %1295
        %v1297 = vlaneseq
        %v1298 = vshrl.u32 %v1297, 7
        %v1299 = vadd.s32 %v1298, 24
        %1300 = vset.pattern.permute.xlu0 %v1299
        %1301 = vperm.xlu0 %1300, %v1278
        %v1302 = vpop.permute.xlu0 %1301
        %v1303 = vperm.slane %v548, 1
        %v1304 = vlaneseq
        %v1305 = vshrl.u32 %v1304, 7
        %1307 = vset.pattern.permute.xlu0 %v1305
        %1308 = vperm.xlu0 %1307, %v1303
        %v1309 = vpop.permute.xlu0 %1308
        %v1310 = vlaneseq
        %v1311 = vshrl.u32 %v1310, 7
        %v1312 = vadd.s32 %v1311, 8
        %1313 = vset.pattern.permute.xlu0 %v1312
        %1314 = vperm.xlu0 %1313, %v1303
        %v1315 = vpop.permute.xlu0 %1314
        %v1316 = vlaneseq
        %v1317 = vshrl.u32 %v1316, 7
        %v1318 = vadd.s32 %v1317, 16
        %1319 = vset.pattern.permute.xlu0 %v1318
        %1320 = vperm.xlu0 %1319, %v1303
        %v1321 = vpop.permute.xlu0 %1320
        %v1322 = vlaneseq
        %v1323 = vshrl.u32 %v1322, 7
        %v1324 = vadd.s32 %v1323, 24
        %1325 = vset.pattern.permute.xlu0 %v1324
        %1326 = vperm.xlu0 %1325, %v1303
        %v1327 = vpop.permute.xlu0 %1326
        %v1328 = vperm.slane %v548, 2
        %v1329 = vlaneseq
        %v1330 = vshrl.u32 %v1329, 7
        %1332 = vset.pattern.permute.xlu0 %v1330
        %1333 = vperm.xlu0 %1332, %v1328
        %v1334 = vpop.permute.xlu0 %1333
        %v1335 = vlaneseq
        %v1336 = vshrl.u32 %v1335, 7
        %v1337 = vadd.s32 %v1336, 8
        %1338 = vset.pattern.permute.xlu0 %v1337
        %1339 = vperm.xlu0 %1338, %v1328
        %v1340 = vpop.permute.xlu0 %1339
        %v1341 = vlaneseq
        %v1342 = vshrl.u32 %v1341, 7
        %v1343 = vadd.s32 %v1342, 16
        %1344 = vset.pattern.permute.xlu0 %v1343
        %1345 = vperm.xlu0 %1344, %v1328
        %v1346 = vpop.permute.xlu0 %1345
        %v1347 = vlaneseq
        %v1348 = vshrl.u32 %v1347, 7
        %v1349 = vadd.s32 %v1348, 24
        %1350 = vset.pattern.permute.xlu0 %v1349
        %1351 = vperm.xlu0 %1350, %v1328
        %v1352 = vpop.permute.xlu0 %1351
        %v1353 = vperm.slane %v548, 3
        %v1354 = vlaneseq
        %v1355 = vshrl.u32 %v1354, 7
        %1357 = vset.pattern.permute.xlu0 %v1355
        %1358 = vperm.xlu0 %1357, %v1353
        %v1359 = vpop.permute.xlu0 %1358
        %v1360 = vlaneseq
        %v1361 = vshrl.u32 %v1360, 7
        %v1362 = vadd.s32 %v1361, 8
        %1363 = vset.pattern.permute.xlu0 %v1362
        %1364 = vperm.xlu0 %1363, %v1353
        %v1365 = vpop.permute.xlu0 %1364
        %v1366 = vlaneseq
        %v1367 = vshrl.u32 %v1366, 7
        %v1368 = vadd.s32 %v1367, 16
        %1369 = vset.pattern.permute.xlu0 %v1368
        %1370 = vperm.xlu0 %1369, %v1353
        %v1371 = vpop.permute.xlu0 %1370
        %v1372 = vlaneseq
        %v1373 = vshrl.u32 %v1372, 7
        %v1374 = vadd.s32 %v1373, 24
        %1375 = vset.pattern.permute.xlu0 %v1374
        %1376 = vperm.xlu0 %1375, %v1353
        %v1377 = vpop.permute.xlu0 %1376
        %v1378 = vperm.slane %v548, 4
        %v1379 = vlaneseq
        %v1380 = vshrl.u32 %v1379, 7
        %1382 = vset.pattern.permute.xlu0 %v1380
        %1383 = vperm.xlu0 %1382, %v1378
        %v1384 = vpop.permute.xlu0 %1383
        %v1385 = vlaneseq
        %v1386 = vshrl.u32 %v1385, 7
        %v1387 = vadd.s32 %v1386, 8
        %1388 = vset.pattern.permute.xlu0 %v1387
        %1389 = vperm.xlu0 %1388, %v1378
        %v1390 = vpop.permute.xlu0 %1389
        %v1391 = vlaneseq
        %v1392 = vshrl.u32 %v1391, 7
        %v1393 = vadd.s32 %v1392, 16
        %1394 = vset.pattern.permute.xlu0 %v1393
        %1395 = vperm.xlu0 %1394, %v1378
        %v1396 = vpop.permute.xlu0 %1395
        %v1397 = vlaneseq
        %v1398 = vshrl.u32 %v1397, 7
        %v1399 = vadd.s32 %v1398, 24
        %1400 = vset.pattern.permute.xlu0 %v1399
        %1401 = vperm.xlu0 %1400, %v1378
        %v1402 = vpop.permute.xlu0 %1401
        %v1403 = vperm.slane %v548, 5
        %v1404 = vlaneseq
        %v1405 = vshrl.u32 %v1404, 7
        %1407 = vset.pattern.permute.xlu0 %v1405
        %1408 = vperm.xlu0 %1407, %v1403
        %v1409 = vpop.permute.xlu0 %1408
        %v1410 = vlaneseq
        %v1411 = vshrl.u32 %v1410, 7
        %v1412 = vadd.s32 %v1411, 8
        %1413 = vset.pattern.permute.xlu0 %v1412
        %1414 = vperm.xlu0 %1413, %v1403
        %v1415 = vpop.permute.xlu0 %1414
        %v1416 = vlaneseq
        %v1417 = vshrl.u32 %v1416, 7
        %v1418 = vadd.s32 %v1417, 16
        %1419 = vset.pattern.permute.xlu0 %v1418
        %1420 = vperm.xlu0 %1419, %v1403
        %v1421 = vpop.permute.xlu0 %1420
        %v1422 = vlaneseq
        %v1423 = vshrl.u32 %v1422, 7
        %v1424 = vadd.s32 %v1423, 24
        %1425 = vset.pattern.permute.xlu0 %v1424
        %1426 = vperm.xlu0 %1425, %v1403
        %v1427 = vpop.permute.xlu0 %1426
        %v1428 = vperm.slane %v548, 6
        %v1429 = vlaneseq
        %v1430 = vshrl.u32 %v1429, 7
        %1432 = vset.pattern.permute.xlu0 %v1430
        %1433 = vperm.xlu0 %1432, %v1428
        %v1434 = vpop.permute.xlu0 %1433
        %v1435 = vlaneseq
        %v1436 = vshrl.u32 %v1435, 7
        %v1437 = vadd.s32 %v1436, 8
        %1438 = vset.pattern.permute.xlu0 %v1437
        %1439 = vperm.xlu0 %1438, %v1428
        %v1440 = vpop.permute.xlu0 %1439
        %v1441 = vlaneseq
        %v1442 = vshrl.u32 %v1441, 7
        %v1443 = vadd.s32 %v1442, 16
        %1444 = vset.pattern.permute.xlu0 %v1443
        %1445 = vperm.xlu0 %1444, %v1428
        %v1446 = vpop.permute.xlu0 %1445
        %v1447 = vlaneseq
        %v1448 = vshrl.u32 %v1447, 7
        %v1449 = vadd.s32 %v1448, 24
        %1450 = vset.pattern.permute.xlu0 %v1449
        %1451 = vperm.xlu0 %1450, %v1428
        %v1452 = vpop.permute.xlu0 %1451
        %v1453 = vperm.slane %v548, 7
        %v1454 = vlaneseq
        %v1455 = vshrl.u32 %v1454, 7
        %1457 = vset.pattern.permute.xlu0 %v1455
        %1458 = vperm.xlu0 %1457, %v1453
        %v1459 = vpop.permute.xlu0 %1458
        %v1460 = vlaneseq
        %v1461 = vshrl.u32 %v1460, 7
        %v1462 = vadd.s32 %v1461, 8
        %1463 = vset.pattern.permute.xlu0 %v1462
        %1464 = vperm.xlu0 %1463, %v1453
        %v1465 = vpop.permute.xlu0 %1464
        %v1466 = vlaneseq
        %v1467 = vshrl.u32 %v1466, 7
        %v1468 = vadd.s32 %v1467, 16
        %1469 = vset.pattern.permute.xlu0 %v1468
        %1470 = vperm.xlu0 %1469, %v1453
        %v1471 = vpop.permute.xlu0 %1470
        %v1472 = vlaneseq
        %v1473 = vshrl.u32 %v1472, 7
        %v1474 = vadd.s32 %v1473, 24
        %1475 = vset.pattern.permute.xlu0 %v1474
        %1476 = vperm.xlu0 %1475, %v1453
        %v1477 = vpop.permute.xlu0 %1476
        %v1478 = vadd.f32 %v887, %v1084
        %v1479 = vadd.f32 %v890, %v1090
        %v1480 = vadd.f32 %v893, %v1096
        %v1481 = vadd.f32 %v896, %v1102
        %v1482 = vadd.f32 %v899, %v1109
        %v1483 = vadd.f32 %v902, %v1115
        %v1484 = vadd.f32 %v905, %v1121
        %v1485 = vadd.f32 %v908, %v1127
        %v1486 = vadd.f32 %v911, %v1134
        %v1487 = vadd.f32 %v914, %v1140
        %v1488 = vadd.f32 %v917, %v1146
        %v1489 = vadd.f32 %v920, %v1152
        %v1490 = vadd.f32 %v923, %v1159
        %v1491 = vadd.f32 %v926, %v1165
        %v1492 = vadd.f32 %v929, %v1171
        %v1493 = vadd.f32 %v932, %v1177
        %v1494 = vadd.f32 %v935, %v1184
        %v1495 = vadd.f32 %v938, %v1190
        %v1496 = vadd.f32 %v941, %v1196
        %v1497 = vadd.f32 %v944, %v1202
        %v1498 = vadd.f32 %v947, %v1209
        %v1499 = vadd.f32 %v950, %v1215
        %v1500 = vadd.f32 %v953, %v1221
        %v1501 = vadd.f32 %v956, %v1227
        %v1502 = vadd.f32 %v959, %v1234
        %v1503 = vadd.f32 %v962, %v1240
        %v1504 = vadd.f32 %v965, %v1246
        %v1505 = vadd.f32 %v968, %v1252
        %v1506 = vadd.f32 %v971, %v1259
        %v1507 = vadd.f32 %v974, %v1265
        %v1508 = vadd.f32 %v977, %v1271
        %v1509 = vadd.f32 %v980, %v1277
        %v1510 = vadd.f32 %v983, %v1284
        %v1511 = vadd.f32 %v986, %v1290
        %v1512 = vadd.f32 %v989, %v1296
        %v1513 = vadd.f32 %v992, %v1302
        %v1514 = vadd.f32 %v995, %v1309
        %v1515 = vadd.f32 %v998, %v1315
        %v1516 = vadd.f32 %v1001, %v1321
        %v1517 = vadd.f32 %v1004, %v1327
        %v1518 = vadd.f32 %v1007, %v1334
        %v1519 = vadd.f32 %v1010, %v1340
        %v1520 = vadd.f32 %v1013, %v1346
        %v1521 = vadd.f32 %v1016, %v1352
        %v1522 = vadd.f32 %v1019, %v1359
        %v1523 = vadd.f32 %v1022, %v1365
        %v1524 = vadd.f32 %v1025, %v1371
        %v1525 = vadd.f32 %v1028, %v1377
        %v1526 = vadd.f32 %v1031, %v1384
        %v1527 = vadd.f32 %v1034, %v1390
        %v1528 = vadd.f32 %v1037, %v1396
        %v1529 = vadd.f32 %v1040, %v1402
        %v1530 = vadd.f32 %v1043, %v1409
        %v1531 = vadd.f32 %v1046, %v1415
        %v1532 = vadd.f32 %v1049, %v1421
        %v1533 = vadd.f32 %v1052, %v1427
        %v1534 = vadd.f32 %v1055, %v1434
        %v1535 = vadd.f32 %v1058, %v1440
        %v1536 = vadd.f32 %v1061, %v1446
        %v1537 = vadd.f32 %v1064, %v1452
        %v1538 = vadd.f32 %v1067, %v1459
        %v1539 = vadd.f32 %v1070, %v1465
        %v1540 = vadd.f32 %v1073, %v1471
        %v1541 = vadd.f32 %v1076, %v1477
        %vm1542 = vcmask 64512
        %v1543 = vsel %vm1542, %v1478, -inf
        %v1544 = vsel %vm1542, %v1479, -inf
        %v1545 = vmax.f32 %v1543, %v1544
        %v1546 = vsel %vm1542, %v1480, -inf
        %v1547 = vmax.f32 %v1545, %v1546
        %v1548 = vsel %vm1542, %v1481, -inf
        %v1549 = vmax.f32 %v1547, %v1548
        %v1550 = vrot.slane %v1549, 4
        %v1551 = vmax.f32 %v1549, %v1550
        %v1552 = vrot.slane %v1551, 2
        %v1553 = vmax.f32 %v1551, %v1552
        %v1554 = vrot.slane %v1553, 1
        %v1555 = vmax.f32 %v1553, %v1554
        %v1556 = vsel %vm1542, %v1482, -inf
        %v1557 = vsel %vm1542, %v1483, -inf
        %v1558 = vmax.f32 %v1556, %v1557
        %v1559 = vsel %vm1542, %v1484, -inf
        %v1560 = vmax.f32 %v1558, %v1559
        %v1561 = vsel %vm1542, %v1485, -inf
        %v1562 = vmax.f32 %v1560, %v1561
        %v1563 = vrot.slane %v1562, 4
        %v1564 = vmax.f32 %v1562, %v1563
        %v1565 = vrot.slane %v1564, 2
        %v1566 = vmax.f32 %v1564, %v1565
        %v1567 = vrot.slane %v1566, 1
        %v1568 = vmax.f32 %v1566, %v1567
        %v1569 = vsel %vm1542, %v1486, -inf
        %v1570 = vsel %vm1542, %v1487, -inf
        %v1571 = vmax.f32 %v1569, %v1570
        %v1572 = vsel %vm1542, %v1488, -inf
        %v1573 = vmax.f32 %v1571, %v1572
        %v1574 = vsel %vm1542, %v1489, -inf
        %v1575 = vmax.f32 %v1573, %v1574
        %v1576 = vrot.slane %v1575, 4
        %v1577 = vmax.f32 %v1575, %v1576
        %v1578 = vrot.slane %v1577, 2
        %v1579 = vmax.f32 %v1577, %v1578
        %v1580 = vrot.slane %v1579, 1
        %v1581 = vmax.f32 %v1579, %v1580
        %v1582 = vsel %vm1542, %v1490, -inf
        %v1583 = vsel %vm1542, %v1491, -inf
        %v1584 = vmax.f32 %v1582, %v1583
        %v1585 = vsel %vm1542, %v1492, -inf
        %v1586 = vmax.f32 %v1584, %v1585
        %v1587 = vsel %vm1542, %v1493, -inf
        %v1588 = vmax.f32 %v1586, %v1587
        %v1589 = vrot.slane %v1588, 4
        %v1590 = vmax.f32 %v1588, %v1589
        %v1591 = vrot.slane %v1590, 2
        %v1592 = vmax.f32 %v1590, %v1591
        %v1593 = vrot.slane %v1592, 1
        %v1594 = vmax.f32 %v1592, %v1593
        %v1595 = vsel %vm1542, %v1494, -inf
        %v1596 = vsel %vm1542, %v1495, -inf
        %v1597 = vmax.f32 %v1595, %v1596
        %v1598 = vsel %vm1542, %v1496, -inf
        %v1599 = vmax.f32 %v1597, %v1598
        %v1600 = vsel %vm1542, %v1497, -inf
        %v1601 = vmax.f32 %v1599, %v1600
        %v1602 = vrot.slane %v1601, 4
        %v1603 = vmax.f32 %v1601, %v1602
        %v1604 = vrot.slane %v1603, 2
        %v1605 = vmax.f32 %v1603, %v1604
        %v1606 = vrot.slane %v1605, 1
        %v1607 = vmax.f32 %v1605, %v1606
        %v1608 = vsel %vm1542, %v1498, -inf
        %v1609 = vsel %vm1542, %v1499, -inf
        %v1610 = vmax.f32 %v1608, %v1609
        %v1611 = vsel %vm1542, %v1500, -inf
        %v1612 = vmax.f32 %v1610, %v1611
        %v1613 = vsel %vm1542, %v1501, -inf
        %v1614 = vmax.f32 %v1612, %v1613
        %v1615 = vrot.slane %v1614, 4
        %v1616 = vmax.f32 %v1614, %v1615
        %v1617 = vrot.slane %v1616, 2
        %v1618 = vmax.f32 %v1616, %v1617
        %v1619 = vrot.slane %v1618, 1
        %v1620 = vmax.f32 %v1618, %v1619
        %v1621 = vsel %vm1542, %v1502, -inf
        %v1622 = vsel %vm1542, %v1503, -inf
        %v1623 = vmax.f32 %v1621, %v1622
        %v1624 = vsel %vm1542, %v1504, -inf
        %v1625 = vmax.f32 %v1623, %v1624
        %v1626 = vsel %vm1542, %v1505, -inf
        %v1627 = vmax.f32 %v1625, %v1626
        %v1628 = vrot.slane %v1627, 4
        %v1629 = vmax.f32 %v1627, %v1628
        %v1630 = vrot.slane %v1629, 2
        %v1631 = vmax.f32 %v1629, %v1630
        %v1632 = vrot.slane %v1631, 1
        %v1633 = vmax.f32 %v1631, %v1632
        %v1634 = vsel %vm1542, %v1506, -inf
        %v1635 = vsel %vm1542, %v1507, -inf
        %v1636 = vmax.f32 %v1634, %v1635
        %v1637 = vsel %vm1542, %v1508, -inf
        %v1638 = vmax.f32 %v1636, %v1637
        %v1639 = vsel %vm1542, %v1509, -inf
        %v1640 = vmax.f32 %v1638, %v1639
        %v1641 = vrot.slane %v1640, 4
        %v1642 = vmax.f32 %v1640, %v1641
        %v1643 = vrot.slane %v1642, 2
        %v1644 = vmax.f32 %v1642, %v1643
        %v1645 = vrot.slane %v1644, 1
        %v1646 = vmax.f32 %v1644, %v1645
        %v1647 = vsel %vm1542, %v1510, -inf
        %v1648 = vsel %vm1542, %v1511, -inf
        %v1649 = vmax.f32 %v1647, %v1648
        %v1650 = vsel %vm1542, %v1512, -inf
        %v1651 = vmax.f32 %v1649, %v1650
        %v1652 = vsel %vm1542, %v1513, -inf
        %v1653 = vmax.f32 %v1651, %v1652
        %v1654 = vrot.slane %v1653, 4
        %v1655 = vmax.f32 %v1653, %v1654
        %v1656 = vrot.slane %v1655, 2
        %v1657 = vmax.f32 %v1655, %v1656
        %v1658 = vrot.slane %v1657, 1
        %v1659 = vmax.f32 %v1657, %v1658
        %v1660 = vsel %vm1542, %v1514, -inf
        %v1661 = vsel %vm1542, %v1515, -inf
        %v1662 = vmax.f32 %v1660, %v1661
        %v1663 = vsel %vm1542, %v1516, -inf
        %v1664 = vmax.f32 %v1662, %v1663
        %v1665 = vsel %vm1542, %v1517, -inf
        %v1666 = vmax.f32 %v1664, %v1665
        %v1667 = vrot.slane %v1666, 4
        %v1668 = vmax.f32 %v1666, %v1667
        %v1669 = vrot.slane %v1668, 2
        %v1670 = vmax.f32 %v1668, %v1669
        %v1671 = vrot.slane %v1670, 1
        %v1672 = vmax.f32 %v1670, %v1671
        %v1673 = vsel %vm1542, %v1518, -inf
        %v1674 = vsel %vm1542, %v1519, -inf
        %v1675 = vmax.f32 %v1673, %v1674
        %v1676 = vsel %vm1542, %v1520, -inf
        %v1677 = vmax.f32 %v1675, %v1676
        %v1678 = vsel %vm1542, %v1521, -inf
        %v1679 = vmax.f32 %v1677, %v1678
        %v1680 = vrot.slane %v1679, 4
        %v1681 = vmax.f32 %v1679, %v1680
        %v1682 = vrot.slane %v1681, 2
        %v1683 = vmax.f32 %v1681, %v1682
        %v1684 = vrot.slane %v1683, 1
        %v1685 = vmax.f32 %v1683, %v1684
        %v1686 = vsel %vm1542, %v1522, -inf
        %v1687 = vsel %vm1542, %v1523, -inf
        %v1688 = vmax.f32 %v1686, %v1687
        %v1689 = vsel %vm1542, %v1524, -inf
        %v1690 = vmax.f32 %v1688, %v1689
        %v1691 = vsel %vm1542, %v1525, -inf
        %v1692 = vmax.f32 %v1690, %v1691
        %v1693 = vrot.slane %v1692, 4
        %v1694 = vmax.f32 %v1692, %v1693
        %v1695 = vrot.slane %v1694, 2
        %v1696 = vmax.f32 %v1694, %v1695
        %v1697 = vrot.slane %v1696, 1
        %v1698 = vmax.f32 %v1696, %v1697
        %v1699 = vsel %vm1542, %v1526, -inf
        %v1700 = vsel %vm1542, %v1527, -inf
        %v1701 = vmax.f32 %v1699, %v1700
        %v1702 = vsel %vm1542, %v1528, -inf
        %v1703 = vmax.f32 %v1701, %v1702
        %v1704 = vsel %vm1542, %v1529, -inf
        %v1705 = vmax.f32 %v1703, %v1704
        %v1706 = vrot.slane %v1705, 4
        %v1707 = vmax.f32 %v1705, %v1706
        %v1708 = vrot.slane %v1707, 2
        %v1709 = vmax.f32 %v1707, %v1708
        %v1710 = vrot.slane %v1709, 1
        %v1711 = vmax.f32 %v1709, %v1710
        %v1712 = vsel %vm1542, %v1530, -inf
        %v1713 = vsel %vm1542, %v1531, -inf
        %v1714 = vmax.f32 %v1712, %v1713
        %v1715 = vsel %vm1542, %v1532, -inf
        %v1716 = vmax.f32 %v1714, %v1715
        %v1717 = vsel %vm1542, %v1533, -inf
        %v1718 = vmax.f32 %v1716, %v1717
        %v1719 = vrot.slane %v1718, 4
        %v1720 = vmax.f32 %v1718, %v1719
        %v1721 = vrot.slane %v1720, 2
        %v1722 = vmax.f32 %v1720, %v1721
        %v1723 = vrot.slane %v1722, 1
        %v1724 = vmax.f32 %v1722, %v1723
        %v1725 = vsel %vm1542, %v1534, -inf
        %v1726 = vsel %vm1542, %v1535, -inf
        %v1727 = vmax.f32 %v1725, %v1726
        %v1728 = vsel %vm1542, %v1536, -inf
        %v1729 = vmax.f32 %v1727, %v1728
        %v1730 = vsel %vm1542, %v1537, -inf
        %v1731 = vmax.f32 %v1729, %v1730
        %v1732 = vrot.slane %v1731, 4
        %v1733 = vmax.f32 %v1731, %v1732
        %v1734 = vrot.slane %v1733, 2
        %v1735 = vmax.f32 %v1733, %v1734
        %v1736 = vrot.slane %v1735, 1
        %v1737 = vmax.f32 %v1735, %v1736
        %v1738 = vsel %vm1542, %v1538, -inf
        %v1739 = vsel %vm1542, %v1539, -inf
        %v1740 = vmax.f32 %v1738, %v1739
        %v1741 = vsel %vm1542, %v1540, -inf
        %v1742 = vmax.f32 %v1740, %v1741
        %v1743 = vsel %vm1542, %v1541, -inf
        %v1744 = vmax.f32 %v1742, %v1743
        %v1745 = vrot.slane %v1744, 4
        %v1746 = vmax.f32 %v1744, %v1745
        %v1747 = vrot.slane %v1746, 2
        %v1748 = vmax.f32 %v1746, %v1747
        %v1749 = vrot.slane %v1748, 1
        %v1750 = vmax.f32 %v1748, %v1749
        %v1751 = vsub.f32 %v1478, %v1555
        %v1752 = vsub.f32 %v1479, %v1555
        %v1753 = vsub.f32 %v1480, %v1555
        %v1754 = vsub.f32 %v1481, %v1555
        %v1755 = vsub.f32 %v1482, %v1568
        %v1756 = vsub.f32 %v1483, %v1568
        %v1757 = vsub.f32 %v1484, %v1568
        %v1758 = vsub.f32 %v1485, %v1568
        %v1759 = vsub.f32 %v1486, %v1581
        %v1760 = vsub.f32 %v1487, %v1581
        %v1761 = vsub.f32 %v1488, %v1581
        %v1762 = vsub.f32 %v1489, %v1581
        %v1763 = vsub.f32 %v1490, %v1594
        %v1764 = vsub.f32 %v1491, %v1594
        %v1765 = vsub.f32 %v1492, %v1594
        %v1766 = vsub.f32 %v1493, %v1594
        %v1767 = vsub.f32 %v1494, %v1607
        %v1768 = vsub.f32 %v1495, %v1607
        %v1769 = vsub.f32 %v1496, %v1607
        %v1770 = vsub.f32 %v1497, %v1607
        %v1771 = vsub.f32 %v1498, %v1620
        %v1772 = vsub.f32 %v1499, %v1620
        %v1773 = vsub.f32 %v1500, %v1620
        %v1774 = vsub.f32 %v1501, %v1620
        %v1775 = vsub.f32 %v1502, %v1633
        %v1776 = vsub.f32 %v1503, %v1633
        %v1777 = vsub.f32 %v1504, %v1633
        %v1778 = vsub.f32 %v1505, %v1633
        %v1779 = vsub.f32 %v1506, %v1646
        %v1780 = vsub.f32 %v1507, %v1646
        %v1781 = vsub.f32 %v1508, %v1646
        %v1782 = vsub.f32 %v1509, %v1646
        %v1783 = vsub.f32 %v1510, %v1659
        %v1784 = vsub.f32 %v1511, %v1659
        %v1785 = vsub.f32 %v1512, %v1659
        %v1786 = vsub.f32 %v1513, %v1659
        %v1787 = vsub.f32 %v1514, %v1672
        %v1788 = vsub.f32 %v1515, %v1672
        %v1789 = vsub.f32 %v1516, %v1672
        %v1790 = vsub.f32 %v1517, %v1672
        %v1791 = vsub.f32 %v1518, %v1685
        %v1792 = vsub.f32 %v1519, %v1685
        %v1793 = vsub.f32 %v1520, %v1685
        %v1794 = vsub.f32 %v1521, %v1685
        %v1795 = vsub.f32 %v1522, %v1698
        %v1796 = vsub.f32 %v1523, %v1698
        %v1797 = vsub.f32 %v1524, %v1698
        %v1798 = vsub.f32 %v1525, %v1698
        %v1799 = vsub.f32 %v1526, %v1711
        %v1800 = vsub.f32 %v1527, %v1711
        %v1801 = vsub.f32 %v1528, %v1711
        %v1802 = vsub.f32 %v1529, %v1711
        %v1803 = vsub.f32 %v1530, %v1724
        %v1804 = vsub.f32 %v1531, %v1724
        %v1805 = vsub.f32 %v1532, %v1724
        %v1806 = vsub.f32 %v1533, %v1724
        %v1807 = vsub.f32 %v1534, %v1737
        %v1808 = vsub.f32 %v1535, %v1737
        %v1809 = vsub.f32 %v1536, %v1737
        %v1810 = vsub.f32 %v1537, %v1737
        %v1811 = vsub.f32 %v1538, %v1750
        %v1812 = vsub.f32 %v1539, %v1750
        %v1813 = vsub.f32 %v1540, %v1750
        %v1814 = vsub.f32 %v1541, %v1750
        %v1815 = vmul.f32 %v1751, 1.442695
        %v1816 = vpow.pop %v1815
        %v1817 = vmul.f32 %v1752, 1.442695
        %v1818 = vpow.pop %v1817
        %v1819 = vmul.f32 %v1753, 1.442695
        %v1820 = vpow.pop %v1819
        %v1821 = vmul.f32 %v1754, 1.442695
        %v1822 = vpow.pop %v1821
        %v1823 = vmul.f32 %v1755, 1.442695
        %v1824 = vpow.pop %v1823
        %v1825 = vmul.f32 %v1756, 1.442695
        %v1826 = vpow.pop %v1825
        %v1827 = vmul.f32 %v1757, 1.442695
        %v1828 = vpow.pop %v1827
        %v1829 = vmul.f32 %v1758, 1.442695
        %v1830 = vpow.pop %v1829
        %v1831 = vmul.f32 %v1759, 1.442695
        %v1832 = vpow.pop %v1831
        %v1833 = vmul.f32 %v1760, 1.442695
        %v1834 = vpow.pop %v1833
        %v1835 = vmul.f32 %v1761, 1.442695
        %v1836 = vpow.pop %v1835
        %v1837 = vmul.f32 %v1762, 1.442695
        %v1838 = vpow.pop %v1837
        %v1839 = vmul.f32 %v1763, 1.442695
        %v1840 = vpow.pop %v1839
        %v1841 = vmul.f32 %v1764, 1.442695
        %v1842 = vpow.pop %v1841
        %v1843 = vmul.f32 %v1765, 1.442695
        %v1844 = vpow.pop %v1843
        %v1845 = vmul.f32 %v1766, 1.442695
        %v1846 = vpow.pop %v1845
        %v1847 = vmul.f32 %v1767, 1.442695
        %v1848 = vpow.pop %v1847
        %v1849 = vmul.f32 %v1768, 1.442695
        %v1850 = vpow.pop %v1849
        %v1851 = vmul.f32 %v1769, 1.442695
        %v1852 = vpow.pop %v1851
        %v1853 = vmul.f32 %v1770, 1.442695
        %v1854 = vpow.pop %v1853
        %v1855 = vmul.f32 %v1771, 1.442695
        %v1856 = vpow.pop %v1855
        %v1857 = vmul.f32 %v1772, 1.442695
        %v1858 = vpow.pop %v1857
        %v1859 = vmul.f32 %v1773, 1.442695
        %v1860 = vpow.pop %v1859
        %v1861 = vmul.f32 %v1774, 1.442695
        %v1862 = vpow.pop %v1861
        %v1863 = vmul.f32 %v1775, 1.442695
        %v1864 = vpow.pop %v1863
        %v1865 = vmul.f32 %v1776, 1.442695
        %v1866 = vpow.pop %v1865
        %v1867 = vmul.f32 %v1777, 1.442695
        %v1868 = vpow.pop %v1867
        %v1869 = vmul.f32 %v1778, 1.442695
        %v1870 = vpow.pop %v1869
        %v1871 = vmul.f32 %v1779, 1.442695
        %v1872 = vpow.pop %v1871
        %v1873 = vmul.f32 %v1780, 1.442695
        %v1874 = vpow.pop %v1873
        %v1875 = vmul.f32 %v1781, 1.442695
        %v1876 = vpow.pop %v1875
        %v1877 = vmul.f32 %v1782, 1.442695
        %v1878 = vpow.pop %v1877
        %v1879 = vmul.f32 %v1783, 1.442695
        %v1880 = vpow.pop %v1879
        %v1881 = vmul.f32 %v1784, 1.442695
        %v1882 = vpow.pop %v1881
        %v1883 = vmul.f32 %v1785, 1.442695
        %v1884 = vpow.pop %v1883
        %v1885 = vmul.f32 %v1786, 1.442695
        %v1886 = vpow.pop %v1885
        %v1887 = vmul.f32 %v1787, 1.442695
        %v1888 = vpow.pop %v1887
        %v1889 = vmul.f32 %v1788, 1.442695
        %v1890 = vpow.pop %v1889
        %v1891 = vmul.f32 %v1789, 1.442695
        %v1892 = vpow.pop %v1891
        %v1893 = vmul.f32 %v1790, 1.442695
        %v1894 = vpow.pop %v1893
        %v1895 = vmul.f32 %v1791, 1.442695
        %v1896 = vpow.pop %v1895
        %v1897 = vmul.f32 %v1792, 1.442695
        %v1898 = vpow.pop %v1897
        %v1899 = vmul.f32 %v1793, 1.442695
        %v1900 = vpow.pop %v1899
        %v1901 = vmul.f32 %v1794, 1.442695
        %v1902 = vpow.pop %v1901
        %v1903 = vmul.f32 %v1795, 1.442695
        %v1904 = vpow.pop %v1903
        %v1905 = vmul.f32 %v1796, 1.442695
        %v1906 = vpow.pop %v1905
        %v1907 = vmul.f32 %v1797, 1.442695
        %v1908 = vpow.pop %v1907
        %v1909 = vmul.f32 %v1798, 1.442695
        %v1910 = vpow.pop %v1909
        %v1911 = vmul.f32 %v1799, 1.442695
        %v1912 = vpow.pop %v1911
        %v1913 = vmul.f32 %v1800, 1.442695
        %v1914 = vpow.pop %v1913
        %v1915 = vmul.f32 %v1801, 1.442695
        %v1916 = vpow.pop %v1915
        %v1917 = vmul.f32 %v1802, 1.442695
        %v1918 = vpow.pop %v1917
        %v1919 = vmul.f32 %v1803, 1.442695
        %v1920 = vpow.pop %v1919
        %v1921 = vmul.f32 %v1804, 1.442695
        %v1922 = vpow.pop %v1921
        %v1923 = vmul.f32 %v1805, 1.442695
        %v1924 = vpow.pop %v1923
        %v1925 = vmul.f32 %v1806, 1.442695
        %v1926 = vpow.pop %v1925
        %v1927 = vmul.f32 %v1807, 1.442695
        %v1928 = vpow.pop %v1927
        %v1929 = vmul.f32 %v1808, 1.442695
        %v1930 = vpow.pop %v1929
        %v1931 = vmul.f32 %v1809, 1.442695
        %v1932 = vpow.pop %v1931
        %v1933 = vmul.f32 %v1810, 1.442695
        %v1934 = vpow.pop %v1933
        %v1935 = vmul.f32 %v1811, 1.442695
        %v1936 = vpow.pop %v1935
        %v1937 = vmul.f32 %v1812, 1.442695
        %v1938 = vpow.pop %v1937
        %v1939 = vmul.f32 %v1813, 1.442695
        %v1940 = vpow.pop %v1939
        %v1941 = vmul.f32 %v1814, 1.442695
        %v1942 = vpow.pop %v1941
        %v1943 = vperm.slane %v427, 0
        %v1944 = vlaneseq
        %v1945 = vshrl.u32 %v1944, 7
        %1947 = vset.pattern.permute.xlu0 %v1945
        %1948 = vperm.xlu0 %1947, %v1943
        %v1949 = vpop.permute.xlu0 %1948
        %v1950 = vlaneseq
        %v1951 = vshrl.u32 %v1950, 7
        %v1952 = vadd.s32 %v1951, 8
        %1953 = vset.pattern.permute.xlu0 %v1952
        %1954 = vperm.xlu0 %1953, %v1943
        %v1955 = vpop.permute.xlu0 %1954
        %v1956 = vlaneseq
        %v1957 = vshrl.u32 %v1956, 7
        %v1958 = vadd.s32 %v1957, 16
        %1959 = vset.pattern.permute.xlu0 %v1958
        %1960 = vperm.xlu0 %1959, %v1943
        %v1961 = vpop.permute.xlu0 %1960
        %v1962 = vlaneseq
        %v1963 = vshrl.u32 %v1962, 7
        %v1964 = vadd.s32 %v1963, 24
        %1965 = vset.pattern.permute.xlu0 %v1964
        %1966 = vperm.xlu0 %1965, %v1943
        %v1967 = vpop.permute.xlu0 %1966
        %v1968 = vperm.slane %v427, 1
        %v1969 = vlaneseq
        %v1970 = vshrl.u32 %v1969, 7
        %1972 = vset.pattern.permute.xlu0 %v1970
        %1973 = vperm.xlu0 %1972, %v1968
        %v1974 = vpop.permute.xlu0 %1973
        %v1975 = vlaneseq
        %v1976 = vshrl.u32 %v1975, 7
        %v1977 = vadd.s32 %v1976, 8
        %1978 = vset.pattern.permute.xlu0 %v1977
        %1979 = vperm.xlu0 %1978, %v1968
        %v1980 = vpop.permute.xlu0 %1979
        %v1981 = vlaneseq
        %v1982 = vshrl.u32 %v1981, 7
        %v1983 = vadd.s32 %v1982, 16
        %1984 = vset.pattern.permute.xlu0 %v1983
        %1985 = vperm.xlu0 %1984, %v1968
        %v1986 = vpop.permute.xlu0 %1985
        %v1987 = vlaneseq
        %v1988 = vshrl.u32 %v1987, 7
        %v1989 = vadd.s32 %v1988, 24
        %1990 = vset.pattern.permute.xlu0 %v1989
        %1991 = vperm.xlu0 %1990, %v1968
        %v1992 = vpop.permute.xlu0 %1991
        %v1993 = vperm.slane %v427, 2
        %v1994 = vlaneseq
        %v1995 = vshrl.u32 %v1994, 7
        %1997 = vset.pattern.permute.xlu0 %v1995
        %1998 = vperm.xlu0 %1997, %v1993
        %v1999 = vpop.permute.xlu0 %1998
        %v2000 = vlaneseq
        %v2001 = vshrl.u32 %v2000, 7
        %v2002 = vadd.s32 %v2001, 8
        %2003 = vset.pattern.permute.xlu0 %v2002
        %2004 = vperm.xlu0 %2003, %v1993
        %v2005 = vpop.permute.xlu0 %2004
        %v2006 = vlaneseq
        %v2007 = vshrl.u32 %v2006, 7
        %v2008 = vadd.s32 %v2007, 16
        %2009 = vset.pattern.permute.xlu0 %v2008
        %2010 = vperm.xlu0 %2009, %v1993
        %v2011 = vpop.permute.xlu0 %2010
        %v2012 = vlaneseq
        %v2013 = vshrl.u32 %v2012, 7
        %v2014 = vadd.s32 %v2013, 24
        %2015 = vset.pattern.permute.xlu0 %v2014
        %2016 = vperm.xlu0 %2015, %v1993
        %v2017 = vpop.permute.xlu0 %2016
        %v2018 = vperm.slane %v427, 3
        %v2019 = vlaneseq
        %v2020 = vshrl.u32 %v2019, 7
        %2022 = vset.pattern.permute.xlu0 %v2020
        %2023 = vperm.xlu0 %2022, %v2018
        %v2024 = vpop.permute.xlu0 %2023
        %v2025 = vlaneseq
        %v2026 = vshrl.u32 %v2025, 7
        %v2027 = vadd.s32 %v2026, 8
        %2028 = vset.pattern.permute.xlu0 %v2027
        %2029 = vperm.xlu0 %2028, %v2018
        %v2030 = vpop.permute.xlu0 %2029
        %v2031 = vlaneseq
        %v2032 = vshrl.u32 %v2031, 7
        %v2033 = vadd.s32 %v2032, 16
        %2034 = vset.pattern.permute.xlu0 %v2033
        %2035 = vperm.xlu0 %2034, %v2018
        %v2036 = vpop.permute.xlu0 %2035
        %v2037 = vlaneseq
        %v2038 = vshrl.u32 %v2037, 7
        %v2039 = vadd.s32 %v2038, 24
        %2040 = vset.pattern.permute.xlu0 %v2039
        %2041 = vperm.xlu0 %2040, %v2018
        %v2042 = vpop.permute.xlu0 %2041
        %v2043 = vperm.slane %v427, 4
        %v2044 = vlaneseq
        %v2045 = vshrl.u32 %v2044, 7
        %2047 = vset.pattern.permute.xlu0 %v2045
        %2048 = vperm.xlu0 %2047, %v2043
        %v2049 = vpop.permute.xlu0 %2048
        %v2050 = vlaneseq
        %v2051 = vshrl.u32 %v2050, 7
        %v2052 = vadd.s32 %v2051, 8
        %2053 = vset.pattern.permute.xlu0 %v2052
        %2054 = vperm.xlu0 %2053, %v2043
        %v2055 = vpop.permute.xlu0 %2054
        %v2056 = vlaneseq
        %v2057 = vshrl.u32 %v2056, 7
        %v2058 = vadd.s32 %v2057, 16
        %2059 = vset.pattern.permute.xlu0 %v2058
        %2060 = vperm.xlu0 %2059, %v2043
        %v2061 = vpop.permute.xlu0 %2060
        %v2062 = vlaneseq
        %v2063 = vshrl.u32 %v2062, 7
        %v2064 = vadd.s32 %v2063, 24
        %2065 = vset.pattern.permute.xlu0 %v2064
        %2066 = vperm.xlu0 %2065, %v2043
        %v2067 = vpop.permute.xlu0 %2066
        %v2068 = vperm.slane %v427, 5
        %v2069 = vlaneseq
        %v2070 = vshrl.u32 %v2069, 7
        %2072 = vset.pattern.permute.xlu0 %v2070
        %2073 = vperm.xlu0 %2072, %v2068
        %v2074 = vpop.permute.xlu0 %2073
        %v2075 = vlaneseq
        %v2076 = vshrl.u32 %v2075, 7
        %v2077 = vadd.s32 %v2076, 8
        %2078 = vset.pattern.permute.xlu0 %v2077
        %2079 = vperm.xlu0 %2078, %v2068
        %v2080 = vpop.permute.xlu0 %2079
        %v2081 = vlaneseq
        %v2082 = vshrl.u32 %v2081, 7
        %v2083 = vadd.s32 %v2082, 16
        %2084 = vset.pattern.permute.xlu0 %v2083
        %2085 = vperm.xlu0 %2084, %v2068
        %v2086 = vpop.permute.xlu0 %2085
        %v2087 = vlaneseq
        %v2088 = vshrl.u32 %v2087, 7
        %v2089 = vadd.s32 %v2088, 24
        %2090 = vset.pattern.permute.xlu0 %v2089
        %2091 = vperm.xlu0 %2090, %v2068
        %v2092 = vpop.permute.xlu0 %2091
        %v2093 = vperm.slane %v427, 6
        %v2094 = vlaneseq
        %v2095 = vshrl.u32 %v2094, 7
        %2097 = vset.pattern.permute.xlu0 %v2095
        %2098 = vperm.xlu0 %2097, %v2093
        %v2099 = vpop.permute.xlu0 %2098
        %v2100 = vlaneseq
        %v2101 = vshrl.u32 %v2100, 7
        %v2102 = vadd.s32 %v2101, 8
        %2103 = vset.pattern.permute.xlu0 %v2102
        %2104 = vperm.xlu0 %2103, %v2093
        %v2105 = vpop.permute.xlu0 %2104
        %v2106 = vlaneseq
        %v2107 = vshrl.u32 %v2106, 7
        %v2108 = vadd.s32 %v2107, 16
        %2109 = vset.pattern.permute.xlu0 %v2108
        %2110 = vperm.xlu0 %2109, %v2093
        %v2111 = vpop.permute.xlu0 %2110
        %v2112 = vlaneseq
        %v2113 = vshrl.u32 %v2112, 7
        %v2114 = vadd.s32 %v2113, 24
        %2115 = vset.pattern.permute.xlu0 %v2114
        %2116 = vperm.xlu0 %2115, %v2093
        %v2117 = vpop.permute.xlu0 %2116
        %v2118 = vperm.slane %v427, 7
        %v2119 = vlaneseq
        %v2120 = vshrl.u32 %v2119, 7
        %2122 = vset.pattern.permute.xlu0 %v2120
        %2123 = vperm.xlu0 %2122, %v2118
        %v2124 = vpop.permute.xlu0 %2123
        %v2125 = vlaneseq
        %v2126 = vshrl.u32 %v2125, 7
        %v2127 = vadd.s32 %v2126, 8
        %2128 = vset.pattern.permute.xlu0 %v2127
        %2129 = vperm.xlu0 %2128, %v2118
        %v2130 = vpop.permute.xlu0 %2129
        %v2131 = vlaneseq
        %v2132 = vshrl.u32 %v2131, 7
        %v2133 = vadd.s32 %v2132, 16
        %2134 = vset.pattern.permute.xlu0 %v2133
        %2135 = vperm.xlu0 %2134, %v2118
        %v2136 = vpop.permute.xlu0 %2135
        %v2137 = vlaneseq
        %v2138 = vshrl.u32 %v2137, 7
        %v2139 = vadd.s32 %v2138, 24
        %2140 = vset.pattern.permute.xlu0 %v2139
        %2141 = vperm.xlu0 %2140, %v2118
        %v2142 = vpop.permute.xlu0 %2141
        %v2143 = vperm.slane %v428, 0
        %v2144 = vlaneseq
        %v2145 = vshrl.u32 %v2144, 7
        %2147 = vset.pattern.permute.xlu0 %v2145
        %2148 = vperm.xlu0 %2147, %v2143
        %v2149 = vpop.permute.xlu0 %2148
        %v2150 = vlaneseq
        %v2151 = vshrl.u32 %v2150, 7
        %v2152 = vadd.s32 %v2151, 8
        %2153 = vset.pattern.permute.xlu0 %v2152
        %2154 = vperm.xlu0 %2153, %v2143
        %v2155 = vpop.permute.xlu0 %2154
        %v2156 = vlaneseq
        %v2157 = vshrl.u32 %v2156, 7
        %v2158 = vadd.s32 %v2157, 16
        %2159 = vset.pattern.permute.xlu0 %v2158
        %2160 = vperm.xlu0 %2159, %v2143
        %v2161 = vpop.permute.xlu0 %2160
        %v2162 = vlaneseq
        %v2163 = vshrl.u32 %v2162, 7
        %v2164 = vadd.s32 %v2163, 24
        %2165 = vset.pattern.permute.xlu0 %v2164
        %2166 = vperm.xlu0 %2165, %v2143
        %v2167 = vpop.permute.xlu0 %2166
        %v2168 = vperm.slane %v428, 1
        %v2169 = vlaneseq
        %v2170 = vshrl.u32 %v2169, 7
        %2172 = vset.pattern.permute.xlu0 %v2170
        %2173 = vperm.xlu0 %2172, %v2168
        %v2174 = vpop.permute.xlu0 %2173
        %v2175 = vlaneseq
        %v2176 = vshrl.u32 %v2175, 7
        %v2177 = vadd.s32 %v2176, 8
        %2178 = vset.pattern.permute.xlu0 %v2177
        %2179 = vperm.xlu0 %2178, %v2168
        %v2180 = vpop.permute.xlu0 %2179
        %v2181 = vlaneseq
        %v2182 = vshrl.u32 %v2181, 7
        %v2183 = vadd.s32 %v2182, 16
        %2184 = vset.pattern.permute.xlu0 %v2183
        %2185 = vperm.xlu0 %2184, %v2168
        %v2186 = vpop.permute.xlu0 %2185
        %v2187 = vlaneseq
        %v2188 = vshrl.u32 %v2187, 7
        %v2189 = vadd.s32 %v2188, 24
        %2190 = vset.pattern.permute.xlu0 %v2189
        %2191 = vperm.xlu0 %2190, %v2168
        %v2192 = vpop.permute.xlu0 %2191
        %v2193 = vperm.slane %v428, 2
        %v2194 = vlaneseq
        %v2195 = vshrl.u32 %v2194, 7
        %2197 = vset.pattern.permute.xlu0 %v2195
        %2198 = vperm.xlu0 %2197, %v2193
        %v2199 = vpop.permute.xlu0 %2198
        %v2200 = vlaneseq
        %v2201 = vshrl.u32 %v2200, 7
        %v2202 = vadd.s32 %v2201, 8
        %2203 = vset.pattern.permute.xlu0 %v2202
        %2204 = vperm.xlu0 %2203, %v2193
        %v2205 = vpop.permute.xlu0 %2204
        %v2206 = vlaneseq
        %v2207 = vshrl.u32 %v2206, 7
        %v2208 = vadd.s32 %v2207, 16
        %2209 = vset.pattern.permute.xlu0 %v2208
        %2210 = vperm.xlu0 %2209, %v2193
        %v2211 = vpop.permute.xlu0 %2210
        %v2212 = vlaneseq
        %v2213 = vshrl.u32 %v2212, 7
        %v2214 = vadd.s32 %v2213, 24
        %2215 = vset.pattern.permute.xlu0 %v2214
        %2216 = vperm.xlu0 %2215, %v2193
        %v2217 = vpop.permute.xlu0 %2216
        %v2218 = vperm.slane %v428, 3
        %v2219 = vlaneseq
        %v2220 = vshrl.u32 %v2219, 7
        %2222 = vset.pattern.permute.xlu0 %v2220
        %2223 = vperm.xlu0 %2222, %v2218
        %v2224 = vpop.permute.xlu0 %2223
        %v2225 = vlaneseq
        %v2226 = vshrl.u32 %v2225, 7
        %v2227 = vadd.s32 %v2226, 8
        %2228 = vset.pattern.permute.xlu0 %v2227
        %2229 = vperm.xlu0 %2228, %v2218
        %v2230 = vpop.permute.xlu0 %2229
        %v2231 = vlaneseq
        %v2232 = vshrl.u32 %v2231, 7
        %v2233 = vadd.s32 %v2232, 16
        %2234 = vset.pattern.permute.xlu0 %v2233
        %2235 = vperm.xlu0 %2234, %v2218
        %v2236 = vpop.permute.xlu0 %2235
        %v2237 = vlaneseq
        %v2238 = vshrl.u32 %v2237, 7
        %v2239 = vadd.s32 %v2238, 24
        %2240 = vset.pattern.permute.xlu0 %v2239
        %2241 = vperm.xlu0 %2240, %v2218
        %v2242 = vpop.permute.xlu0 %2241
        %v2243 = vperm.slane %v428, 4
        %v2244 = vlaneseq
        %v2245 = vshrl.u32 %v2244, 7
        %2247 = vset.pattern.permute.xlu0 %v2245
        %2248 = vperm.xlu0 %2247, %v2243
        %v2249 = vpop.permute.xlu0 %2248
        %v2250 = vlaneseq
        %v2251 = vshrl.u32 %v2250, 7
        %v2252 = vadd.s32 %v2251, 8
        %2253 = vset.pattern.permute.xlu0 %v2252
        %2254 = vperm.xlu0 %2253, %v2243
        %v2255 = vpop.permute.xlu0 %2254
        %v2256 = vlaneseq
        %v2257 = vshrl.u32 %v2256, 7
        %v2258 = vadd.s32 %v2257, 16
        %2259 = vset.pattern.permute.xlu0 %v2258
        %2260 = vperm.xlu0 %2259, %v2243
        %v2261 = vpop.permute.xlu0 %2260
        %v2262 = vlaneseq
        %v2263 = vshrl.u32 %v2262, 7
        %v2264 = vadd.s32 %v2263, 24
        %2265 = vset.pattern.permute.xlu0 %v2264
        %2266 = vperm.xlu0 %2265, %v2243
        %v2267 = vpop.permute.xlu0 %2266
        %v2268 = vperm.slane %v428, 5
        %v2269 = vlaneseq
        %v2270 = vshrl.u32 %v2269, 7
        %2272 = vset.pattern.permute.xlu0 %v2270
        %2273 = vperm.xlu0 %2272, %v2268
        %v2274 = vpop.permute.xlu0 %2273
        %v2275 = vlaneseq
        %v2276 = vshrl.u32 %v2275, 7
        %v2277 = vadd.s32 %v2276, 8
        %2278 = vset.pattern.permute.xlu0 %v2277
        %2279 = vperm.xlu0 %2278, %v2268
        %v2280 = vpop.permute.xlu0 %2279
        %v2281 = vlaneseq
        %v2282 = vshrl.u32 %v2281, 7
        %v2283 = vadd.s32 %v2282, 16
        %2284 = vset.pattern.permute.xlu0 %v2283
        %2285 = vperm.xlu0 %2284, %v2268
        %v2286 = vpop.permute.xlu0 %2285
        %v2287 = vlaneseq
        %v2288 = vshrl.u32 %v2287, 7
        %v2289 = vadd.s32 %v2288, 24
        %2290 = vset.pattern.permute.xlu0 %v2289
        %2291 = vperm.xlu0 %2290, %v2268
        %v2292 = vpop.permute.xlu0 %2291
        %v2293 = vperm.slane %v428, 6
        %v2294 = vlaneseq
        %v2295 = vshrl.u32 %v2294, 7
        %2297 = vset.pattern.permute.xlu0 %v2295
        %2298 = vperm.xlu0 %2297, %v2293
        %v2299 = vpop.permute.xlu0 %2298
        %v2300 = vlaneseq
        %v2301 = vshrl.u32 %v2300, 7
        %v2302 = vadd.s32 %v2301, 8
        %2303 = vset.pattern.permute.xlu0 %v2302
        %2304 = vperm.xlu0 %2303, %v2293
        %v2305 = vpop.permute.xlu0 %2304
        %v2306 = vlaneseq
        %v2307 = vshrl.u32 %v2306, 7
        %v2308 = vadd.s32 %v2307, 16
        %2309 = vset.pattern.permute.xlu0 %v2308
        %2310 = vperm.xlu0 %2309, %v2293
        %v2311 = vpop.permute.xlu0 %2310
        %v2312 = vlaneseq
        %v2313 = vshrl.u32 %v2312, 7
        %v2314 = vadd.s32 %v2313, 24
        %2315 = vset.pattern.permute.xlu0 %v2314
        %2316 = vperm.xlu0 %2315, %v2293
        %v2317 = vpop.permute.xlu0 %2316
        %v2318 = vperm.slane %v428, 7
        %v2319 = vlaneseq
        %v2320 = vshrl.u32 %v2319, 7
        %2322 = vset.pattern.permute.xlu0 %v2320
        %2323 = vperm.xlu0 %2322, %v2318
        %v2324 = vpop.permute.xlu0 %2323
        %v2325 = vlaneseq
        %v2326 = vshrl.u32 %v2325, 7
        %v2327 = vadd.s32 %v2326, 8
        %2328 = vset.pattern.permute.xlu0 %v2327
        %2329 = vperm.xlu0 %2328, %v2318
        %v2330 = vpop.permute.xlu0 %2329
        %v2331 = vlaneseq
        %v2332 = vshrl.u32 %v2331, 7
        %v2333 = vadd.s32 %v2332, 16
        %2334 = vset.pattern.permute.xlu0 %v2333
        %2335 = vperm.xlu0 %2334, %v2318
        %v2336 = vpop.permute.xlu0 %2335
        %v2337 = vlaneseq
        %v2338 = vshrl.u32 %v2337, 7
        %v2339 = vadd.s32 %v2338, 24
        %2340 = vset.pattern.permute.xlu0 %v2339
        %2341 = vperm.xlu0 %2340, %v2318
        %v2342 = vpop.permute.xlu0 %2341
        %v2343 = vmul.f32 %v1816, %v1949
        %v2344 = vmul.f32 %v1818, %v1955
        %v2345 = vmul.f32 %v1820, %v1961
        %v2346 = vmul.f32 %v1822, %v1967
        %v2347 = vmul.f32 %v1824, %v1974
        %v2348 = vmul.f32 %v1826, %v1980
        %v2349 = vmul.f32 %v1828, %v1986
        %v2350 = vmul.f32 %v1830, %v1992
        %v2351 = vmul.f32 %v1832, %v1999
        %v2352 = vmul.f32 %v1834, %v2005
        %v2353 = vmul.f32 %v1836, %v2011
        %v2354 = vmul.f32 %v1838, %v2017
        %v2355 = vmul.f32 %v1840, %v2024
        %v2356 = vmul.f32 %v1842, %v2030
        %v2357 = vmul.f32 %v1844, %v2036
        %v2358 = vmul.f32 %v1846, %v2042
        %v2359 = vmul.f32 %v1848, %v2049
        %v2360 = vmul.f32 %v1850, %v2055
        %v2361 = vmul.f32 %v1852, %v2061
        %v2362 = vmul.f32 %v1854, %v2067
        %v2363 = vmul.f32 %v1856, %v2074
        %v2364 = vmul.f32 %v1858, %v2080
        %v2365 = vmul.f32 %v1860, %v2086
        %v2366 = vmul.f32 %v1862, %v2092
        %v2367 = vmul.f32 %v1864, %v2099
        %v2368 = vmul.f32 %v1866, %v2105
        %v2369 = vmul.f32 %v1868, %v2111
        %v2370 = vmul.f32 %v1870, %v2117
        %v2371 = vmul.f32 %v1872, %v2124
        %v2372 = vmul.f32 %v1874, %v2130
        %v2373 = vmul.f32 %v1876, %v2136
        %v2374 = vmul.f32 %v1878, %v2142
        %v2375 = vmul.f32 %v1880, %v2149
        %v2376 = vmul.f32 %v1882, %v2155
        %v2377 = vmul.f32 %v1884, %v2161
        %v2378 = vmul.f32 %v1886, %v2167
        %v2379 = vmul.f32 %v1888, %v2174
        %v2380 = vmul.f32 %v1890, %v2180
        %v2381 = vmul.f32 %v1892, %v2186
        %v2382 = vmul.f32 %v1894, %v2192
        %v2383 = vmul.f32 %v1896, %v2199
        %v2384 = vmul.f32 %v1898, %v2205
        %v2385 = vmul.f32 %v1900, %v2211
        %v2386 = vmul.f32 %v1902, %v2217
        %v2387 = vmul.f32 %v1904, %v2224
        %v2388 = vmul.f32 %v1906, %v2230
        %v2389 = vmul.f32 %v1908, %v2236
        %v2390 = vmul.f32 %v1910, %v2242
        %v2391 = vmul.f32 %v1912, %v2249
        %v2392 = vmul.f32 %v1914, %v2255
        %v2393 = vmul.f32 %v1916, %v2261
        %v2394 = vmul.f32 %v1918, %v2267
        %v2395 = vmul.f32 %v1920, %v2274
        %v2396 = vmul.f32 %v1922, %v2280
        %v2397 = vmul.f32 %v1924, %v2286
        %v2398 = vmul.f32 %v1926, %v2292
        %v2399 = vmul.f32 %v1928, %v2299
        %v2400 = vmul.f32 %v1930, %v2305
        %v2401 = vmul.f32 %v1932, %v2311
        %v2402 = vmul.f32 %v1934, %v2317
        %v2403 = vmul.f32 %v1936, %v2324
        %v2404 = vmul.f32 %v1938, %v2330
        %v2405 = vmul.f32 %v1940, %v2336
        %v2406 = vmul.f32 %v1942, %v2342
        %v2407 = vsel %vm1542, %v2343, 0.0
        %v2408 = vsel %vm1542, %v2344, 0.0
        %v2409 = vadd.f32 %v2407, %v2408
        %v2410 = vsel %vm1542, %v2345, 0.0
        %v2411 = vadd.f32 %v2409, %v2410
        %v2412 = vsel %vm1542, %v2346, 0.0
        %v2413 = vadd.f32 %v2411, %v2412
        %v2414 = vrot.slane %v2413, 4
        %v2415 = vadd.f32 %v2413, %v2414
        %v2416 = vrot.slane %v2415, 2
        %v2417 = vadd.f32 %v2415, %v2416
        %v2418 = vrot.slane %v2417, 1
        %v2419 = vadd.f32 %v2417, %v2418
        %v2420 = vsel %vm1542, %v2347, 0.0
        %v2421 = vsel %vm1542, %v2348, 0.0
        %v2422 = vadd.f32 %v2420, %v2421
        %v2423 = vsel %vm1542, %v2349, 0.0
        %v2424 = vadd.f32 %v2422, %v2423
        %v2425 = vsel %vm1542, %v2350, 0.0
        %v2426 = vadd.f32 %v2424, %v2425
        %v2427 = vrot.slane %v2426, 4
        %v2428 = vadd.f32 %v2426, %v2427
        %v2429 = vrot.slane %v2428, 2
        %v2430 = vadd.f32 %v2428, %v2429
        %v2431 = vrot.slane %v2430, 1
        %v2432 = vadd.f32 %v2430, %v2431
        %v2433 = vsel %vm1542, %v2351, 0.0
        %v2434 = vsel %vm1542, %v2352, 0.0
        %v2435 = vadd.f32 %v2433, %v2434
        %v2436 = vsel %vm1542, %v2353, 0.0
        %v2437 = vadd.f32 %v2435, %v2436
        %v2438 = vsel %vm1542, %v2354, 0.0
        %v2439 = vadd.f32 %v2437, %v2438
        %v2440 = vrot.slane %v2439, 4
        %v2441 = vadd.f32 %v2439, %v2440
        %v2442 = vrot.slane %v2441, 2
        %v2443 = vadd.f32 %v2441, %v2442
        %v2444 = vrot.slane %v2443, 1
        %v2445 = vadd.f32 %v2443, %v2444
        %v2446 = vsel %vm1542, %v2355, 0.0
        %v2447 = vsel %vm1542, %v2356, 0.0
        %v2448 = vadd.f32 %v2446, %v2447
        %v2449 = vsel %vm1542, %v2357, 0.0
        %v2450 = vadd.f32 %v2448, %v2449
        %v2451 = vsel %vm1542, %v2358, 0.0
        %v2452 = vadd.f32 %v2450, %v2451
        %v2453 = vrot.slane %v2452, 4
        %v2454 = vadd.f32 %v2452, %v2453
        %v2455 = vrot.slane %v2454, 2
        %v2456 = vadd.f32 %v2454, %v2455
        %v2457 = vrot.slane %v2456, 1
        %v2458 = vadd.f32 %v2456, %v2457
        %v2459 = vsel %vm1542, %v2359, 0.0
        %v2460 = vsel %vm1542, %v2360, 0.0
        %v2461 = vadd.f32 %v2459, %v2460
        %v2462 = vsel %vm1542, %v2361, 0.0
        %v2463 = vadd.f32 %v2461, %v2462
        %v2464 = vsel %vm1542, %v2362, 0.0
        %v2465 = vadd.f32 %v2463, %v2464
        %v2466 = vrot.slane %v2465, 4
        %v2467 = vadd.f32 %v2465, %v2466
        %v2468 = vrot.slane %v2467, 2
        %v2469 = vadd.f32 %v2467, %v2468
        %v2470 = vrot.slane %v2469, 1
        %v2471 = vadd.f32 %v2469, %v2470
        %v2472 = vsel %vm1542, %v2363, 0.0
        %v2473 = vsel %vm1542, %v2364, 0.0
        %v2474 = vadd.f32 %v2472, %v2473
        %v2475 = vsel %vm1542, %v2365, 0.0
        %v2476 = vadd.f32 %v2474, %v2475
        %v2477 = vsel %vm1542, %v2366, 0.0
        %v2478 = vadd.f32 %v2476, %v2477
        %v2479 = vrot.slane %v2478, 4
        %v2480 = vadd.f32 %v2478, %v2479
        %v2481 = vrot.slane %v2480, 2
        %v2482 = vadd.f32 %v2480, %v2481
        %v2483 = vrot.slane %v2482, 1
        %v2484 = vadd.f32 %v2482, %v2483
        %v2485 = vsel %vm1542, %v2367, 0.0
        %v2486 = vsel %vm1542, %v2368, 0.0
        %v2487 = vadd.f32 %v2485, %v2486
        %v2488 = vsel %vm1542, %v2369, 0.0
        %v2489 = vadd.f32 %v2487, %v2488
        %v2490 = vsel %vm1542, %v2370, 0.0
        %v2491 = vadd.f32 %v2489, %v2490
        %v2492 = vrot.slane %v2491, 4
        %v2493 = vadd.f32 %v2491, %v2492
        %v2494 = vrot.slane %v2493, 2
        %v2495 = vadd.f32 %v2493, %v2494
        %v2496 = vrot.slane %v2495, 1
        %v2497 = vadd.f32 %v2495, %v2496
        %v2498 = vsel %vm1542, %v2371, 0.0
        %v2499 = vsel %vm1542, %v2372, 0.0
        %v2500 = vadd.f32 %v2498, %v2499
        %v2501 = vsel %vm1542, %v2373, 0.0
        %v2502 = vadd.f32 %v2500, %v2501
        %v2503 = vsel %vm1542, %v2374, 0.0
        %v2504 = vadd.f32 %v2502, %v2503
        %v2505 = vrot.slane %v2504, 4
        %v2506 = vadd.f32 %v2504, %v2505
        %v2507 = vrot.slane %v2506, 2
        %v2508 = vadd.f32 %v2506, %v2507
        %v2509 = vrot.slane %v2508, 1
        %v2510 = vadd.f32 %v2508, %v2509
        %v2511 = vsel %vm1542, %v2375, 0.0
        %v2512 = vsel %vm1542, %v2376, 0.0
        %v2513 = vadd.f32 %v2511, %v2512
        %v2514 = vsel %vm1542, %v2377, 0.0
        %v2515 = vadd.f32 %v2513, %v2514
        %v2516 = vsel %vm1542, %v2378, 0.0
        %v2517 = vadd.f32 %v2515, %v2516
        %v2518 = vrot.slane %v2517, 4
        %v2519 = vadd.f32 %v2517, %v2518
        %v2520 = vrot.slane %v2519, 2
        %v2521 = vadd.f32 %v2519, %v2520
        %v2522 = vrot.slane %v2521, 1
        %v2523 = vadd.f32 %v2521, %v2522
        %v2524 = vsel %vm1542, %v2379, 0.0
        %v2525 = vsel %vm1542, %v2380, 0.0
        %v2526 = vadd.f32 %v2524, %v2525
        %v2527 = vsel %vm1542, %v2381, 0.0
        %v2528 = vadd.f32 %v2526, %v2527
        %v2529 = vsel %vm1542, %v2382, 0.0
        %v2530 = vadd.f32 %v2528, %v2529
        %v2531 = vrot.slane %v2530, 4
        %v2532 = vadd.f32 %v2530, %v2531
        %v2533 = vrot.slane %v2532, 2
        %v2534 = vadd.f32 %v2532, %v2533
        %v2535 = vrot.slane %v2534, 1
        %v2536 = vadd.f32 %v2534, %v2535
        %v2537 = vsel %vm1542, %v2383, 0.0
        %v2538 = vsel %vm1542, %v2384, 0.0
        %v2539 = vadd.f32 %v2537, %v2538
        %v2540 = vsel %vm1542, %v2385, 0.0
        %v2541 = vadd.f32 %v2539, %v2540
        %v2542 = vsel %vm1542, %v2386, 0.0
        %v2543 = vadd.f32 %v2541, %v2542
        %v2544 = vrot.slane %v2543, 4
        %v2545 = vadd.f32 %v2543, %v2544
        %v2546 = vrot.slane %v2545, 2
        %v2547 = vadd.f32 %v2545, %v2546
        %v2548 = vrot.slane %v2547, 1
        %v2549 = vadd.f32 %v2547, %v2548
        %v2550 = vsel %vm1542, %v2387, 0.0
        %v2551 = vsel %vm1542, %v2388, 0.0
        %v2552 = vadd.f32 %v2550, %v2551
        %v2553 = vsel %vm1542, %v2389, 0.0
        %v2554 = vadd.f32 %v2552, %v2553
        %v2555 = vsel %vm1542, %v2390, 0.0
        %v2556 = vadd.f32 %v2554, %v2555
        %v2557 = vrot.slane %v2556, 4
        %v2558 = vadd.f32 %v2556, %v2557
        %v2559 = vrot.slane %v2558, 2
        %v2560 = vadd.f32 %v2558, %v2559
        %v2561 = vrot.slane %v2560, 1
        %v2562 = vadd.f32 %v2560, %v2561
        %v2563 = vsel %vm1542, %v2391, 0.0
        %v2564 = vsel %vm1542, %v2392, 0.0
        %v2565 = vadd.f32 %v2563, %v2564
        %v2566 = vsel %vm1542, %v2393, 0.0
        %v2567 = vadd.f32 %v2565, %v2566
        %v2568 = vsel %vm1542, %v2394, 0.0
        %v2569 = vadd.f32 %v2567, %v2568
        %v2570 = vrot.slane %v2569, 4
        %v2571 = vadd.f32 %v2569, %v2570
        %v2572 = vrot.slane %v2571, 2
        %v2573 = vadd.f32 %v2571, %v2572
        %v2574 = vrot.slane %v2573, 1
        %v2575 = vadd.f32 %v2573, %v2574
        %v2576 = vsel %vm1542, %v2395, 0.0
        %v2577 = vsel %vm1542, %v2396, 0.0
        %v2578 = vadd.f32 %v2576, %v2577
        %v2579 = vsel %vm1542, %v2397, 0.0
        %v2580 = vadd.f32 %v2578, %v2579
        %v2581 = vsel %vm1542, %v2398, 0.0
        %v2582 = vadd.f32 %v2580, %v2581
        %v2583 = vrot.slane %v2582, 4
        %v2584 = vadd.f32 %v2582, %v2583
        %v2585 = vrot.slane %v2584, 2
        %v2586 = vadd.f32 %v2584, %v2585
        %v2587 = vrot.slane %v2586, 1
        %v2588 = vadd.f32 %v2586, %v2587
        %v2589 = vsel %vm1542, %v2399, 0.0
        %v2590 = vsel %vm1542, %v2400, 0.0
        %v2591 = vadd.f32 %v2589, %v2590
        %v2592 = vsel %vm1542, %v2401, 0.0
        %v2593 = vadd.f32 %v2591, %v2592
        %v2594 = vsel %vm1542, %v2402, 0.0
        %v2595 = vadd.f32 %v2593, %v2594
        %v2596 = vrot.slane %v2595, 4
        %v2597 = vadd.f32 %v2595, %v2596
        %v2598 = vrot.slane %v2597, 2
        %v2599 = vadd.f32 %v2597, %v2598
        %v2600 = vrot.slane %v2599, 1
        %v2601 = vadd.f32 %v2599, %v2600
        %v2602 = vsel %vm1542, %v2403, 0.0
        %v2603 = vsel %vm1542, %v2404, 0.0
        %v2604 = vadd.f32 %v2602, %v2603
        %v2605 = vsel %vm1542, %v2405, 0.0
        %v2606 = vadd.f32 %v2604, %v2605
        %v2607 = vsel %vm1542, %v2406, 0.0
        %v2608 = vadd.f32 %v2606, %v2607
        %v2609 = vrot.slane %v2608, 4
        %v2610 = vadd.f32 %v2608, %v2609
        %v2611 = vrot.slane %v2610, 2
        %v2612 = vadd.f32 %v2610, %v2611
        %v2613 = vrot.slane %v2612, 1
        %v2614 = vadd.f32 %v2612, %v2613
        %v2615 = vrcp.pop %v2419
        %v2616 = vrcp.pop %v2432
        %v2617 = vrcp.pop %v2445
        %v2618 = vrcp.pop %v2458
        %v2619 = vrcp.pop %v2471
        %v2620 = vrcp.pop %v2484
        %v2621 = vrcp.pop %v2497
        %v2622 = vrcp.pop %v2510
        %v2623 = vrcp.pop %v2523
        %v2624 = vrcp.pop %v2536
        %v2625 = vrcp.pop %v2549
        %v2626 = vrcp.pop %v2562
        %v2627 = vrcp.pop %v2575
        %v2628 = vrcp.pop %v2588
        %v2629 = vrcp.pop %v2601
        %v2630 = vrcp.pop %v2614
        %v2631 = vmul.f32 %v2343, %v2615
        %v2632 = vmul.f32 %v2344, %v2615
        %v2633 = vmul.f32 %v2345, %v2615
        %v2634 = vmul.f32 %v2346, %v2615
        %v2635 = vmul.f32 %v2347, %v2616
        %v2636 = vmul.f32 %v2348, %v2616
        %v2637 = vmul.f32 %v2349, %v2616
        %v2638 = vmul.f32 %v2350, %v2616
        %v2639 = vmul.f32 %v2351, %v2617
        %v2640 = vmul.f32 %v2352, %v2617
        %v2641 = vmul.f32 %v2353, %v2617
        %v2642 = vmul.f32 %v2354, %v2617
        %v2643 = vmul.f32 %v2355, %v2618
        %v2644 = vmul.f32 %v2356, %v2618
        %v2645 = vmul.f32 %v2357, %v2618
        %v2646 = vmul.f32 %v2358, %v2618
        %v2647 = vmul.f32 %v2359, %v2619
        %v2648 = vmul.f32 %v2360, %v2619
        %v2649 = vmul.f32 %v2361, %v2619
        %v2650 = vmul.f32 %v2362, %v2619
        %v2651 = vmul.f32 %v2363, %v2620
        %v2652 = vmul.f32 %v2364, %v2620
        %v2653 = vmul.f32 %v2365, %v2620
        %v2654 = vmul.f32 %v2366, %v2620
        %v2655 = vmul.f32 %v2367, %v2621
        %v2656 = vmul.f32 %v2368, %v2621
        %v2657 = vmul.f32 %v2369, %v2621
        %v2658 = vmul.f32 %v2370, %v2621
        %v2659 = vmul.f32 %v2371, %v2622
        %v2660 = vmul.f32 %v2372, %v2622
        %v2661 = vmul.f32 %v2373, %v2622
        %v2662 = vmul.f32 %v2374, %v2622
        %v2663 = vmul.f32 %v2375, %v2623
        %v2664 = vmul.f32 %v2376, %v2623
        %v2665 = vmul.f32 %v2377, %v2623
        %v2666 = vmul.f32 %v2378, %v2623
        %v2667 = vmul.f32 %v2379, %v2624
        %v2668 = vmul.f32 %v2380, %v2624
        %v2669 = vmul.f32 %v2381, %v2624
        %v2670 = vmul.f32 %v2382, %v2624
        %v2671 = vmul.f32 %v2383, %v2625
        %v2672 = vmul.f32 %v2384, %v2625
        %v2673 = vmul.f32 %v2385, %v2625
        %v2674 = vmul.f32 %v2386, %v2625
        %v2675 = vmul.f32 %v2387, %v2626
        %v2676 = vmul.f32 %v2388, %v2626
        %v2677 = vmul.f32 %v2389, %v2626
        %v2678 = vmul.f32 %v2390, %v2626
        %v2679 = vmul.f32 %v2391, %v2627
        %v2680 = vmul.f32 %v2392, %v2627
        %v2681 = vmul.f32 %v2393, %v2627
        %v2682 = vmul.f32 %v2394, %v2627
        %v2683 = vmul.f32 %v2395, %v2628
        %v2684 = vmul.f32 %v2396, %v2628
        %v2685 = vmul.f32 %v2397, %v2628
        %v2686 = vmul.f32 %v2398, %v2628
        %v2687 = vmul.f32 %v2399, %v2629
        %v2688 = vmul.f32 %v2400, %v2629
        %v2689 = vmul.f32 %v2401, %v2629
        %v2690 = vmul.f32 %v2402, %v2629
        %v2691 = vmul.f32 %v2403, %v2630
        %v2692 = vmul.f32 %v2404, %v2630
        %v2693 = vmul.f32 %v2405, %v2630
        %v2694 = vmul.f32 %v2406, %v2630
        %v2695 = vld [vmem:[%s8] sm:$0xff]
        %v2697 = vsel %vm1542, %v2631, 0
        %v2700 = vsel %vm1542, %v2632, 0
        %v2703 = vsel %vm1542, %v2633, 0
        %v2706 = vsel %vm1542, %v2634, 0
        %v2709 = vsel %vm1542, %v2635, 0
        %v2712 = vsel %vm1542, %v2636, 0
        %v2715 = vsel %vm1542, %v2637, 0
        %v2718 = vsel %vm1542, %v2638, 0
        %v2721 = vsel %vm1542, %v2639, 0
        %v2724 = vsel %vm1542, %v2640, 0
        %v2727 = vsel %vm1542, %v2641, 0
        %v2730 = vsel %vm1542, %v2642, 0
        %v2733 = vsel %vm1542, %v2643, 0
        %v2736 = vsel %vm1542, %v2644, 0
        %v2739 = vsel %vm1542, %v2645, 0
        %v2742 = vsel %vm1542, %v2646, 0
        %v2745 = vsel %vm1542, %v2647, 0
        %v2748 = vsel %vm1542, %v2648, 0
        %v2751 = vsel %vm1542, %v2649, 0
        %v2754 = vsel %vm1542, %v2650, 0
        %v2757 = vsel %vm1542, %v2651, 0
        %v2760 = vsel %vm1542, %v2652, 0
        %v2763 = vsel %vm1542, %v2653, 0
        %v2766 = vsel %vm1542, %v2654, 0
        %v2769 = vsel %vm1542, %v2655, 0
        %v2772 = vsel %vm1542, %v2656, 0
        %v2775 = vsel %vm1542, %v2657, 0
        %v2778 = vsel %vm1542, %v2658, 0
        %v2781 = vsel %vm1542, %v2659, 0
        %v2784 = vsel %vm1542, %v2660, 0
        %v2787 = vsel %vm1542, %v2661, 0
        %v2790 = vsel %vm1542, %v2662, 0
        %v2793 = vsel %vm1542, %v2663, 0
        %v2796 = vsel %vm1542, %v2664, 0
        %v2799 = vsel %vm1542, %v2665, 0
        %v2802 = vsel %vm1542, %v2666, 0
        %v2805 = vsel %vm1542, %v2667, 0
        %v2808 = vsel %vm1542, %v2668, 0
        %v2811 = vsel %vm1542, %v2669, 0
        %v2814 = vsel %vm1542, %v2670, 0
        %v2817 = vsel %vm1542, %v2671, 0
        %v2820 = vsel %vm1542, %v2672, 0
        %v2823 = vsel %vm1542, %v2673, 0
        %v2826 = vsel %vm1542, %v2674, 0
        %v2829 = vsel %vm1542, %v2675, 0
        %v2832 = vsel %vm1542, %v2676, 0
        %v2835 = vsel %vm1542, %v2677, 0
        %v2838 = vsel %vm1542, %v2678, 0
        %v2841 = vsel %vm1542, %v2679, 0
        %v2844 = vsel %vm1542, %v2680, 0
        %v2847 = vsel %vm1542, %v2681, 0
        %v2850 = vsel %vm1542, %v2682, 0
        %v2853 = vsel %vm1542, %v2683, 0
        %v2856 = vsel %vm1542, %v2684, 0
        %v2859 = vsel %vm1542, %v2685, 0
        %v2862 = vsel %vm1542, %v2686, 0
        %v2865 = vsel %vm1542, %v2687, 0
        %v2868 = vsel %vm1542, %v2688, 0
        %v2871 = vsel %vm1542, %v2689, 0
        %v2874 = vsel %vm1542, %v2690, 0
        %v2877 = vsel %vm1542, %v2691, 0
        %v2880 = vsel %vm1542, %v2692, 0
        %v2883 = vsel %vm1542, %v2693, 0
        %v2886 = vsel %vm1542, %v2694, 0
        %2888 = vmatpush.msra.mxu0 0.0
        %2889 = vmatpush.msra.mxu0 0.0
        %2890 = vmatpush.msra.mxu0 0.0
        %2891 = vmatpush.msra.mxu0 0.0
        %2892 = vmatpush.msra.mxu0 0.0
        %2893 = vmatpush.msra.mxu0 0.0
        %2894 = vmatpush.msra.mxu0 0.0
        %2895 = vmatpush.msra.mxu0 0.0
        %2896 = vmatpush.msra.mxu0 0.0
        %2897 = vmatpush.msra.mxu0 0.0
        %2898 = vmatpush.msra.mxu0 0.0
        %2899 = vmatpush.msra.mxu0 0.0
        %2900 = vmatpush.msra.mxu0 0.0
        %2901 = vmatpush.msra.mxu0 0.0
        %2902 = vmatpush.msra.mxu0 0.0
        %2903 = vmatpush.msra.mxu0 %v2695
        %2904 = vmatmul.f32.gmra.mxu0 %v2697
        %v2905 = vpop.f32.mrf.mxu0
        %v2906 = vadd.f32 0.0, %v2905
        %2907 = vmatmul.f32.gmra.mxu0 %v2700
        %v2908 = vpop.f32.mrf.mxu0
        %v2909 = vadd.f32 0.0, %v2908
        %2910 = vmatmul.f32.gmra.mxu0 %v2703
        %v2911 = vpop.f32.mrf.mxu0
        %v2912 = vadd.f32 0.0, %v2911
        %2913 = vmatmul.f32.gmra.mxu0 %v2706
        %v2914 = vpop.f32.mrf.mxu0
        %v2915 = vadd.f32 0.0, %v2914
        %2916 = vmatmul.f32.gmra.mxu0 %v2709
        %v2917 = vpop.f32.mrf.mxu0
        %v2918 = vadd.f32 0.0, %v2917
        %2919 = vmatmul.f32.gmra.mxu0 %v2712
        %v2920 = vpop.f32.mrf.mxu0
        %v2921 = vadd.f32 0.0, %v2920
        %2922 = vmatmul.f32.gmra.mxu0 %v2715
        %v2923 = vpop.f32.mrf.mxu0
        %v2924 = vadd.f32 0.0, %v2923
        %2925 = vmatmul.f32.gmra.mxu0 %v2718
        %v2926 = vpop.f32.mrf.mxu0
        %v2927 = vadd.f32 0.0, %v2926
        %2928 = vmatmul.f32.gmra.mxu0 %v2721
        %v2929 = vpop.f32.mrf.mxu0
        %v2930 = vadd.f32 0.0, %v2929
        %2931 = vmatmul.f32.gmra.mxu0 %v2724
        %v2932 = vpop.f32.mrf.mxu0
        %v2933 = vadd.f32 0.0, %v2932
        %2934 = vmatmul.f32.gmra.mxu0 %v2727
        %v2935 = vpop.f32.mrf.mxu0
        %v2936 = vadd.f32 0.0, %v2935
        %2937 = vmatmul.f32.gmra.mxu0 %v2730
        %v2938 = vpop.f32.mrf.mxu0
        %v2939 = vadd.f32 0.0, %v2938
        %2940 = vmatmul.f32.gmra.mxu0 %v2733
        %v2941 = vpop.f32.mrf.mxu0
        %v2942 = vadd.f32 0.0, %v2941
        %2943 = vmatmul.f32.gmra.mxu0 %v2736
        %v2944 = vpop.f32.mrf.mxu0
        %v2945 = vadd.f32 0.0, %v2944
        %2946 = vmatmul.f32.gmra.mxu0 %v2739
        %v2947 = vpop.f32.mrf.mxu0
        %v2948 = vadd.f32 0.0, %v2947
        %2949 = vmatmul.f32.gmra.mxu0 %v2742
        %v2950 = vpop.f32.mrf.mxu0
        %v2951 = vadd.f32 0.0, %v2950
        %2952 = vmatmul.f32.gmra.mxu0 %v2745
        %v2953 = vpop.f32.mrf.mxu0
        %v2954 = vadd.f32 0.0, %v2953
        %2955 = vmatmul.f32.gmra.mxu0 %v2748
        %v2956 = vpop.f32.mrf.mxu0
        %v2957 = vadd.f32 0.0, %v2956
        %2958 = vmatmul.f32.gmra.mxu0 %v2751
        %v2959 = vpop.f32.mrf.mxu0
        %v2960 = vadd.f32 0.0, %v2959
        %2961 = vmatmul.f32.gmra.mxu0 %v2754
        %v2962 = vpop.f32.mrf.mxu0
        %v2963 = vadd.f32 0.0, %v2962
        %2964 = vmatmul.f32.gmra.mxu0 %v2757
        %v2965 = vpop.f32.mrf.mxu0
        %v2966 = vadd.f32 0.0, %v2965
        %2967 = vmatmul.f32.gmra.mxu0 %v2760
        %v2968 = vpop.f32.mrf.mxu0
        %v2969 = vadd.f32 0.0, %v2968
        %2970 = vmatmul.f32.gmra.mxu0 %v2763
        %v2971 = vpop.f32.mrf.mxu0
        %v2972 = vadd.f32 0.0, %v2971
        %2973 = vmatmul.f32.gmra.mxu0 %v2766
        %v2974 = vpop.f32.mrf.mxu0
        %v2975 = vadd.f32 0.0, %v2974
        %2976 = vmatmul.f32.gmra.mxu0 %v2769
        %v2977 = vpop.f32.mrf.mxu0
        %v2978 = vadd.f32 0.0, %v2977
        %2979 = vmatmul.f32.gmra.mxu0 %v2772
        %v2980 = vpop.f32.mrf.mxu0
        %v2981 = vadd.f32 0.0, %v2980
        %2982 = vmatmul.f32.gmra.mxu0 %v2775
        %v2983 = vpop.f32.mrf.mxu0
        %v2984 = vadd.f32 0.0, %v2983
        %2985 = vmatmul.f32.gmra.mxu0 %v2778
        %v2986 = vpop.f32.mrf.mxu0
        %v2987 = vadd.f32 0.0, %v2986
        %2988 = vmatmul.f32.gmra.mxu0 %v2781
        %v2989 = vpop.f32.mrf.mxu0
        %v2990 = vadd.f32 0.0, %v2989
        %2991 = vmatmul.f32.gmra.mxu0 %v2784
        %v2992 = vpop.f32.mrf.mxu0
        %v2993 = vadd.f32 0.0, %v2992
        %2994 = vmatmul.f32.gmra.mxu0 %v2787
        %v2995 = vpop.f32.mrf.mxu0
        %v2996 = vadd.f32 0.0, %v2995
        %2997 = vmatmul.f32.gmra.mxu0 %v2790
        %v2998 = vpop.f32.mrf.mxu0
        %v2999 = vadd.f32 0.0, %v2998
        %3000 = vmatmul.f32.gmra.mxu0 %v2793
        %v3001 = vpop.f32.mrf.mxu0
        %v3002 = vadd.f32 0.0, %v3001
        %3003 = vmatmul.f32.gmra.mxu0 %v2796
        %v3004 = vpop.f32.mrf.mxu0
        %v3005 = vadd.f32 0.0, %v3004
        %3006 = vmatmul.f32.gmra.mxu0 %v2799
        %v3007 = vpop.f32.mrf.mxu0
        %v3008 = vadd.f32 0.0, %v3007
        %3009 = vmatmul.f32.gmra.mxu0 %v2802
        %v3010 = vpop.f32.mrf.mxu0
        %v3011 = vadd.f32 0.0, %v3010
        %3012 = vmatmul.f32.gmra.mxu0 %v2805
        %v3013 = vpop.f32.mrf.mxu0
        %v3014 = vadd.f32 0.0, %v3013
        %3015 = vmatmul.f32.gmra.mxu0 %v2808
        %v3016 = vpop.f32.mrf.mxu0
        %v3017 = vadd.f32 0.0, %v3016
        %3018 = vmatmul.f32.gmra.mxu0 %v2811
        %v3019 = vpop.f32.mrf.mxu0
        %v3020 = vadd.f32 0.0, %v3019
        %3021 = vmatmul.f32.gmra.mxu0 %v2814
        %v3022 = vpop.f32.mrf.mxu0
        %v3023 = vadd.f32 0.0, %v3022
        %3024 = vmatmul.f32.gmra.mxu0 %v2817
        %v3025 = vpop.f32.mrf.mxu0
        %v3026 = vadd.f32 0.0, %v3025
        %3027 = vmatmul.f32.gmra.mxu0 %v2820
        %v3028 = vpop.f32.mrf.mxu0
        %v3029 = vadd.f32 0.0, %v3028
        %3030 = vmatmul.f32.gmra.mxu0 %v2823
        %v3031 = vpop.f32.mrf.mxu0
        %v3032 = vadd.f32 0.0, %v3031
        %3033 = vmatmul.f32.gmra.mxu0 %v2826
        %v3034 = vpop.f32.mrf.mxu0
        %v3035 = vadd.f32 0.0, %v3034
        %3036 = vmatmul.f32.gmra.mxu0 %v2829
        %v3037 = vpop.f32.mrf.mxu0
        %v3038 = vadd.f32 0.0, %v3037
        %3039 = vmatmul.f32.gmra.mxu0 %v2832
        %v3040 = vpop.f32.mrf.mxu0
        %v3041 = vadd.f32 0.0, %v3040
        %3042 = vmatmul.f32.gmra.mxu0 %v2835
        %v3043 = vpop.f32.mrf.mxu0
        %v3044 = vadd.f32 0.0, %v3043
        %3045 = vmatmul.f32.gmra.mxu0 %v2838
        %v3046 = vpop.f32.mrf.mxu0
        %v3047 = vadd.f32 0.0, %v3046
        %3048 = vmatmul.f32.gmra.mxu0 %v2841
        %v3049 = vpop.f32.mrf.mxu0
        %v3050 = vadd.f32 0.0, %v3049
        %3051 = vmatmul.f32.gmra.mxu0 %v2844
        %v3052 = vpop.f32.mrf.mxu0
        %v3053 = vadd.f32 0.0, %v3052
        %3054 = vmatmul.f32.gmra.mxu0 %v2847
        %v3055 = vpop.f32.mrf.mxu0
        %v3056 = vadd.f32 0.0, %v3055
        %3057 = vmatmul.f32.gmra.mxu0 %v2850
        %v3058 = vpop.f32.mrf.mxu0
        %v3059 = vadd.f32 0.0, %v3058
        %3060 = vmatmul.f32.gmra.mxu0 %v2853
        %v3061 = vpop.f32.mrf.mxu0
        %v3062 = vadd.f32 0.0, %v3061
        %3063 = vmatmul.f32.gmra.mxu0 %v2856
        %v3064 = vpop.f32.mrf.mxu0
        %v3065 = vadd.f32 0.0, %v3064
        %3066 = vmatmul.f32.gmra.mxu0 %v2859
        %v3067 = vpop.f32.mrf.mxu0
        %v3068 = vadd.f32 0.0, %v3067
        %3069 = vmatmul.f32.gmra.mxu0 %v2862
        %v3070 = vpop.f32.mrf.mxu0
        %v3071 = vadd.f32 0.0, %v3070
        %3072 = vmatmul.f32.gmra.mxu0 %v2865
        %v3073 = vpop.f32.mrf.mxu0
        %v3074 = vadd.f32 0.0, %v3073
        %3075 = vmatmul.f32.gmra.mxu0 %v2868
        %v3076 = vpop.f32.mrf.mxu0
        %v3077 = vadd.f32 0.0, %v3076
        %3078 = vmatmul.f32.gmra.mxu0 %v2871
        %v3079 = vpop.f32.mrf.mxu0
        %v3080 = vadd.f32 0.0, %v3079
        %3081 = vmatmul.f32.gmra.mxu0 %v2874
        %v3082 = vpop.f32.mrf.mxu0
        %v3083 = vadd.f32 0.0, %v3082
        %3084 = vmatmul.f32.gmra.mxu0 %v2877
        %v3085 = vpop.f32.mrf.mxu0
        %v3086 = vadd.f32 0.0, %v3085
        %3087 = vmatmul.f32.gmra.mxu0 %v2880
        %v3088 = vpop.f32.mrf.mxu0
        %v3089 = vadd.f32 0.0, %v3088
        %3090 = vmatmul.f32.gmra.mxu0 %v2883
        %v3091 = vpop.f32.mrf.mxu0
        %v3092 = vadd.f32 0.0, %v3091
        %3093 = vmatmul.f32.gmra.mxu0 %v2886
        %v3094 = vpop.f32.mrf.mxu0
        %v3095 = vadd.f32 0.0, %v3094
        %3096 = vdwg.mxu0
        %v3097 = vmul.f32 %v2906, %v468
        %v3098 = vmul.f32 %v2909, %v471
        %v3099 = vmul.f32 %v2912, %v474
        %v3100 = vmul.f32 %v2915, %v477
        %v3101 = vmul.f32 %v2918, %v468
        %v3102 = vmul.f32 %v2921, %v471
        %v3103 = vmul.f32 %v2924, %v474
        %v3104 = vmul.f32 %v2927, %v477
        %v3105 = vmul.f32 %v2930, %v468
        %v3106 = vmul.f32 %v2933, %v471
        %v3107 = vmul.f32 %v2936, %v474
        %v3108 = vmul.f32 %v2939, %v477
        %v3109 = vmul.f32 %v2942, %v468
        %v3110 = vmul.f32 %v2945, %v471
        %v3111 = vmul.f32 %v2948, %v474
        %v3112 = vmul.f32 %v2951, %v477
        %v3113 = vmul.f32 %v2954, %v468
        %v3114 = vmul.f32 %v2957, %v471
        %v3115 = vmul.f32 %v2960, %v474
        %v3116 = vmul.f32 %v2963, %v477
        %v3117 = vmul.f32 %v2966, %v468
        %v3118 = vmul.f32 %v2969, %v471
        %v3119 = vmul.f32 %v2972, %v474
        %v3120 = vmul.f32 %v2975, %v477
        %v3121 = vmul.f32 %v2978, %v468
        %v3122 = vmul.f32 %v2981, %v471
        %v3123 = vmul.f32 %v2984, %v474
        %v3124 = vmul.f32 %v2987, %v477
        %v3125 = vmul.f32 %v2990, %v468
        %v3126 = vmul.f32 %v2993, %v471
        %v3127 = vmul.f32 %v2996, %v474
        %v3128 = vmul.f32 %v2999, %v477
        %v3129 = vmul.f32 %v3002, %v468
        %v3130 = vmul.f32 %v3005, %v471
        %v3131 = vmul.f32 %v3008, %v474
        %v3132 = vmul.f32 %v3011, %v477
        %v3133 = vmul.f32 %v3014, %v468
        %v3134 = vmul.f32 %v3017, %v471
        %v3135 = vmul.f32 %v3020, %v474
        %v3136 = vmul.f32 %v3023, %v477
        %v3137 = vmul.f32 %v3026, %v468
        %v3138 = vmul.f32 %v3029, %v471
        %v3139 = vmul.f32 %v3032, %v474
        %v3140 = vmul.f32 %v3035, %v477
        %v3141 = vmul.f32 %v3038, %v468
        %v3142 = vmul.f32 %v3041, %v471
        %v3143 = vmul.f32 %v3044, %v474
        %v3144 = vmul.f32 %v3047, %v477
        %v3145 = vmul.f32 %v3050, %v468
        %v3146 = vmul.f32 %v3053, %v471
        %v3147 = vmul.f32 %v3056, %v474
        %v3148 = vmul.f32 %v3059, %v477
        %v3149 = vmul.f32 %v3062, %v468
        %v3150 = vmul.f32 %v3065, %v471
        %v3151 = vmul.f32 %v3068, %v474
        %v3152 = vmul.f32 %v3071, %v477
        %v3153 = vmul.f32 %v3074, %v468
        %v3154 = vmul.f32 %v3077, %v471
        %v3155 = vmul.f32 %v3080, %v474
        %v3156 = vmul.f32 %v3083, %v477
        %v3157 = vmul.f32 %v3086, %v468
        %v3158 = vmul.f32 %v3089, %v471
        %v3159 = vmul.f32 %v3092, %v474
        %v3160 = vmul.f32 %v3095, %v477
        %v3161 = vadd.f32 %v3097, %v3098
        %v3162 = vadd.f32 %v3161, %v3099
        %v3163 = vadd.f32 %v3162, %v3100
        %v3164 = vrot.slane %v3163, 4
        %v3165 = vadd.f32 %v3163, %v3164
        %v3166 = vrot.slane %v3165, 2
        %v3167 = vadd.f32 %v3165, %v3166
        %v3168 = vrot.slane %v3167, 1
        %v3169 = vadd.f32 %v3167, %v3168
        %v3170 = vadd.f32 %v3101, %v3102
        %v3171 = vadd.f32 %v3170, %v3103
        %v3172 = vadd.f32 %v3171, %v3104
        %v3173 = vrot.slane %v3172, 4
        %v3174 = vadd.f32 %v3172, %v3173
        %v3175 = vrot.slane %v3174, 2
        %v3176 = vadd.f32 %v3174, %v3175
        %v3177 = vrot.slane %v3176, 1
        %v3178 = vadd.f32 %v3176, %v3177
        %v3179 = vadd.f32 %v3105, %v3106
        %v3180 = vadd.f32 %v3179, %v3107
        %v3181 = vadd.f32 %v3180, %v3108
        %v3182 = vrot.slane %v3181, 4
        %v3183 = vadd.f32 %v3181, %v3182
        %v3184 = vrot.slane %v3183, 2
        %v3185 = vadd.f32 %v3183, %v3184
        %v3186 = vrot.slane %v3185, 1
        %v3187 = vadd.f32 %v3185, %v3186
        %v3188 = vadd.f32 %v3109, %v3110
        %v3189 = vadd.f32 %v3188, %v3111
        %v3190 = vadd.f32 %v3189, %v3112
        %v3191 = vrot.slane %v3190, 4
        %v3192 = vadd.f32 %v3190, %v3191
        %v3193 = vrot.slane %v3192, 2
        %v3194 = vadd.f32 %v3192, %v3193
        %v3195 = vrot.slane %v3194, 1
        %v3196 = vadd.f32 %v3194, %v3195
        %v3197 = vadd.f32 %v3113, %v3114
        %v3198 = vadd.f32 %v3197, %v3115
        %v3199 = vadd.f32 %v3198, %v3116
        %v3200 = vrot.slane %v3199, 4
        %v3201 = vadd.f32 %v3199, %v3200
        %v3202 = vrot.slane %v3201, 2
        %v3203 = vadd.f32 %v3201, %v3202
        %v3204 = vrot.slane %v3203, 1
        %v3205 = vadd.f32 %v3203, %v3204
        %v3206 = vadd.f32 %v3117, %v3118
        %v3207 = vadd.f32 %v3206, %v3119
        %v3208 = vadd.f32 %v3207, %v3120
        %v3209 = vrot.slane %v3208, 4
        %v3210 = vadd.f32 %v3208, %v3209
        %v3211 = vrot.slane %v3210, 2
        %v3212 = vadd.f32 %v3210, %v3211
        %v3213 = vrot.slane %v3212, 1
        %v3214 = vadd.f32 %v3212, %v3213
        %v3215 = vadd.f32 %v3121, %v3122
        %v3216 = vadd.f32 %v3215, %v3123
        %v3217 = vadd.f32 %v3216, %v3124
        %v3218 = vrot.slane %v3217, 4
        %v3219 = vadd.f32 %v3217, %v3218
        %v3220 = vrot.slane %v3219, 2
        %v3221 = vadd.f32 %v3219, %v3220
        %v3222 = vrot.slane %v3221, 1
        %v3223 = vadd.f32 %v3221, %v3222
        %v3224 = vadd.f32 %v3125, %v3126
        %v3225 = vadd.f32 %v3224, %v3127
        %v3226 = vadd.f32 %v3225, %v3128
        %v3227 = vrot.slane %v3226, 4
        %v3228 = vadd.f32 %v3226, %v3227
        %v3229 = vrot.slane %v3228, 2
        %v3230 = vadd.f32 %v3228, %v3229
        %v3231 = vrot.slane %v3230, 1
        %v3232 = vadd.f32 %v3230, %v3231
        %v3233 = vadd.f32 %v3129, %v3130
        %v3234 = vadd.f32 %v3233, %v3131
        %v3235 = vadd.f32 %v3234, %v3132
        %v3236 = vrot.slane %v3235, 4
        %v3237 = vadd.f32 %v3235, %v3236
        %v3238 = vrot.slane %v3237, 2
        %v3239 = vadd.f32 %v3237, %v3238
        %v3240 = vrot.slane %v3239, 1
        %v3241 = vadd.f32 %v3239, %v3240
        %v3242 = vadd.f32 %v3133, %v3134
        %v3243 = vadd.f32 %v3242, %v3135
        %v3244 = vadd.f32 %v3243, %v3136
        %v3245 = vrot.slane %v3244, 4
        %v3246 = vadd.f32 %v3244, %v3245
        %v3247 = vrot.slane %v3246, 2
        %v3248 = vadd.f32 %v3246, %v3247
        %v3249 = vrot.slane %v3248, 1
        %v3250 = vadd.f32 %v3248, %v3249
        %v3251 = vadd.f32 %v3137, %v3138
        %v3252 = vadd.f32 %v3251, %v3139
        %v3253 = vadd.f32 %v3252, %v3140
        %v3254 = vrot.slane %v3253, 4
        %v3255 = vadd.f32 %v3253, %v3254
        %v3256 = vrot.slane %v3255, 2
        %v3257 = vadd.f32 %v3255, %v3256
        %v3258 = vrot.slane %v3257, 1
        %v3259 = vadd.f32 %v3257, %v3258
        %v3260 = vadd.f32 %v3141, %v3142
        %v3261 = vadd.f32 %v3260, %v3143
        %v3262 = vadd.f32 %v3261, %v3144
        %v3263 = vrot.slane %v3262, 4
        %v3264 = vadd.f32 %v3262, %v3263
        %v3265 = vrot.slane %v3264, 2
        %v3266 = vadd.f32 %v3264, %v3265
        %v3267 = vrot.slane %v3266, 1
        %v3268 = vadd.f32 %v3266, %v3267
        %v3269 = vadd.f32 %v3145, %v3146
        %v3270 = vadd.f32 %v3269, %v3147
        %v3271 = vadd.f32 %v3270, %v3148
        %v3272 = vrot.slane %v3271, 4
        %v3273 = vadd.f32 %v3271, %v3272
        %v3274 = vrot.slane %v3273, 2
        %v3275 = vadd.f32 %v3273, %v3274
        %v3276 = vrot.slane %v3275, 1
        %v3277 = vadd.f32 %v3275, %v3276
        %v3278 = vadd.f32 %v3149, %v3150
        %v3279 = vadd.f32 %v3278, %v3151
        %v3280 = vadd.f32 %v3279, %v3152
        %v3281 = vrot.slane %v3280, 4
        %v3282 = vadd.f32 %v3280, %v3281
        %v3283 = vrot.slane %v3282, 2
        %v3284 = vadd.f32 %v3282, %v3283
        %v3285 = vrot.slane %v3284, 1
        %v3286 = vadd.f32 %v3284, %v3285
        %v3287 = vadd.f32 %v3153, %v3154
        %v3288 = vadd.f32 %v3287, %v3155
        %v3289 = vadd.f32 %v3288, %v3156
        %v3290 = vrot.slane %v3289, 4
        %v3291 = vadd.f32 %v3289, %v3290
        %v3292 = vrot.slane %v3291, 2
        %v3293 = vadd.f32 %v3291, %v3292
        %v3294 = vrot.slane %v3293, 1
        %v3295 = vadd.f32 %v3293, %v3294
        %v3296 = vadd.f32 %v3157, %v3158
        %v3297 = vadd.f32 %v3296, %v3159
        %v3298 = vadd.f32 %v3297, %v3160
        %v3299 = vrot.slane %v3298, 4
        %v3300 = vadd.f32 %v3298, %v3299
        %v3301 = vrot.slane %v3300, 2
        %v3302 = vadd.f32 %v3300, %v3301
        %v3303 = vrot.slane %v3302, 1
        %v3304 = vadd.f32 %v3302, %v3303
        %v3305 = vld [vmem:[%s9] sm:$0x1]
        %v3307 = vperm.slane %v3305, 0
        %v3309 = vadd.f32 %v3169, %v3307
        %v3310 = vadd.f32 %v3178, %v3307
        %v3311 = vadd.f32 %v3187, %v3307
        %v3312 = vadd.f32 %v3196, %v3307
        %v3313 = vadd.f32 %v3205, %v3307
        %v3314 = vadd.f32 %v3214, %v3307
        %v3315 = vadd.f32 %v3223, %v3307
        %v3316 = vadd.f32 %v3232, %v3307
        %v3317 = vadd.f32 %v3241, %v3307
        %v3318 = vadd.f32 %v3250, %v3307
        %v3319 = vadd.f32 %v3259, %v3307
        %v3320 = vadd.f32 %v3268, %v3307
        %v3321 = vadd.f32 %v3277, %v3307
        %v3322 = vadd.f32 %v3286, %v3307
        %v3323 = vadd.f32 %v3295, %v3307
        %v3324 = vadd.f32 %v3304, %v3307
        %vm3325 = vcmp.ge.f32.partialorder %v3309, 0.0
        %vm3326 = vcmp.ge.f32.partialorder %v3310, 0.0
        %vm3327 = vcmp.ge.f32.partialorder %v3311, 0.0
        %vm3328 = vcmp.ge.f32.partialorder %v3312, 0.0
        %vm3329 = vcmp.ge.f32.partialorder %v3313, 0.0
        %vm3330 = vcmp.ge.f32.partialorder %v3314, 0.0
        %vm3331 = vcmp.ge.f32.partialorder %v3315, 0.0
        %vm3332 = vcmp.ge.f32.partialorder %v3316, 0.0
        %vm3333 = vcmp.ge.f32.partialorder %v3317, 0.0
        %vm3334 = vcmp.ge.f32.partialorder %v3318, 0.0
        %vm3335 = vcmp.ge.f32.partialorder %v3319, 0.0
        %vm3336 = vcmp.ge.f32.partialorder %v3320, 0.0
        %vm3337 = vcmp.ge.f32.partialorder %v3321, 0.0
        %vm3338 = vcmp.ge.f32.partialorder %v3322, 0.0
        %vm3339 = vcmp.ge.f32.partialorder %v3323, 0.0
        %vm3340 = vcmp.ge.f32.partialorder %v3324, 0.0
        %v3341 = vmul.f32 %v3309, 0.01
        %v3342 = vmul.f32 %v3310, 0.01
        %v3343 = vmul.f32 %v3311, 0.01
        %v3344 = vmul.f32 %v3312, 0.01
        %v3345 = vmul.f32 %v3313, 0.01
        %v3346 = vmul.f32 %v3314, 0.01
        %v3347 = vmul.f32 %v3315, 0.01
        %v3348 = vmul.f32 %v3316, 0.01
        %v3349 = vmul.f32 %v3317, 0.01
        %v3350 = vmul.f32 %v3318, 0.01
        %v3351 = vmul.f32 %v3319, 0.01
        %v3352 = vmul.f32 %v3320, 0.01
        %v3353 = vmul.f32 %v3321, 0.01
        %v3354 = vmul.f32 %v3322, 0.01
        %v3355 = vmul.f32 %v3323, 0.01
        %v3356 = vmul.f32 %v3324, 0.01
        %v3357 = vsel %vm3325, %v3309, %v3341
        %v3358 = vsel %vm3326, %v3310, %v3342
        %v3359 = vsel %vm3327, %v3311, %v3343
        %v3360 = vsel %vm3328, %v3312, %v3344
        %v3361 = vsel %vm3329, %v3313, %v3345
        %v3362 = vsel %vm3330, %v3314, %v3346
        %v3363 = vsel %vm3331, %v3315, %v3347
        %v3364 = vsel %vm3332, %v3316, %v3348
        %v3365 = vsel %vm3333, %v3317, %v3349
        %v3366 = vsel %vm3334, %v3318, %v3350
        %v3367 = vsel %vm3335, %v3319, %v3351
        %v3368 = vsel %vm3336, %v3320, %v3352
        %v3369 = vsel %vm3337, %v3321, %v3353
        %v3370 = vsel %vm3338, %v3322, %v3354
        %v3371 = vsel %vm3339, %v3323, %v3355
        %v3372 = vsel %vm3340, %v3324, %v3356
        %v3375 = vrot.slane %v540, 1
        %v3376 = vrot.slane %v540, 2
        %v3377 = vrot.slane %v540, 3
        %v3378 = vrot.slane %v540, 4
        %v3379 = vrot.slane %v540, 5
        %v3380 = vrot.slane %v540, 6
        %v3381 = vrot.slane %v540, 7
        %v3382 = vrot.slane %v543, 1
        %v3383 = vrot.slane %v543, 2
        %v3384 = vrot.slane %v543, 3
        %v3385 = vrot.slane %v543, 4
        %v3386 = vrot.slane %v543, 5
        %v3387 = vrot.slane %v543, 6
        %v3388 = vrot.slane %v543, 7
        %v3405 = vadd.f32 %v3357, %v540
        %v3406 = vadd.f32 %v3358, %v3375
        %v3407 = vadd.f32 %v3359, %v3376
        %v3408 = vadd.f32 %v3360, %v3377
        %v3409 = vadd.f32 %v3361, %v3378
        %v3410 = vadd.f32 %v3362, %v3379
        %v3411 = vadd.f32 %v3363, %v3380
        %v3412 = vadd.f32 %v3364, %v3381
        %v3413 = vadd.f32 %v3365, %v543
        %v3414 = vadd.f32 %v3366, %v3382
        %v3415 = vadd.f32 %v3367, %v3383
        %v3416 = vadd.f32 %v3368, %v3384
        %v3417 = vadd.f32 %v3369, %v3385
        %v3418 = vadd.f32 %v3370, %v3386
        %v3419 = vadd.f32 %v3371, %v3387
        %v3420 = vadd.f32 %v3372, %v3388
        %v3437 = vrot.slane %v3406, 7
        %vm3438 = vcmask 1041409
        %v3439 = vsel %vm3438, %v3437, %v3405
        %v3440 = vrot.slane %v3407, 6
        %vm3441 = vcmask 1042434
        %v3442 = vsel %vm3441, %v3440, %v3439
        %v3443 = vrot.slane %v3408, 5
        %vm3444 = vcmask 1043459
        %v3445 = vsel %vm3444, %v3443, %v3442
        %v3446 = vrot.slane %v3409, 4
        %vm3447 = vcmask 1044484
        %v3448 = vsel %vm3447, %v3446, %v3445
        %v3449 = vrot.slane %v3410, 3
        %vm3450 = vcmask 1045509
        %v3451 = vsel %vm3450, %v3449, %v3448
        %v3452 = vrot.slane %v3411, 2
        %vm3453 = vcmask 1046534
        %v3454 = vsel %vm3453, %v3452, %v3451
        %v3455 = vrot.slane %v3412, 1
        %vm3456 = vcmask 1047559
        %v3457 = vsel %vm3456, %v3455, %v3454
        %v3458 = vrot.slane %v3414, 7
        %v3459 = vsel %vm3438, %v3458, %v3413
        %v3460 = vrot.slane %v3415, 6
        %v3461 = vsel %vm3441, %v3460, %v3459
        %v3462 = vrot.slane %v3416, 5
        %v3463 = vsel %vm3444, %v3462, %v3461
        %v3464 = vrot.slane %v3417, 4
        %v3465 = vsel %vm3447, %v3464, %v3463
        %v3466 = vrot.slane %v3418, 3
        %v3467 = vsel %vm3450, %v3466, %v3465
        %v3468 = vrot.slane %v3419, 2
        %v3469 = vsel %vm3453, %v3468, %v3467
        %v3470 = vrot.slane %v3420, 1
        %v3471 = vsel %vm3456, %v3470, %v3469
        %3474 = vst [vmem:[%s412] sm:$0xff] %v3457
        %3475 = vst [vmem:[%s412 + $0x8] sm:$0xff] %v3471
        %s3476 = sand.u32 %s256, 1
        %s3477 = scalar_lea.sflag [#allocation4], %s3476
        %s3478 = sand.u32 %s256, 1
        %s3479 = smul.addr %s3478, 16
        %s3480 = scalar_lea.vmem [#allocation7], %s3479
        // Predicated region
        $region69: #{tpu_custom_call.1} parent=59 // pred_check
          %p3481 = pneg %p266
        $region70: #{tpu_custom_call.1} parent=59 // pred_check_branch
          %3483 = sbr.rel (%p3481) target = $region72
        $region71: #{tpu_custom_call.1} parent=59 // pred_region
          %s3484 = smul.u32 2, %s28
          %3486 = vsyncadd %s3477, 0
          %s3487 = smul.addr %s3484, 8
          %s3488 = scalar_lea.hbm %s10, %s3487
          %s3489 = sshll.u32 %s3480, 4
          %s3490 = int_to_ptr.vmem [resolvable:$true] %s3489
          %s3491 = sshll.u32 %s3488, 4
          %s3492 = int_to_ptr.hbm [resolvable:$true] %s3491
          %3497 = dma.vmem_to_hbm [thread:$0]  %s3490, 256, %s3492, %s3477, 128, 128, 8
        $region72: #{tpu_custom_call.1} parent=59 // pred_fallthru
          _
      $region60: #{tpu_custom_call.1} parent=5 // pred_fallthru
        _
      %p3498 = scmp.le.s32.totalorder 2, %s23
      // Predicated region
      $region73: #{tpu_custom_call.1} parent=5 // pred_check
        %p3499 = pneg %p3498
      $region74: #{tpu_custom_call.1} parent=5 // pred_check_branch
        %3501 = sbr.rel (%p3499) target = $region76
      $region75: #{tpu_custom_call.1} parent=5 // pred_region
        %s3502 = ssub.s32 %s23, 2
        // Predicated region
        $region77: #{tpu_custom_call.1} parent=75 // pred_check
          %p3503 = pneg %p272
        $region78: #{tpu_custom_call.1} parent=75 // pred_check_branch
          %3505 = sbr.rel (%p3503) target = $region80
        $region79: #{tpu_custom_call.1} parent=75 // pred_region
          %s3506 = sand.u32 %s257, 1
          %s3507 = scalar_lea.sflag [#allocation4], %s3506
          %s3508 = sand.u32 %s257, 1
          %s3509 = smul.addr %s3508, 16
          %s3510 = scalar_lea.vmem [#allocation7], %s3509
          %3512 = dma.done %s3507, 256
        $region80: #{tpu_custom_call.1} parent=75 // pred_fallthru
          _
      $region76: #{tpu_custom_call.1} parent=5 // pred_fallthru
        _
    $region6: #{tpu_custom_call.1} parent=1 // loop_footer
      %s27 = sadd.s32 1, %s23
    $region7: #{tpu_custom_call.1} parent=1 // loop_footer_branch
      %22 = sbr.rel target = $region3
    $region8: #{tpu_custom_call.1} parent=1 // loop_exit
      _
    %3513 = vsyncpa [#allocation3], 1
    %s3514 = scalar_lea.sflag [#allocation3], 1
    %3515 = vsyncpa %s3514, 1
    %3516 = vsyncpa [#allocation6], 1
    %3517 = vsyncpa [#allocation4], 1
    %s3518 = scalar_lea.sflag [#allocation4], 1
    %3519 = vsyncpa %s3518, 1

</llo_original>
